<compile_context>
chip_gen: v7x
topology: tpu7x:2x2x1
jax: 0.10.0
libtpu: 0.0.40
codegen_flags: <defaults>
</compile_context>

<pallas_src>
import numpy as np
import jax
import jax.numpy as jnp
from jax.experimental import pallas as pl
from jax.experimental.pallas import tpu as pltpu


def _upscale_kernel(x_ref, w_ref, s_ref, o_ref):
    """One (image, row-block) tile of the 2x2 / stride-2 transposed conv.

    x_ref : VMEM (1, Cin, TH, Lx)      folded input rows, Lx = k*W on lanes
    w_ref : SMEM (Cin*Cout*4,)         row-major flatten of (Cin, Cout, 2, 2)
    s_ref : VMEM (4*Lx, 4*Lx)          0/1 interleave table (host precomputed)
    o_ref : VMEM (1, Cout, TH, 4*Lx)   folded output rows; lane-dense last dim
    """
    _, cin, _, _ = x_ref.shape
    cout = o_ref.shape[1]

    spread = s_ref[...]                                  # VMEM-resident table
    for co in range(cout):
        accs = [None, None, None, None]
        for ci in range(cin):
            xc = x_ref[0, ci].astype(jnp.float32)        # load at point of use
            for t in range(4):                           # t = kh*2 + kw
                wv = w_ref[(ci * cout + co) * 4 + t]     # scalar from SMEM
                mac = xc * wv                            # VPU broadcast MAC
                accs[t] = mac if ci == 0 else accs[t] + mac
        # 128-aligned lane concat -> ONE MXU dot places and sums all four taps
        # (exact: 0/1 spread), no full-width VPU adds, full-width store.
        acc_cat = jnp.concatenate(accs, axis=-1)         # (TH, 4*Lx)
        o_ref[0, co] = jnp.dot(
            acc_cat, spread, preferred_element_type=jnp.float32
        ).astype(o_ref.dtype)


def _build_spread(k, W):
    """0/1 table S with S[t*Lx + r*W + w, r*4W + kh*2W + 2w + kw] = 1.

    t = kh*2 + kw indexes the concatenated tap accumulators, Lx = k*W.
    dot(acc_cat, S) scatters every tap onto its interleaved output lane.
    """
    Lx = k * W
    S = np.zeros((4 * Lx, 4 * Lx), np.float32)
    r = np.arange(k)[:, None]
    w = np.arange(W)[None, :]
    for t in range(4):
        kh, kw = divmod(t, 2)
        rows = (t * Lx + r * W + w).ravel()
        cols = (r * 4 * W + kh * 2 * W + 2 * w + kw).ravel()
        S[rows, cols] = 1.0
    return S


def _pick_fold(H, W):
    """Fold k rows into lanes so the input lane width k*W approaches 128."""
    if W >= 128:
        return 1
    k = 1
    for cand in range(1, max(1, 128 // W) + 1):
        if H % cand == 0:
            k = cand
    return k


def _vmem_budget_bytes():
    """Generation-aware scoped-VMEM limit (v5e/v6e ~96 MiB, v7x ~48 MiB)."""
    try:
        cap = int(pltpu.get_tpu_info().vmem_capacity_bytes)
    except Exception:
        cap = 64 << 20
    return max(32 << 20, min(3 * cap // 4, 96 << 20))


def _pick_row_tile(Hf, out_row_bytes, n_images, cap_bytes):
    """Largest legal row tile under the VMEM cap, preferring an even (>=4)
    total grid-step count so both v7x TensorCores get balanced work."""
    cands = [t for t in range(1, Hf + 1)
             if Hf % t == 0 and (t % 8 == 0 or t == Hf)]
    fitting = [t for t in cands if t * out_row_bytes <= cap_bytes] or [min(cands)]

    def score(t):
        steps = n_images * (Hf // t)
        return (steps >= 4, steps % 2 == 0, t)

    return max(fitting, key=score)


def convolution_upscale(x_nchw, weight_iohw):
    """ConvTranspose2d(in_dim, out_dim, kernel_size=2, stride=2, padding=0, bias=False).

    x_nchw:      (N, Cin, H, W)      float32
    weight_iohw: (Cin, Cout, 2, 2)   float32  (PyTorch ConvTranspose2d layout)
    returns:     (N, Cout, 2H, 2W)   float32
    """
    N, Cin, H, W = x_nchw.shape
    wc_in, Cout, KH, KW = weight_iohw.shape
    assert wc_in == Cin and KH == 2 and KW == 2

    k = _pick_fold(H, W)
    Hf, Lx = H // k, k * W
    spread = _build_spread(k, W)                    # built once on the host

    budget = _vmem_budget_bytes()
    out_row_bytes = Cout * 4 * Lx * 4
    out_cap = max(256 << 10, min(12 << 20, (budget - 2 * spread.nbytes) // 10))
    th = _pick_row_tile(Hf, out_row_bytes, N, out_cap)
    grid = (N, Hf // th)

    x_folded = x_nchw.reshape(N, Cin, Hf, Lx)       # free row-major reshape

    out_elems = N * Cout * 4 * H * W
    flops = out_elems * (2 * Cin + 8 * Lx)          # VPU MACs + spread dot
    bytes_accessed = (4 * (x_nchw.size + weight_iohw.size)
                      + spread.nbytes + 4 * out_elems)

    out4 = pl.pallas_call(
        _upscale_kernel,
        out_shape=jax.ShapeDtypeStruct((N, Cout, Hf, 4 * Lx), x_nchw.dtype),
        grid_spec=pltpu.PrefetchScalarGridSpec(
            num_scalar_prefetch=0,
            grid=grid,
            in_specs=[
                pl.BlockSpec((1, Cin, th, Lx), lambda n, h: (n, 0, h, 0)),
                pl.BlockSpec(memory_space=pltpu.MemorySpace.SMEM),     # weight
                pl.BlockSpec((4 * Lx, 4 * Lx), lambda n, h: (0, 0)),   # fetched once
            ],
            out_specs=pl.BlockSpec((1, Cout, th, 4 * Lx),
                                   lambda n, h: (n, 0, h, 0)),
        ),
        compiler_params=pltpu.CompilerParams(
            dimension_semantics=("parallel", "parallel"),
            vmem_limit_bytes=int(budget)),
        cost_estimate=pl.CostEstimate(
            flops=int(flops), transcendentals=0,
            bytes_accessed=int(bytes_accessed)),
    )(x_folded, weight_iohw.reshape(-1), jnp.asarray(spread))

    # (N, Cout, Hf, 4*Lx) -> (N, Cout, 2H, 2W): metadata-only reshape (no copy).
    return out4.reshape(N, Cout, 2 * H, 2 * W)


if __name__ == "__main__":
    key = jax.random.PRNGKey(0)
    k_x, k_w = jax.random.split(key)

    N, Cin, H, W = 2, 4, 16, 16
    Cout = 8

    x = jax.random.normal(k_x, (N, Cin, H, W), dtype=jnp.float32)

    # variance_scaling init, FanAvr mode, Uniform distribution, gain=scale=1:
    # fan_avg = (fan_in + fan_out) / 2 with fan_in = Cin*2*2, fan_out = Cout*2*2.
    fan_avg = (Cin * 4 + Cout * 4) / 2.0
    bound = (3.0 / fan_avg) ** 0.5
    weight = jax.random.uniform(k_w, (Cin, Cout, 2, 2), dtype=jnp.float32,
                                minval=-bound, maxval=bound)

    out = jax.jit(convolution_upscale)(x, weight)
    out = jax.block_until_ready(out)

    # Reference: direct definition of ConvTranspose2d(k=2, s=2, p=0, no bias):
    #   ref[n, o, 2h+kh, 2w+kw] = sum_c x[n, c, h, w] * weight[c, o, kh, kw]
    ref = jnp.einsum("nchw,cokl->nohkwl", x, weight).reshape(N, Cout, 2 * H, 2 * W)

    assert out.shape == (N, Cout, 2 * H, 2 * W), out.shape
    assert jnp.allclose(out, ref, atol=1e-5, rtol=1e-5), "mismatch vs reference"

    print("KERNEL_OK")
</pallas_src>

<mosaic_0001>
module attributes {stable_mosaic.version = 11 : i64} {
  func.func @_upscale_kernel(%arg0: i32, %arg1: i32, %arg2: memref<1x4x2x128xf32, #tpu.memory_space<vmem>>, %arg3: memref<128xf32, #tpu.memory_space<smem>>, %arg4: memref<512x512xf32, #tpu.memory_space<vmem>>, %arg5: memref<1x8x2x512xf32, #tpu.memory_space<vmem>>) attributes {dimension_semantics = [#tpu.dimension_semantics<parallel>, #tpu.dimension_semantics<parallel>], iteration_bounds = array<i64: 2, 1>, scalar_prefetch = 0 : i64, scratch_operands = 0 : i64, tpu.core_type = #tpu.core_type<tc>, window_params = [{transform_indices = @transform_0, window_bounds = array<i64: 1, 4, 2, 128>}, {transform_indices = @transform_1, window_bounds = array<i64: 128>}, {pipeline_mode = #tpu.pipeline_mode<synchronous>, transform_indices = @transform_2, window_bounds = array<i64: 512, 512>}, {transform_indices = @transform_3, window_bounds = array<i64: 1, 8, 2, 512>}]} {
    %c0 = arith.constant 0 : index
    %c0_0 = arith.constant 0 : index
    %0 = vector.load %arg4[%c0, %c0_0] : memref<512x512xf32, #tpu.memory_space<vmem>>, vector<512x512xf32>
    %c0_1 = arith.constant 0 : index
    %c0_2 = arith.constant 0 : index
    %c0_3 = arith.constant 0 : index
    %c0_4 = arith.constant 0 : index
    %1 = vector.load %arg2[%c0_1, %c0_2, %c0_3, %c0_4] : memref<1x4x2x128xf32, #tpu.memory_space<vmem>>, vector<1x1x2x128xf32>
    %2 = vector.shape_cast %1 : vector<1x1x2x128xf32> to vector<2x128xf32>
    %c0_5 = arith.constant 0 : index
    %3 = memref.load %arg3[%c0_5] : memref<128xf32, #tpu.memory_space<smem>>
    %4 = vector.broadcast %3 : f32 to vector<2x128xf32>
    %5 = arith.mulf %2, %4 : vector<2x128xf32>
    %c1 = arith.constant 1 : index
    %6 = memref.load %arg3[%c1] : memref<128xf32, #tpu.memory_space<smem>>
    %7 = vector.broadcast %6 : f32 to vector<2x128xf32>
    %8 = arith.mulf %2, %7 : vector<2x128xf32>
    %c2 = arith.constant 2 : index
    %9 = memref.load %arg3[%c2] : memref<128xf32, #tpu.memory_space<smem>>
    %10 = vector.broadcast %9 : f32 to vector<2x128xf32>
    %11 = arith.mulf %2, %10 : vector<2x128xf32>
    %c3 = arith.constant 3 : index
    %12 = memref.load %arg3[%c3] : memref<128xf32, #tpu.memory_space<smem>>
    %13 = vector.broadcast %12 : f32 to vector<2x128xf32>
    %14 = arith.mulf %2, %13 : vector<2x128xf32>
    %c0_6 = arith.constant 0 : index
    %c1_7 = arith.constant 1 : index
    %c0_8 = arith.constant 0 : index
    %c0_9 = arith.constant 0 : index
    %15 = vector.load %arg2[%c0_6, %c1_7, %c0_8, %c0_9] : memref<1x4x2x128xf32, #tpu.memory_space<vmem>>, vector<1x1x2x128xf32>
    %16 = vector.shape_cast %15 : vector<1x1x2x128xf32> to vector<2x128xf32>
    %c32 = arith.constant 32 : index
    %17 = memref.load %arg3[%c32] : memref<128xf32, #tpu.memory_space<smem>>
    %18 = vector.broadcast %17 : f32 to vector<2x128xf32>
    %19 = arith.mulf %16, %18 : vector<2x128xf32>
    %20 = arith.addf %5, %19 : vector<2x128xf32>
    %c33 = arith.constant 33 : index
    %21 = memref.load %arg3[%c33] : memref<128xf32, #tpu.memory_space<smem>>
    %22 = vector.broadcast %21 : f32 to vector<2x128xf32>
    %23 = arith.mulf %16, %22 : vector<2x128xf32>
    %24 = arith.addf %8, %23 : vector<2x128xf32>
    %c34 = arith.constant 34 : index
    %25 = memref.load %arg3[%c34] : memref<128xf32, #tpu.memory_space<smem>>
    %26 = vector.broadcast %25 : f32 to vector<2x128xf32>
    %27 = arith.mulf %16, %26 : vector<2x128xf32>
    %28 = arith.addf %11, %27 : vector<2x128xf32>
    %c35 = arith.constant 35 : index
    %29 = memref.load %arg3[%c35] : memref<128xf32, #tpu.memory_space<smem>>
    %30 = vector.broadcast %29 : f32 to vector<2x128xf32>
    %31 = arith.mulf %16, %30 : vector<2x128xf32>
    %32 = arith.addf %14, %31 : vector<2x128xf32>
    %c0_10 = arith.constant 0 : index
    %c2_11 = arith.constant 2 : index
    %c0_12 = arith.constant 0 : index
    %c0_13 = arith.constant 0 : index
    %33 = vector.load %arg2[%c0_10, %c2_11, %c0_12, %c0_13] : memref<1x4x2x128xf32, #tpu.memory_space<vmem>>, vector<1x1x2x128xf32>
    %34 = vector.shape_cast %33 : vector<1x1x2x128xf32> to vector<2x128xf32>
    %c64 = arith.constant 64 : index
    %35 = memref.load %arg3[%c64] : memref<128xf32, #tpu.memory_space<smem>>
    %36 = vector.broadcast %35 : f32 to vector<2x128xf32>
    %37 = arith.mulf %34, %36 : vector<2x128xf32>
    %38 = arith.addf %20, %37 : vector<2x128xf32>
    %c65 = arith.constant 65 : index
    %39 = memref.load %arg3[%c65] : memref<128xf32, #tpu.memory_space<smem>>
    %40 = vector.broadcast %39 : f32 to vector<2x128xf32>
    %41 = arith.mulf %34, %40 : vector<2x128xf32>
    %42 = arith.addf %24, %41 : vector<2x128xf32>
    %c66 = arith.constant 66 : index
    %43 = memref.load %arg3[%c66] : memref<128xf32, #tpu.memory_space<smem>>
    %44 = vector.broadcast %43 : f32 to vector<2x128xf32>
    %45 = arith.mulf %34, %44 : vector<2x128xf32>
    %46 = arith.addf %28, %45 : vector<2x128xf32>
    %c67 = arith.constant 67 : index
    %47 = memref.load %arg3[%c67] : memref<128xf32, #tpu.memory_space<smem>>
    %48 = vector.broadcast %47 : f32 to vector<2x128xf32>
    %49 = arith.mulf %34, %48 : vector<2x128xf32>
    %50 = arith.addf %32, %49 : vector<2x128xf32>
    %c0_14 = arith.constant 0 : index
    %c3_15 = arith.constant 3 : index
    %c0_16 = arith.constant 0 : index
    %c0_17 = arith.constant 0 : index
    %51 = vector.load %arg2[%c0_14, %c3_15, %c0_16, %c0_17] : memref<1x4x2x128xf32, #tpu.memory_space<vmem>>, vector<1x1x2x128xf32>
    %52 = vector.shape_cast %51 : vector<1x1x2x128xf32> to vector<2x128xf32>
    %c96 = arith.constant 96 : index
    %53 = memref.load %arg3[%c96] : memref<128xf32, #tpu.memory_space<smem>>
    %54 = vector.broadcast %53 : f32 to vector<2x128xf32>
    %55 = arith.mulf %52, %54 : vector<2x128xf32>
    %56 = arith.addf %38, %55 : vector<2x128xf32>
    %c97 = arith.constant 97 : index
    %57 = memref.load %arg3[%c97] : memref<128xf32, #tpu.memory_space<smem>>
    %58 = vector.broadcast %57 : f32 to vector<2x128xf32>
    %59 = arith.mulf %52, %58 : vector<2x128xf32>
    %60 = arith.addf %42, %59 : vector<2x128xf32>
    %c98 = arith.constant 98 : index
    %61 = memref.load %arg3[%c98] : memref<128xf32, #tpu.memory_space<smem>>
    %62 = vector.broadcast %61 : f32 to vector<2x128xf32>
    %63 = arith.mulf %52, %62 : vector<2x128xf32>
    %64 = arith.addf %46, %63 : vector<2x128xf32>
    %c99 = arith.constant 99 : index
    %65 = memref.load %arg3[%c99] : memref<128xf32, #tpu.memory_space<smem>>
    %66 = vector.broadcast %65 : f32 to vector<2x128xf32>
    %67 = arith.mulf %52, %66 : vector<2x128xf32>
    %68 = arith.addf %50, %67 : vector<2x128xf32>
    %69 = tpu.concatenate %56, %60, %64, %68 in 1 : vector<2x128xf32>, vector<2x128xf32>, vector<2x128xf32>, vector<2x128xf32> -> vector<2x512xf32>
    %cst = arith.constant dense<0.000000e+00> : vector<2x512xf32>
    %70 = tpu.matmul %69, %0, %cst {dimension_numbers = #tpu.dot_dimension_numbers<[1], [0], [0], [1], [0, 0, 1, 1], [], []>} : vector<2x512xf32>, vector<512x512xf32>, vector<2x512xf32> -> vector<2x512xf32>
    %c0_18 = arith.constant 0 : index
    %c0_19 = arith.constant 0 : index
    %c0_20 = arith.constant 0 : index
    %c0_21 = arith.constant 0 : index
    %71 = vector.load %arg5[%c0_18, %c0_19, %c0_20, %c0_21] : memref<1x8x2x512xf32, #tpu.memory_space<vmem>>, vector<1x1x2x512xf32>
    %72 = vector.shape_cast %71 : vector<1x1x2x512xf32> to vector<2x512xf32>
    %73 = vector.shape_cast %70 : vector<2x512xf32> to vector<1x1x2x512xf32>
    tpu.vector_store %arg5[%c0_18, %c0_19, %c0_20, %c0_21], %73 {strides = array<i32>} : memref<1x8x2x512xf32, #tpu.memory_space<vmem>>, vector<1x1x2x512xf32>,
    %c0_22 = arith.constant 0 : index
    %c0_23 = arith.constant 0 : index
    %c0_24 = arith.constant 0 : index
    %c0_25 = arith.constant 0 : index
    %74 = vector.load %arg2[%c0_22, %c0_23, %c0_24, %c0_25] : memref<1x4x2x128xf32, #tpu.memory_space<vmem>>, vector<1x1x2x128xf32>
    %75 = vector.shape_cast %74 : vector<1x1x2x128xf32> to vector<2x128xf32>
    %c4 = arith.constant 4 : index
    %76 = memref.load %arg3[%c4] : memref<128xf32, #tpu.memory_space<smem>>
    %77 = vector.broadcast %76 : f32 to vector<2x128xf32>
    %78 = arith.mulf %75, %77 : vector<2x128xf32>
    %c5 = arith.constant 5 : index
    %79 = memref.load %arg3[%c5] : memref<128xf32, #tpu.memory_space<smem>>
    %80 = vector.broadcast %79 : f32 to vector<2x128xf32>
    %81 = arith.mulf %75, %80 : vector<2x128xf32>
    %c6 = arith.constant 6 : index
    %82 = memref.load %arg3[%c6] : memref<128xf32, #tpu.memory_space<smem>>
    %83 = vector.broadcast %82 : f32 to vector<2x128xf32>
    %84 = arith.mulf %75, %83 : vector<2x128xf32>
    %c7 = arith.constant 7 : index
    %85 = memref.load %arg3[%c7] : memref<128xf32, #tpu.memory_space<smem>>
    %86 = vector.broadcast %85 : f32 to vector<2x128xf32>
    %87 = arith.mulf %75, %86 : vector<2x128xf32>
    %c0_26 = arith.constant 0 : index
    %c1_27 = arith.constant 1 : index
    %c0_28 = arith.constant 0 : index
    %c0_29 = arith.constant 0 : index
    %88 = vector.load %arg2[%c0_26, %c1_27, %c0_28, %c0_29] : memref<1x4x2x128xf32, #tpu.memory_space<vmem>>, vector<1x1x2x128xf32>
    %89 = vector.shape_cast %88 : vector<1x1x2x128xf32> to vector<2x128xf32>
    %c36 = arith.constant 36 : index
    %90 = memref.load %arg3[%c36] : memref<128xf32, #tpu.memory_space<smem>>
    %91 = vector.broadcast %90 : f32 to vector<2x128xf32>
    %92 = arith.mulf %89, %91 : vector<2x128xf32>
    %93 = arith.addf %78, %92 : vector<2x128xf32>
    %c37 = arith.constant 37 : index
    %94 = memref.load %arg3[%c37] : memref<128xf32, #tpu.memory_space<smem>>
    %95 = vector.broadcast %94 : f32 to vector<2x128xf32>
    %96 = arith.mulf %89, %95 : vector<2x128xf32>
    %97 = arith.addf %81, %96 : vector<2x128xf32>
    %c38 = arith.constant 38 : index
    %98 = memref.load %arg3[%c38] : memref<128xf32, #tpu.memory_space<smem>>
    %99 = vector.broadcast %98 : f32 to vector<2x128xf32>
    %100 = arith.mulf %89, %99 : vector<2x128xf32>
    %101 = arith.addf %84, %100 : vector<2x128xf32>
    %c39 = arith.constant 39 : index
    %102 = memref.load %arg3[%c39] : memref<128xf32, #tpu.memory_space<smem>>
    %103 = vector.broadcast %102 : f32 to vector<2x128xf32>
    %104 = arith.mulf %89, %103 : vector<2x128xf32>
    %105 = arith.addf %87, %104 : vector<2x128xf32>
    %c0_30 = arith.constant 0 : index
    %c2_31 = arith.constant 2 : index
    %c0_32 = arith.constant 0 : index
    %c0_33 = arith.constant 0 : index
    %106 = vector.load %arg2[%c0_30, %c2_31, %c0_32, %c0_33] : memref<1x4x2x128xf32, #tpu.memory_space<vmem>>, vector<1x1x2x128xf32>
    %107 = vector.shape_cast %106 : vector<1x1x2x128xf32> to vector<2x128xf32>
    %c68 = arith.constant 68 : index
    %108 = memref.load %arg3[%c68] : memref<128xf32, #tpu.memory_space<smem>>
    %109 = vector.broadcast %108 : f32 to vector<2x128xf32>
    %110 = arith.mulf %107, %109 : vector<2x128xf32>
    %111 = arith.addf %93, %110 : vector<2x128xf32>
    %c69 = arith.constant 69 : index
    %112 = memref.load %arg3[%c69] : memref<128xf32, #tpu.memory_space<smem>>
    %113 = vector.broadcast %112 : f32 to vector<2x128xf32>
    %114 = arith.mulf %107, %113 : vector<2x128xf32>
    %115 = arith.addf %97, %114 : vector<2x128xf32>
    %c70 = arith.constant 70 : index
    %116 = memref.load %arg3[%c70] : memref<128xf32, #tpu.memory_space<smem>>
    %117 = vector.broadcast %116 : f32 to vector<2x128xf32>
    %118 = arith.mulf %107, %117 : vector<2x128xf32>
    %119 = arith.addf %101, %118 : vector<2x128xf32>
    %c71 = arith.constant 71 : index
    %120 = memref.load %arg3[%c71] : memref<128xf32, #tpu.memory_space<smem>>
    %121 = vector.broadcast %120 : f32 to vector<2x128xf32>
    %122 = arith.mulf %107, %121 : vector<2x128xf32>
    %123 = arith.addf %105, %122 : vector<2x128xf32>
    %c0_34 = arith.constant 0 : index
    %c3_35 = arith.constant 3 : index
    %c0_36 = arith.constant 0 : index
    %c0_37 = arith.constant 0 : index
    %124 = vector.load %arg2[%c0_34, %c3_35, %c0_36, %c0_37] : memref<1x4x2x128xf32, #tpu.memory_space<vmem>>, vector<1x1x2x128xf32>
    %125 = vector.shape_cast %124 : vector<1x1x2x128xf32> to vector<2x128xf32>
    %c100 = arith.constant 100 : index
    %126 = memref.load %arg3[%c100] : memref<128xf32, #tpu.memory_space<smem>>
    %127 = vector.broadcast %126 : f32 to vector<2x128xf32>
    %128 = arith.mulf %125, %127 : vector<2x128xf32>
    %129 = arith.addf %111, %128 : vector<2x128xf32>
    %c101 = arith.constant 101 : index
    %130 = memref.load %arg3[%c101] : memref<128xf32, #tpu.memory_space<smem>>
    %131 = vector.broadcast %130 : f32 to vector<2x128xf32>
    %132 = arith.mulf %125, %131 : vector<2x128xf32>
    %133 = arith.addf %115, %132 : vector<2x128xf32>
    %c102 = arith.constant 102 : index
    %134 = memref.load %arg3[%c102] : memref<128xf32, #tpu.memory_space<smem>>
    %135 = vector.broadcast %134 : f32 to vector<2x128xf32>
    %136 = arith.mulf %125, %135 : vector<2x128xf32>
    %137 = arith.addf %119, %136 : vector<2x128xf32>
    %c103 = arith.constant 103 : index
    %138 = memref.load %arg3[%c103] : memref<128xf32, #tpu.memory_space<smem>>
    %139 = vector.broadcast %138 : f32 to vector<2x128xf32>
    %140 = arith.mulf %125, %139 : vector<2x128xf32>
    %141 = arith.addf %123, %140 : vector<2x128xf32>
    %142 = tpu.concatenate %129, %133, %137, %141 in 1 : vector<2x128xf32>, vector<2x128xf32>, vector<2x128xf32>, vector<2x128xf32> -> vector<2x512xf32>
    %cst_38 = arith.constant dense<0.000000e+00> : vector<2x512xf32>
    %143 = tpu.matmul %142, %0, %cst_38 {dimension_numbers = #tpu.dot_dimension_numbers<[1], [0], [0], [1], [0, 0, 1, 1], [], []>} : vector<2x512xf32>, vector<512x512xf32>, vector<2x512xf32> -> vector<2x512xf32>
    %c0_39 = arith.constant 0 : index
    %c1_40 = arith.constant 1 : index
    %c0_41 = arith.constant 0 : index
    %c0_42 = arith.constant 0 : index
    %144 = vector.load %arg5[%c0_39, %c1_40, %c0_41, %c0_42] : memref<1x8x2x512xf32, #tpu.memory_space<vmem>>, vector<1x1x2x512xf32>
    %145 = vector.shape_cast %144 : vector<1x1x2x512xf32> to vector<2x512xf32>
    %146 = vector.shape_cast %143 : vector<2x512xf32> to vector<1x1x2x512xf32>
    tpu.vector_store %arg5[%c0_39, %c1_40, %c0_41, %c0_42], %146 {strides = array<i32>} : memref<1x8x2x512xf32, #tpu.memory_space<vmem>>, vector<1x1x2x512xf32>,
    %c0_43 = arith.constant 0 : index
    %c0_44 = arith.constant 0 : index
    %c0_45 = arith.constant 0 : index
    %c0_46 = arith.constant 0 : index
    %147 = vector.load %arg2[%c0_43, %c0_44, %c0_45, %c0_46] : memref<1x4x2x128xf32, #tpu.memory_space<vmem>>, vector<1x1x2x128xf32>
    %148 = vector.shape_cast %147 : vector<1x1x2x128xf32> to vector<2x128xf32>
    %c8 = arith.constant 8 : index
    %149 = memref.load %arg3[%c8] : memref<128xf32, #tpu.memory_space<smem>>
    %150 = vector.broadcast %149 : f32 to vector<2x128xf32>
    %151 = arith.mulf %148, %150 : vector<2x128xf32>
    %c9 = arith.constant 9 : index
    %152 = memref.load %arg3[%c9] : memref<128xf32, #tpu.memory_space<smem>>
    %153 = vector.broadcast %152 : f32 to vector<2x128xf32>
    %154 = arith.mulf %148, %153 : vector<2x128xf32>
    %c10 = arith.constant 10 : index
    %155 = memref.load %arg3[%c10] : memref<128xf32, #tpu.memory_space<smem>>
    %156 = vector.broadcast %155 : f32 to vector<2x128xf32>
    %157 = arith.mulf %148, %156 : vector<2x128xf32>
    %c11 = arith.constant 11 : index
    %158 = memref.load %arg3[%c11] : memref<128xf32, #tpu.memory_space<smem>>
    %159 = vector.broadcast %158 : f32 to vector<2x128xf32>
    %160 = arith.mulf %148, %159 : vector<2x128xf32>
    %c0_47 = arith.constant 0 : index
    %c1_48 = arith.constant 1 : index
    %c0_49 = arith.constant 0 : index
    %c0_50 = arith.constant 0 : index
    %161 = vector.load %arg2[%c0_47, %c1_48, %c0_49, %c0_50] : memref<1x4x2x128xf32, #tpu.memory_space<vmem>>, vector<1x1x2x128xf32>
    %162 = vector.shape_cast %161 : vector<1x1x2x128xf32> to vector<2x128xf32>
    %c40 = arith.constant 40 : index
    %163 = memref.load %arg3[%c40] : memref<128xf32, #tpu.memory_space<smem>>
    %164 = vector.broadcast %163 : f32 to vector<2x128xf32>
    %165 = arith.mulf %162, %164 : vector<2x128xf32>
    %166 = arith.addf %151, %165 : vector<2x128xf32>
    %c41 = arith.constant 41 : index
    %167 = memref.load %arg3[%c41] : memref<128xf32, #tpu.memory_space<smem>>
    %168 = vector.broadcast %167 : f32 to vector<2x128xf32>
    %169 = arith.mulf %162, %168 : vector<2x128xf32>
    %170 = arith.addf %154, %169 : vector<2x128xf32>
    %c42 = arith.constant 42 : index
    %171 = memref.load %arg3[%c42] : memref<128xf32, #tpu.memory_space<smem>>
    %172 = vector.broadcast %171 : f32 to vector<2x128xf32>
    %173 = arith.mulf %162, %172 : vector<2x128xf32>
    %174 = arith.addf %157, %173 : vector<2x128xf32>
    %c43 = arith.constant 43 : index
    %175 = memref.load %arg3[%c43] : memref<128xf32, #tpu.memory_space<smem>>
    %176 = vector.broadcast %175 : f32 to vector<2x128xf32>
    %177 = arith.mulf %162, %176 : vector<2x128xf32>
    %178 = arith.addf %160, %177 : vector<2x128xf32>
    %c0_51 = arith.constant 0 : index
    %c2_52 = arith.constant 2 : index
    %c0_53 = arith.constant 0 : index
    %c0_54 = arith.constant 0 : index
    %179 = vector.load %arg2[%c0_51, %c2_52, %c0_53, %c0_54] : memref<1x4x2x128xf32, #tpu.memory_space<vmem>>, vector<1x1x2x128xf32>
    %180 = vector.shape_cast %179 : vector<1x1x2x128xf32> to vector<2x128xf32>
    %c72 = arith.constant 72 : index
    %181 = memref.load %arg3[%c72] : memref<128xf32, #tpu.memory_space<smem>>
    %182 = vector.broadcast %181 : f32 to vector<2x128xf32>
    %183 = arith.mulf %180, %182 : vector<2x128xf32>
    %184 = arith.addf %166, %183 : vector<2x128xf32>
    %c73 = arith.constant 73 : index
    %185 = memref.load %arg3[%c73] : memref<128xf32, #tpu.memory_space<smem>>
    %186 = vector.broadcast %185 : f32 to vector<2x128xf32>
    %187 = arith.mulf %180, %186 : vector<2x128xf32>
    %188 = arith.addf %170, %187 : vector<2x128xf32>
    %c74 = arith.constant 74 : index
    %189 = memref.load %arg3[%c74] : memref<128xf32, #tpu.memory_space<smem>>
    %190 = vector.broadcast %189 : f32 to vector<2x128xf32>
    %191 = arith.mulf %180, %190 : vector<2x128xf32>
    %192 = arith.addf %174, %191 : vector<2x128xf32>
    %c75 = arith.constant 75 : index
    %193 = memref.load %arg3[%c75] : memref<128xf32, #tpu.memory_space<smem>>
    %194 = vector.broadcast %193 : f32 to vector<2x128xf32>
    %195 = arith.mulf %180, %194 : vector<2x128xf32>
    %196 = arith.addf %178, %195 : vector<2x128xf32>
    %c0_55 = arith.constant 0 : index
    %c3_56 = arith.constant 3 : index
    %c0_57 = arith.constant 0 : index
    %c0_58 = arith.constant 0 : index
    %197 = vector.load %arg2[%c0_55, %c3_56, %c0_57, %c0_58] : memref<1x4x2x128xf32, #tpu.memory_space<vmem>>, vector<1x1x2x128xf32>
    %198 = vector.shape_cast %197 : vector<1x1x2x128xf32> to vector<2x128xf32>
    %c104 = arith.constant 104 : index
    %199 = memref.load %arg3[%c104] : memref<128xf32, #tpu.memory_space<smem>>
    %200 = vector.broadcast %199 : f32 to vector<2x128xf32>
    %201 = arith.mulf %198, %200 : vector<2x128xf32>
    %202 = arith.addf %184, %201 : vector<2x128xf32>
    %c105 = arith.constant 105 : index
    %203 = memref.load %arg3[%c105] : memref<128xf32, #tpu.memory_space<smem>>
    %204 = vector.broadcast %203 : f32 to vector<2x128xf32>
    %205 = arith.mulf %198, %204 : vector<2x128xf32>
    %206 = arith.addf %188, %205 : vector<2x128xf32>
    %c106 = arith.constant 106 : index
    %207 = memref.load %arg3[%c106] : memref<128xf32, #tpu.memory_space<smem>>
    %208 = vector.broadcast %207 : f32 to vector<2x128xf32>
    %209 = arith.mulf %198, %208 : vector<2x128xf32>
    %210 = arith.addf %192, %209 : vector<2x128xf32>
    %c107 = arith.constant 107 : index
    %211 = memref.load %arg3[%c107] : memref<128xf32, #tpu.memory_space<smem>>
    %212 = vector.broadcast %211 : f32 to vector<2x128xf32>
    %213 = arith.mulf %198, %212 : vector<2x128xf32>
    %214 = arith.addf %196, %213 : vector<2x128xf32>
    %215 = tpu.concatenate %202, %206, %210, %214 in 1 : vector<2x128xf32>, vector<2x128xf32>, vector<2x128xf32>, vector<2x128xf32> -> vector<2x512xf32>
    %cst_59 = arith.constant dense<0.000000e+00> : vector<2x512xf32>
    %216 = tpu.matmul %215, %0, %cst_59 {dimension_numbers = #tpu.dot_dimension_numbers<[1], [0], [0], [1], [0, 0, 1, 1], [], []>} : vector<2x512xf32>, vector<512x512xf32>, vector<2x512xf32> -> vector<2x512xf32>
    %c0_60 = arith.constant 0 : index
    %c2_61 = arith.constant 2 : index
    %c0_62 = arith.constant 0 : index
    %c0_63 = arith.constant 0 : index
    %217 = vector.load %arg5[%c0_60, %c2_61, %c0_62, %c0_63] : memref<1x8x2x512xf32, #tpu.memory_space<vmem>>, vector<1x1x2x512xf32>
    %218 = vector.shape_cast %217 : vector<1x1x2x512xf32> to vector<2x512xf32>
    %219 = vector.shape_cast %216 : vector<2x512xf32> to vector<1x1x2x512xf32>
    tpu.vector_store %arg5[%c0_60, %c2_61, %c0_62, %c0_63], %219 {strides = array<i32>} : memref<1x8x2x512xf32, #tpu.memory_space<vmem>>, vector<1x1x2x512xf32>,
    %c0_64 = arith.constant 0 : index
    %c0_65 = arith.constant 0 : index
    %c0_66 = arith.constant 0 : index
    %c0_67 = arith.constant 0 : index
    %220 = vector.load %arg2[%c0_64, %c0_65, %c0_66, %c0_67] : memref<1x4x2x128xf32, #tpu.memory_space<vmem>>, vector<1x1x2x128xf32>
    %221 = vector.shape_cast %220 : vector<1x1x2x128xf32> to vector<2x128xf32>
    %c12 = arith.constant 12 : index
    %222 = memref.load %arg3[%c12] : memref<128xf32, #tpu.memory_space<smem>>
    %223 = vector.broadcast %222 : f32 to vector<2x128xf32>
    %224 = arith.mulf %221, %223 : vector<2x128xf32>
    %c13 = arith.constant 13 : index
    %225 = memref.load %arg3[%c13] : memref<128xf32, #tpu.memory_space<smem>>
    %226 = vector.broadcast %225 : f32 to vector<2x128xf32>
    %227 = arith.mulf %221, %226 : vector<2x128xf32>
    %c14 = arith.constant 14 : index
    %228 = memref.load %arg3[%c14] : memref<128xf32, #tpu.memory_space<smem>>
    %229 = vector.broadcast %228 : f32 to vector<2x128xf32>
    %230 = arith.mulf %221, %229 : vector<2x128xf32>
    %c15 = arith.constant 15 : index
    %231 = memref.load %arg3[%c15] : memref<128xf32, #tpu.memory_space<smem>>
    %232 = vector.broadcast %231 : f32 to vector<2x128xf32>
    %233 = arith.mulf %221, %232 : vector<2x128xf32>
    %c0_68 = arith.constant 0 : index
    %c1_69 = arith.constant 1 : index
    %c0_70 = arith.constant 0 : index
    %c0_71 = arith.constant 0 : index
    %234 = vector.load %arg2[%c0_68, %c1_69, %c0_70, %c0_71] : memref<1x4x2x128xf32, #tpu.memory_space<vmem>>, vector<1x1x2x128xf32>
    %235 = vector.shape_cast %234 : vector<1x1x2x128xf32> to vector<2x128xf32>
    %c44 = arith.constant 44 : index
    %236 = memref.load %arg3[%c44] : memref<128xf32, #tpu.memory_space<smem>>
    %237 = vector.broadcast %236 : f32 to vector<2x128xf32>
    %238 = arith.mulf %235, %237 : vector<2x128xf32>
    %239 = arith.addf %224, %238 : vector<2x128xf32>
    %c45 = arith.constant 45 : index
    %240 = memref.load %arg3[%c45] : memref<128xf32, #tpu.memory_space<smem>>
    %241 = vector.broadcast %240 : f32 to vector<2x128xf32>
    %242 = arith.mulf %235, %241 : vector<2x128xf32>
    %243 = arith.addf %227, %242 : vector<2x128xf32>
    %c46 = arith.constant 46 : index
    %244 = memref.load %arg3[%c46] : memref<128xf32, #tpu.memory_space<smem>>
    %245 = vector.broadcast %244 : f32 to vector<2x128xf32>
    %246 = arith.mulf %235, %245 : vector<2x128xf32>
    %247 = arith.addf %230, %246 : vector<2x128xf32>
    %c47 = arith.constant 47 : index
    %248 = memref.load %arg3[%c47] : memref<128xf32, #tpu.memory_space<smem>>
    %249 = vector.broadcast %248 : f32 to vector<2x128xf32>
    %250 = arith.mulf %235, %249 : vector<2x128xf32>
    %251 = arith.addf %233, %250 : vector<2x128xf32>
    %c0_72 = arith.constant 0 : index
    %c2_73 = arith.constant 2 : index
    %c0_74 = arith.constant 0 : index
    %c0_75 = arith.constant 0 : index
    %252 = vector.load %arg2[%c0_72, %c2_73, %c0_74, %c0_75] : memref<1x4x2x128xf32, #tpu.memory_space<vmem>>, vector<1x1x2x128xf32>
    %253 = vector.shape_cast %252 : vector<1x1x2x128xf32> to vector<2x128xf32>
    %c76 = arith.constant 76 : index
    %254 = memref.load %arg3[%c76] : memref<128xf32, #tpu.memory_space<smem>>
    %255 = vector.broadcast %254 : f32 to vector<2x128xf32>
    %256 = arith.mulf %253, %255 : vector<2x128xf32>
    %257 = arith.addf %239, %256 : vector<2x128xf32>
    %c77 = arith.constant 77 : index
    %258 = memref.load %arg3[%c77] : memref<128xf32, #tpu.memory_space<smem>>
    %259 = vector.broadcast %258 : f32 to vector<2x128xf32>
    %260 = arith.mulf %253, %259 : vector<2x128xf32>
    %261 = arith.addf %243, %260 : vector<2x128xf32>
    %c78 = arith.constant 78 : index
    %262 = memref.load %arg3[%c78] : memref<128xf32, #tpu.memory_space<smem>>
    %263 = vector.broadcast %262 : f32 to vector<2x128xf32>
    %264 = arith.mulf %253, %263 : vector<2x128xf32>
    %265 = arith.addf %247, %264 : vector<2x128xf32>
    %c79 = arith.constant 79 : index
    %266 = memref.load %arg3[%c79] : memref<128xf32, #tpu.memory_space<smem>>
    %267 = vector.broadcast %266 : f32 to vector<2x128xf32>
    %268 = arith.mulf %253, %267 : vector<2x128xf32>
    %269 = arith.addf %251, %268 : vector<2x128xf32>
    %c0_76 = arith.constant 0 : index
    %c3_77 = arith.constant 3 : index
    %c0_78 = arith.constant 0 : index
    %c0_79 = arith.constant 0 : index
    %270 = vector.load %arg2[%c0_76, %c3_77, %c0_78, %c0_79] : memref<1x4x2x128xf32, #tpu.memory_space<vmem>>, vector<1x1x2x128xf32>
    %271 = vector.shape_cast %270 : vector<1x1x2x128xf32> to vector<2x128xf32>
    %c108 = arith.constant 108 : index
    %272 = memref.load %arg3[%c108] : memref<128xf32, #tpu.memory_space<smem>>
    %273 = vector.broadcast %272 : f32 to vector<2x128xf32>
    %274 = arith.mulf %271, %273 : vector<2x128xf32>
    %275 = arith.addf %257, %274 : vector<2x128xf32>
    %c109 = arith.constant 109 : index
    %276 = memref.load %arg3[%c109] : memref<128xf32, #tpu.memory_space<smem>>
    %277 = vector.broadcast %276 : f32 to vector<2x128xf32>
    %278 = arith.mulf %271, %277 : vector<2x128xf32>
    %279 = arith.addf %261, %278 : vector<2x128xf32>
    %c110 = arith.constant 110 : index
    %280 = memref.load %arg3[%c110] : memref<128xf32, #tpu.memory_space<smem>>
    %281 = vector.broadcast %280 : f32 to vector<2x128xf32>
    %282 = arith.mulf %271, %281 : vector<2x128xf32>
    %283 = arith.addf %265, %282 : vector<2x128xf32>
    %c111 = arith.constant 111 : index
    %284 = memref.load %arg3[%c111] : memref<128xf32, #tpu.memory_space<smem>>
    %285 = vector.broadcast %284 : f32 to vector<2x128xf32>
    %286 = arith.mulf %271, %285 : vector<2x128xf32>
    %287 = arith.addf %269, %286 : vector<2x128xf32>
    %288 = tpu.concatenate %275, %279, %283, %287 in 1 : vector<2x128xf32>, vector<2x128xf32>, vector<2x128xf32>, vector<2x128xf32> -> vector<2x512xf32>
    %cst_80 = arith.constant dense<0.000000e+00> : vector<2x512xf32>
    %289 = tpu.matmul %288, %0, %cst_80 {dimension_numbers = #tpu.dot_dimension_numbers<[1], [0], [0], [1], [0, 0, 1, 1], [], []>} : vector<2x512xf32>, vector<512x512xf32>, vector<2x512xf32> -> vector<2x512xf32>
    %c0_81 = arith.constant 0 : index
    %c3_82 = arith.constant 3 : index
    %c0_83 = arith.constant 0 : index
    %c0_84 = arith.constant 0 : index
    %290 = vector.load %arg5[%c0_81, %c3_82, %c0_83, %c0_84] : memref<1x8x2x512xf32, #tpu.memory_space<vmem>>, vector<1x1x2x512xf32>
    %291 = vector.shape_cast %290 : vector<1x1x2x512xf32> to vector<2x512xf32>
    %292 = vector.shape_cast %289 : vector<2x512xf32> to vector<1x1x2x512xf32>
    tpu.vector_store %arg5[%c0_81, %c3_82, %c0_83, %c0_84], %292 {strides = array<i32>} : memref<1x8x2x512xf32, #tpu.memory_space<vmem>>, vector<1x1x2x512xf32>,
    %c0_85 = arith.constant 0 : index
    %c0_86 = arith.constant 0 : index
    %c0_87 = arith.constant 0 : index
    %c0_88 = arith.constant 0 : index
    %293 = vector.load %arg2[%c0_85, %c0_86, %c0_87, %c0_88] : memref<1x4x2x128xf32, #tpu.memory_space<vmem>>, vector<1x1x2x128xf32>
    %294 = vector.shape_cast %293 : vector<1x1x2x128xf32> to vector<2x128xf32>
    %c16 = arith.constant 16 : index
    %295 = memref.load %arg3[%c16] : memref<128xf32, #tpu.memory_space<smem>>
    %296 = vector.broadcast %295 : f32 to vector<2x128xf32>
    %297 = arith.mulf %294, %296 : vector<2x128xf32>
    %c17 = arith.constant 17 : index
    %298 = memref.load %arg3[%c17] : memref<128xf32, #tpu.memory_space<smem>>
    %299 = vector.broadcast %298 : f32 to vector<2x128xf32>
    %300 = arith.mulf %294, %299 : vector<2x128xf32>
    %c18 = arith.constant 18 : index
    %301 = memref.load %arg3[%c18] : memref<128xf32, #tpu.memory_space<smem>>
    %302 = vector.broadcast %301 : f32 to vector<2x128xf32>
    %303 = arith.mulf %294, %302 : vector<2x128xf32>
    %c19 = arith.constant 19 : index
    %304 = memref.load %arg3[%c19] : memref<128xf32, #tpu.memory_space<smem>>
    %305 = vector.broadcast %304 : f32 to vector<2x128xf32>
    %306 = arith.mulf %294, %305 : vector<2x128xf32>
    %c0_89 = arith.constant 0 : index
    %c1_90 = arith.constant 1 : index
    %c0_91 = arith.constant 0 : index
    %c0_92 = arith.constant 0 : index
    %307 = vector.load %arg2[%c0_89, %c1_90, %c0_91, %c0_92] : memref<1x4x2x128xf32, #tpu.memory_space<vmem>>, vector<1x1x2x128xf32>
    %308 = vector.shape_cast %307 : vector<1x1x2x128xf32> to vector<2x128xf32>
    %c48 = arith.constant 48 : index
    %309 = memref.load %arg3[%c48] : memref<128xf32, #tpu.memory_space<smem>>
    %310 = vector.broadcast %309 : f32 to vector<2x128xf32>
    %311 = arith.mulf %308, %310 : vector<2x128xf32>
    %312 = arith.addf %297, %311 : vector<2x128xf32>
    %c49 = arith.constant 49 : index
    %313 = memref.load %arg3[%c49] : memref<128xf32, #tpu.memory_space<smem>>
    %314 = vector.broadcast %313 : f32 to vector<2x128xf32>
    %315 = arith.mulf %308, %314 : vector<2x128xf32>
    %316 = arith.addf %300, %315 : vector<2x128xf32>
    %c50 = arith.constant 50 : index
    %317 = memref.load %arg3[%c50] : memref<128xf32, #tpu.memory_space<smem>>
    %318 = vector.broadcast %317 : f32 to vector<2x128xf32>
    %319 = arith.mulf %308, %318 : vector<2x128xf32>
    %320 = arith.addf %303, %319 : vector<2x128xf32>
    %c51 = arith.constant 51 : index
    %321 = memref.load %arg3[%c51] : memref<128xf32, #tpu.memory_space<smem>>
    %322 = vector.broadcast %321 : f32 to vector<2x128xf32>
    %323 = arith.mulf %308, %322 : vector<2x128xf32>
    %324 = arith.addf %306, %323 : vector<2x128xf32>
    %c0_93 = arith.constant 0 : index
    %c2_94 = arith.constant 2 : index
    %c0_95 = arith.constant 0 : index
    %c0_96 = arith.constant 0 : index
    %325 = vector.load %arg2[%c0_93, %c2_94, %c0_95, %c0_96] : memref<1x4x2x128xf32, #tpu.memory_space<vmem>>, vector<1x1x2x128xf32>
    %326 = vector.shape_cast %325 : vector<1x1x2x128xf32> to vector<2x128xf32>
    %c80 = arith.constant 80 : index
    %327 = memref.load %arg3[%c80] : memref<128xf32, #tpu.memory_space<smem>>
    %328 = vector.broadcast %327 : f32 to vector<2x128xf32>
    %329 = arith.mulf %326, %328 : vector<2x128xf32>
    %330 = arith.addf %312, %329 : vector<2x128xf32>
    %c81 = arith.constant 81 : index
    %331 = memref.load %arg3[%c81] : memref<128xf32, #tpu.memory_space<smem>>
    %332 = vector.broadcast %331 : f32 to vector<2x128xf32>
    %333 = arith.mulf %326, %332 : vector<2x128xf32>
    %334 = arith.addf %316, %333 : vector<2x128xf32>
    %c82 = arith.constant 82 : index
    %335 = memref.load %arg3[%c82] : memref<128xf32, #tpu.memory_space<smem>>
    %336 = vector.broadcast %335 : f32 to vector<2x128xf32>
    %337 = arith.mulf %326, %336 : vector<2x128xf32>
    %338 = arith.addf %320, %337 : vector<2x128xf32>
    %c83 = arith.constant 83 : index
    %339 = memref.load %arg3[%c83] : memref<128xf32, #tpu.memory_space<smem>>
    %340 = vector.broadcast %339 : f32 to vector<2x128xf32>
    %341 = arith.mulf %326, %340 : vector<2x128xf32>
    %342 = arith.addf %324, %341 : vector<2x128xf32>
    %c0_97 = arith.constant 0 : index
    %c3_98 = arith.constant 3 : index
    %c0_99 = arith.constant 0 : index
    %c0_100 = arith.constant 0 : index
    %343 = vector.load %arg2[%c0_97, %c3_98, %c0_99, %c0_100] : memref<1x4x2x128xf32, #tpu.memory_space<vmem>>, vector<1x1x2x128xf32>
    %344 = vector.shape_cast %343 : vector<1x1x2x128xf32> to vector<2x128xf32>
    %c112 = arith.constant 112 : index
    %345 = memref.load %arg3[%c112] : memref<128xf32, #tpu.memory_space<smem>>
    %346 = vector.broadcast %345 : f32 to vector<2x128xf32>
    %347 = arith.mulf %344, %346 : vector<2x128xf32>
    %348 = arith.addf %330, %347 : vector<2x128xf32>
    %c113 = arith.constant 113 : index
    %349 = memref.load %arg3[%c113] : memref<128xf32, #tpu.memory_space<smem>>
    %350 = vector.broadcast %349 : f32 to vector<2x128xf32>
    %351 = arith.mulf %344, %350 : vector<2x128xf32>
    %352 = arith.addf %334, %351 : vector<2x128xf32>
    %c114 = arith.constant 114 : index
    %353 = memref.load %arg3[%c114] : memref<128xf32, #tpu.memory_space<smem>>
    %354 = vector.broadcast %353 : f32 to vector<2x128xf32>
    %355 = arith.mulf %344, %354 : vector<2x128xf32>
    %356 = arith.addf %338, %355 : vector<2x128xf32>
    %c115 = arith.constant 115 : index
    %357 = memref.load %arg3[%c115] : memref<128xf32, #tpu.memory_space<smem>>
    %358 = vector.broadcast %357 : f32 to vector<2x128xf32>
    %359 = arith.mulf %344, %358 : vector<2x128xf32>
    %360 = arith.addf %342, %359 : vector<2x128xf32>
    %361 = tpu.concatenate %348, %352, %356, %360 in 1 : vector<2x128xf32>, vector<2x128xf32>, vector<2x128xf32>, vector<2x128xf32> -> vector<2x512xf32>
    %cst_101 = arith.constant dense<0.000000e+00> : vector<2x512xf32>
    %362 = tpu.matmul %361, %0, %cst_101 {dimension_numbers = #tpu.dot_dimension_numbers<[1], [0], [0], [1], [0, 0, 1, 1], [], []>} : vector<2x512xf32>, vector<512x512xf32>, vector<2x512xf32> -> vector<2x512xf32>
    %c0_102 = arith.constant 0 : index
    %c4_103 = arith.constant 4 : index
    %c0_104 = arith.constant 0 : index
    %c0_105 = arith.constant 0 : index
    %363 = vector.load %arg5[%c0_102, %c4_103, %c0_104, %c0_105] : memref<1x8x2x512xf32, #tpu.memory_space<vmem>>, vector<1x1x2x512xf32>
    %364 = vector.shape_cast %363 : vector<1x1x2x512xf32> to vector<2x512xf32>
    %365 = vector.shape_cast %362 : vector<2x512xf32> to vector<1x1x2x512xf32>
    tpu.vector_store %arg5[%c0_102, %c4_103, %c0_104, %c0_105], %365 {strides = array<i32>} : memref<1x8x2x512xf32, #tpu.memory_space<vmem>>, vector<1x1x2x512xf32>,
    %c0_106 = arith.constant 0 : index
    %c0_107 = arith.constant 0 : index
    %c0_108 = arith.constant 0 : index
    %c0_109 = arith.constant 0 : index
    %366 = vector.load %arg2[%c0_106, %c0_107, %c0_108, %c0_109] : memref<1x4x2x128xf32, #tpu.memory_space<vmem>>, vector<1x1x2x128xf32>
    %367 = vector.shape_cast %366 : vector<1x1x2x128xf32> to vector<2x128xf32>
    %c20 = arith.constant 20 : index
    %368 = memref.load %arg3[%c20] : memref<128xf32, #tpu.memory_space<smem>>
    %369 = vector.broadcast %368 : f32 to vector<2x128xf32>
    %370 = arith.mulf %367, %369 : vector<2x128xf32>
    %c21 = arith.constant 21 : index
    %371 = memref.load %arg3[%c21] : memref<128xf32, #tpu.memory_space<smem>>
    %372 = vector.broadcast %371 : f32 to vector<2x128xf32>
    %373 = arith.mulf %367, %372 : vector<2x128xf32>
    %c22 = arith.constant 22 : index
    %374 = memref.load %arg3[%c22] : memref<128xf32, #tpu.memory_space<smem>>
    %375 = vector.broadcast %374 : f32 to vector<2x128xf32>
    %376 = arith.mulf %367, %375 : vector<2x128xf32>
    %c23 = arith.constant 23 : index
    %377 = memref.load %arg3[%c23] : memref<128xf32, #tpu.memory_space<smem>>
    %378 = vector.broadcast %377 : f32 to vector<2x128xf32>
    %379 = arith.mulf %367, %378 : vector<2x128xf32>
    %c0_110 = arith.constant 0 : index
    %c1_111 = arith.constant 1 : index
    %c0_112 = arith.constant 0 : index
    %c0_113 = arith.constant 0 : index
    %380 = vector.load %arg2[%c0_110, %c1_111, %c0_112, %c0_113] : memref<1x4x2x128xf32, #tpu.memory_space<vmem>>, vector<1x1x2x128xf32>
    %381 = vector.shape_cast %380 : vector<1x1x2x128xf32> to vector<2x128xf32>
    %c52 = arith.constant 52 : index
    %382 = memref.load %arg3[%c52] : memref<128xf32, #tpu.memory_space<smem>>
    %383 = vector.broadcast %382 : f32 to vector<2x128xf32>
    %384 = arith.mulf %381, %383 : vector<2x128xf32>
    %385 = arith.addf %370, %384 : vector<2x128xf32>
    %c53 = arith.constant 53 : index
    %386 = memref.load %arg3[%c53] : memref<128xf32, #tpu.memory_space<smem>>
    %387 = vector.broadcast %386 : f32 to vector<2x128xf32>
    %388 = arith.mulf %381, %387 : vector<2x128xf32>
    %389 = arith.addf %373, %388 : vector<2x128xf32>
    %c54 = arith.constant 54 : index
    %390 = memref.load %arg3[%c54] : memref<128xf32, #tpu.memory_space<smem>>
    %391 = vector.broadcast %390 : f32 to vector<2x128xf32>
    %392 = arith.mulf %381, %391 : vector<2x128xf32>
    %393 = arith.addf %376, %392 : vector<2x128xf32>
    %c55 = arith.constant 55 : index
    %394 = memref.load %arg3[%c55] : memref<128xf32, #tpu.memory_space<smem>>
    %395 = vector.broadcast %394 : f32 to vector<2x128xf32>
    %396 = arith.mulf %381, %395 : vector<2x128xf32>
    %397 = arith.addf %379, %396 : vector<2x128xf32>
    %c0_114 = arith.constant 0 : index
    %c2_115 = arith.constant 2 : index
    %c0_116 = arith.constant 0 : index
    %c0_117 = arith.constant 0 : index
    %398 = vector.load %arg2[%c0_114, %c2_115, %c0_116, %c0_117] : memref<1x4x2x128xf32, #tpu.memory_space<vmem>>, vector<1x1x2x128xf32>
    %399 = vector.shape_cast %398 : vector<1x1x2x128xf32> to vector<2x128xf32>
    %c84 = arith.constant 84 : index
    %400 = memref.load %arg3[%c84] : memref<128xf32, #tpu.memory_space<smem>>
    %401 = vector.broadcast %400 : f32 to vector<2x128xf32>
    %402 = arith.mulf %399, %401 : vector<2x128xf32>
    %403 = arith.addf %385, %402 : vector<2x128xf32>
    %c85 = arith.constant 85 : index
    %404 = memref.load %arg3[%c85] : memref<128xf32, #tpu.memory_space<smem>>
    %405 = vector.broadcast %404 : f32 to vector<2x128xf32>
    %406 = arith.mulf %399, %405 : vector<2x128xf32>
    %407 = arith.addf %389, %406 : vector<2x128xf32>
    %c86 = arith.constant 86 : index
    %408 = memref.load %arg3[%c86] : memref<128xf32, #tpu.memory_space<smem>>
    %409 = vector.broadcast %408 : f32 to vector<2x128xf32>
    %410 = arith.mulf %399, %409 : vector<2x128xf32>
    %411 = arith.addf %393, %410 : vector<2x128xf32>
    %c87 = arith.constant 87 : index
    %412 = memref.load %arg3[%c87] : memref<128xf32, #tpu.memory_space<smem>>
    %413 = vector.broadcast %412 : f32 to vector<2x128xf32>
    %414 = arith.mulf %399, %413 : vector<2x128xf32>
    %415 = arith.addf %397, %414 : vector<2x128xf32>
    %c0_118 = arith.constant 0 : index
    %c3_119 = arith.constant 3 : index
    %c0_120 = arith.constant 0 : index
    %c0_121 = arith.constant 0 : index
    %416 = vector.load %arg2[%c0_118, %c3_119, %c0_120, %c0_121] : memref<1x4x2x128xf32, #tpu.memory_space<vmem>>, vector<1x1x2x128xf32>
    %417 = vector.shape_cast %416 : vector<1x1x2x128xf32> to vector<2x128xf32>
    %c116 = arith.constant 116 : index
    %418 = memref.load %arg3[%c116] : memref<128xf32, #tpu.memory_space<smem>>
    %419 = vector.broadcast %418 : f32 to vector<2x128xf32>
    %420 = arith.mulf %417, %419 : vector<2x128xf32>
    %421 = arith.addf %403, %420 : vector<2x128xf32>
    %c117 = arith.constant 117 : index
    %422 = memref.load %arg3[%c117] : memref<128xf32, #tpu.memory_space<smem>>
    %423 = vector.broadcast %422 : f32 to vector<2x128xf32>
    %424 = arith.mulf %417, %423 : vector<2x128xf32>
    %425 = arith.addf %407, %424 : vector<2x128xf32>
    %c118 = arith.constant 118 : index
    %426 = memref.load %arg3[%c118] : memref<128xf32, #tpu.memory_space<smem>>
    %427 = vector.broadcast %426 : f32 to vector<2x128xf32>
    %428 = arith.mulf %417, %427 : vector<2x128xf32>
    %429 = arith.addf %411, %428 : vector<2x128xf32>
    %c119 = arith.constant 119 : index
    %430 = memref.load %arg3[%c119] : memref<128xf32, #tpu.memory_space<smem>>
    %431 = vector.broadcast %430 : f32 to vector<2x128xf32>
    %432 = arith.mulf %417, %431 : vector<2x128xf32>
    %433 = arith.addf %415, %432 : vector<2x128xf32>
    %434 = tpu.concatenate %421, %425, %429, %433 in 1 : vector<2x128xf32>, vector<2x128xf32>, vector<2x128xf32>, vector<2x128xf32> -> vector<2x512xf32>
    %cst_122 = arith.constant dense<0.000000e+00> : vector<2x512xf32>
    %435 = tpu.matmul %434, %0, %cst_122 {dimension_numbers = #tpu.dot_dimension_numbers<[1], [0], [0], [1], [0, 0, 1, 1], [], []>} : vector<2x512xf32>, vector<512x512xf32>, vector<2x512xf32> -> vector<2x512xf32>
    %c0_123 = arith.constant 0 : index
    %c5_124 = arith.constant 5 : index
    %c0_125 = arith.constant 0 : index
    %c0_126 = arith.constant 0 : index
    %436 = vector.load %arg5[%c0_123, %c5_124, %c0_125, %c0_126] : memref<1x8x2x512xf32, #tpu.memory_space<vmem>>, vector<1x1x2x512xf32>
    %437 = vector.shape_cast %436 : vector<1x1x2x512xf32> to vector<2x512xf32>
    %438 = vector.shape_cast %435 : vector<2x512xf32> to vector<1x1x2x512xf32>
    tpu.vector_store %arg5[%c0_123, %c5_124, %c0_125, %c0_126], %438 {strides = array<i32>} : memref<1x8x2x512xf32, #tpu.memory_space<vmem>>, vector<1x1x2x512xf32>,
    %c0_127 = arith.constant 0 : index
    %c0_128 = arith.constant 0 : index
    %c0_129 = arith.constant 0 : index
    %c0_130 = arith.constant 0 : index
    %439 = vector.load %arg2[%c0_127, %c0_128, %c0_129, %c0_130] : memref<1x4x2x128xf32, #tpu.memory_space<vmem>>, vector<1x1x2x128xf32>
    %440 = vector.shape_cast %439 : vector<1x1x2x128xf32> to vector<2x128xf32>
    %c24 = arith.constant 24 : index
    %441 = memref.load %arg3[%c24] : memref<128xf32, #tpu.memory_space<smem>>
    %442 = vector.broadcast %441 : f32 to vector<2x128xf32>
    %443 = arith.mulf %440, %442 : vector<2x128xf32>
    %c25 = arith.constant 25 : index
    %444 = memref.load %arg3[%c25] : memref<128xf32, #tpu.memory_space<smem>>
    %445 = vector.broadcast %444 : f32 to vector<2x128xf32>
    %446 = arith.mulf %440, %445 : vector<2x128xf32>
    %c26 = arith.constant 26 : index
    %447 = memref.load %arg3[%c26] : memref<128xf32, #tpu.memory_space<smem>>
    %448 = vector.broadcast %447 : f32 to vector<2x128xf32>
    %449 = arith.mulf %440, %448 : vector<2x128xf32>
    %c27 = arith.constant 27 : index
    %450 = memref.load %arg3[%c27] : memref<128xf32, #tpu.memory_space<smem>>
    %451 = vector.broadcast %450 : f32 to vector<2x128xf32>
    %452 = arith.mulf %440, %451 : vector<2x128xf32>
    %c0_131 = arith.constant 0 : index
    %c1_132 = arith.constant 1 : index
    %c0_133 = arith.constant 0 : index
    %c0_134 = arith.constant 0 : index
    %453 = vector.load %arg2[%c0_131, %c1_132, %c0_133, %c0_134] : memref<1x4x2x128xf32, #tpu.memory_space<vmem>>, vector<1x1x2x128xf32>
    %454 = vector.shape_cast %453 : vector<1x1x2x128xf32> to vector<2x128xf32>
    %c56 = arith.constant 56 : index
    %455 = memref.load %arg3[%c56] : memref<128xf32, #tpu.memory_space<smem>>
    %456 = vector.broadcast %455 : f32 to vector<2x128xf32>
    %457 = arith.mulf %454, %456 : vector<2x128xf32>
    %458 = arith.addf %443, %457 : vector<2x128xf32>
    %c57 = arith.constant 57 : index
    %459 = memref.load %arg3[%c57] : memref<128xf32, #tpu.memory_space<smem>>
    %460 = vector.broadcast %459 : f32 to vector<2x128xf32>
    %461 = arith.mulf %454, %460 : vector<2x128xf32>
    %462 = arith.addf %446, %461 : vector<2x128xf32>
    %c58 = arith.constant 58 : index
    %463 = memref.load %arg3[%c58] : memref<128xf32, #tpu.memory_space<smem>>
    %464 = vector.broadcast %463 : f32 to vector<2x128xf32>
    %465 = arith.mulf %454, %464 : vector<2x128xf32>
    %466 = arith.addf %449, %465 : vector<2x128xf32>
    %c59 = arith.constant 59 : index
    %467 = memref.load %arg3[%c59] : memref<128xf32, #tpu.memory_space<smem>>
    %468 = vector.broadcast %467 : f32 to vector<2x128xf32>
    %469 = arith.mulf %454, %468 : vector<2x128xf32>
    %470 = arith.addf %452, %469 : vector<2x128xf32>
    %c0_135 = arith.constant 0 : index
    %c2_136 = arith.constant 2 : index
    %c0_137 = arith.constant 0 : index
    %c0_138 = arith.constant 0 : index
    %471 = vector.load %arg2[%c0_135, %c2_136, %c0_137, %c0_138] : memref<1x4x2x128xf32, #tpu.memory_space<vmem>>, vector<1x1x2x128xf32>
    %472 = vector.shape_cast %471 : vector<1x1x2x128xf32> to vector<2x128xf32>
    %c88 = arith.constant 88 : index
    %473 = memref.load %arg3[%c88] : memref<128xf32, #tpu.memory_space<smem>>
    %474 = vector.broadcast %473 : f32 to vector<2x128xf32>
    %475 = arith.mulf %472, %474 : vector<2x128xf32>
    %476 = arith.addf %458, %475 : vector<2x128xf32>
    %c89 = arith.constant 89 : index
    %477 = memref.load %arg3[%c89] : memref<128xf32, #tpu.memory_space<smem>>
    %478 = vector.broadcast %477 : f32 to vector<2x128xf32>
    %479 = arith.mulf %472, %478 : vector<2x128xf32>
    %480 = arith.addf %462, %479 : vector<2x128xf32>
    %c90 = arith.constant 90 : index
    %481 = memref.load %arg3[%c90] : memref<128xf32, #tpu.memory_space<smem>>
    %482 = vector.broadcast %481 : f32 to vector<2x128xf32>
    %483 = arith.mulf %472, %482 : vector<2x128xf32>
    %484 = arith.addf %466, %483 : vector<2x128xf32>
    %c91 = arith.constant 91 : index
    %485 = memref.load %arg3[%c91] : memref<128xf32, #tpu.memory_space<smem>>
    %486 = vector.broadcast %485 : f32 to vector<2x128xf32>
    %487 = arith.mulf %472, %486 : vector<2x128xf32>
    %488 = arith.addf %470, %487 : vector<2x128xf32>
    %c0_139 = arith.constant 0 : index
    %c3_140 = arith.constant 3 : index
    %c0_141 = arith.constant 0 : index
    %c0_142 = arith.constant 0 : index
    %489 = vector.load %arg2[%c0_139, %c3_140, %c0_141, %c0_142] : memref<1x4x2x128xf32, #tpu.memory_space<vmem>>, vector<1x1x2x128xf32>
    %490 = vector.shape_cast %489 : vector<1x1x2x128xf32> to vector<2x128xf32>
    %c120 = arith.constant 120 : index
    %491 = memref.load %arg3[%c120] : memref<128xf32, #tpu.memory_space<smem>>
    %492 = vector.broadcast %491 : f32 to vector<2x128xf32>
    %493 = arith.mulf %490, %492 : vector<2x128xf32>
    %494 = arith.addf %476, %493 : vector<2x128xf32>
    %c121 = arith.constant 121 : index
    %495 = memref.load %arg3[%c121] : memref<128xf32, #tpu.memory_space<smem>>
    %496 = vector.broadcast %495 : f32 to vector<2x128xf32>
    %497 = arith.mulf %490, %496 : vector<2x128xf32>
    %498 = arith.addf %480, %497 : vector<2x128xf32>
    %c122 = arith.constant 122 : index
    %499 = memref.load %arg3[%c122] : memref<128xf32, #tpu.memory_space<smem>>
    %500 = vector.broadcast %499 : f32 to vector<2x128xf32>
    %501 = arith.mulf %490, %500 : vector<2x128xf32>
    %502 = arith.addf %484, %501 : vector<2x128xf32>
    %c123 = arith.constant 123 : index
    %503 = memref.load %arg3[%c123] : memref<128xf32, #tpu.memory_space<smem>>
    %504 = vector.broadcast %503 : f32 to vector<2x128xf32>
    %505 = arith.mulf %490, %504 : vector<2x128xf32>
    %506 = arith.addf %488, %505 : vector<2x128xf32>
    %507 = tpu.concatenate %494, %498, %502, %506 in 1 : vector<2x128xf32>, vector<2x128xf32>, vector<2x128xf32>, vector<2x128xf32> -> vector<2x512xf32>
    %cst_143 = arith.constant dense<0.000000e+00> : vector<2x512xf32>
    %508 = tpu.matmul %507, %0, %cst_143 {dimension_numbers = #tpu.dot_dimension_numbers<[1], [0], [0], [1], [0, 0, 1, 1], [], []>} : vector<2x512xf32>, vector<512x512xf32>, vector<2x512xf32> -> vector<2x512xf32>
    %c0_144 = arith.constant 0 : index
    %c6_145 = arith.constant 6 : index
    %c0_146 = arith.constant 0 : index
    %c0_147 = arith.constant 0 : index
    %509 = vector.load %arg5[%c0_144, %c6_145, %c0_146, %c0_147] : memref<1x8x2x512xf32, #tpu.memory_space<vmem>>, vector<1x1x2x512xf32>
    %510 = vector.shape_cast %509 : vector<1x1x2x512xf32> to vector<2x512xf32>
    %511 = vector.shape_cast %508 : vector<2x512xf32> to vector<1x1x2x512xf32>
    tpu.vector_store %arg5[%c0_144, %c6_145, %c0_146, %c0_147], %511 {strides = array<i32>} : memref<1x8x2x512xf32, #tpu.memory_space<vmem>>, vector<1x1x2x512xf32>,
    %c0_148 = arith.constant 0 : index
    %c0_149 = arith.constant 0 : index
    %c0_150 = arith.constant 0 : index
    %c0_151 = arith.constant 0 : index
    %512 = vector.load %arg2[%c0_148, %c0_149, %c0_150, %c0_151] : memref<1x4x2x128xf32, #tpu.memory_space<vmem>>, vector<1x1x2x128xf32>
    %513 = vector.shape_cast %512 : vector<1x1x2x128xf32> to vector<2x128xf32>
    %c28 = arith.constant 28 : index
    %514 = memref.load %arg3[%c28] : memref<128xf32, #tpu.memory_space<smem>>
    %515 = vector.broadcast %514 : f32 to vector<2x128xf32>
    %516 = arith.mulf %513, %515 : vector<2x128xf32>
    %c29 = arith.constant 29 : index
    %517 = memref.load %arg3[%c29] : memref<128xf32, #tpu.memory_space<smem>>
    %518 = vector.broadcast %517 : f32 to vector<2x128xf32>
    %519 = arith.mulf %513, %518 : vector<2x128xf32>
    %c30 = arith.constant 30 : index
    %520 = memref.load %arg3[%c30] : memref<128xf32, #tpu.memory_space<smem>>
    %521 = vector.broadcast %520 : f32 to vector<2x128xf32>
    %522 = arith.mulf %513, %521 : vector<2x128xf32>
    %c31 = arith.constant 31 : index
    %523 = memref.load %arg3[%c31] : memref<128xf32, #tpu.memory_space<smem>>
    %524 = vector.broadcast %523 : f32 to vector<2x128xf32>
    %525 = arith.mulf %513, %524 : vector<2x128xf32>
    %c0_152 = arith.constant 0 : index
    %c1_153 = arith.constant 1 : index
    %c0_154 = arith.constant 0 : index
    %c0_155 = arith.constant 0 : index
    %526 = vector.load %arg2[%c0_152, %c1_153, %c0_154, %c0_155] : memref<1x4x2x128xf32, #tpu.memory_space<vmem>>, vector<1x1x2x128xf32>
    %527 = vector.shape_cast %526 : vector<1x1x2x128xf32> to vector<2x128xf32>
    %c60 = arith.constant 60 : index
    %528 = memref.load %arg3[%c60] : memref<128xf32, #tpu.memory_space<smem>>
    %529 = vector.broadcast %528 : f32 to vector<2x128xf32>
    %530 = arith.mulf %527, %529 : vector<2x128xf32>
    %531 = arith.addf %516, %530 : vector<2x128xf32>
    %c61 = arith.constant 61 : index
    %532 = memref.load %arg3[%c61] : memref<128xf32, #tpu.memory_space<smem>>
    %533 = vector.broadcast %532 : f32 to vector<2x128xf32>
    %534 = arith.mulf %527, %533 : vector<2x128xf32>
    %535 = arith.addf %519, %534 : vector<2x128xf32>
    %c62 = arith.constant 62 : index
    %536 = memref.load %arg3[%c62] : memref<128xf32, #tpu.memory_space<smem>>
    %537 = vector.broadcast %536 : f32 to vector<2x128xf32>
    %538 = arith.mulf %527, %537 : vector<2x128xf32>
    %539 = arith.addf %522, %538 : vector<2x128xf32>
    %c63 = arith.constant 63 : index
    %540 = memref.load %arg3[%c63] : memref<128xf32, #tpu.memory_space<smem>>
    %541 = vector.broadcast %540 : f32 to vector<2x128xf32>
    %542 = arith.mulf %527, %541 : vector<2x128xf32>
    %543 = arith.addf %525, %542 : vector<2x128xf32>
    %c0_156 = arith.constant 0 : index
    %c2_157 = arith.constant 2 : index
    %c0_158 = arith.constant 0 : index
    %c0_159 = arith.constant 0 : index
    %544 = vector.load %arg2[%c0_156, %c2_157, %c0_158, %c0_159] : memref<1x4x2x128xf32, #tpu.memory_space<vmem>>, vector<1x1x2x128xf32>
    %545 = vector.shape_cast %544 : vector<1x1x2x128xf32> to vector<2x128xf32>
    %c92 = arith.constant 92 : index
    %546 = memref.load %arg3[%c92] : memref<128xf32, #tpu.memory_space<smem>>
    %547 = vector.broadcast %546 : f32 to vector<2x128xf32>
    %548 = arith.mulf %545, %547 : vector<2x128xf32>
    %549 = arith.addf %531, %548 : vector<2x128xf32>
    %c93 = arith.constant 93 : index
    %550 = memref.load %arg3[%c93] : memref<128xf32, #tpu.memory_space<smem>>
    %551 = vector.broadcast %550 : f32 to vector<2x128xf32>
    %552 = arith.mulf %545, %551 : vector<2x128xf32>
    %553 = arith.addf %535, %552 : vector<2x128xf32>
    %c94 = arith.constant 94 : index
    %554 = memref.load %arg3[%c94] : memref<128xf32, #tpu.memory_space<smem>>
    %555 = vector.broadcast %554 : f32 to vector<2x128xf32>
    %556 = arith.mulf %545, %555 : vector<2x128xf32>
    %557 = arith.addf %539, %556 : vector<2x128xf32>
    %c95 = arith.constant 95 : index
    %558 = memref.load %arg3[%c95] : memref<128xf32, #tpu.memory_space<smem>>
    %559 = vector.broadcast %558 : f32 to vector<2x128xf32>
    %560 = arith.mulf %545, %559 : vector<2x128xf32>
    %561 = arith.addf %543, %560 : vector<2x128xf32>
    %c0_160 = arith.constant 0 : index
    %c3_161 = arith.constant 3 : index
    %c0_162 = arith.constant 0 : index
    %c0_163 = arith.constant 0 : index
    %562 = vector.load %arg2[%c0_160, %c3_161, %c0_162, %c0_163] : memref<1x4x2x128xf32, #tpu.memory_space<vmem>>, vector<1x1x2x128xf32>
    %563 = vector.shape_cast %562 : vector<1x1x2x128xf32> to vector<2x128xf32>
    %c124 = arith.constant 124 : index
    %564 = memref.load %arg3[%c124] : memref<128xf32, #tpu.memory_space<smem>>
    %565 = vector.broadcast %564 : f32 to vector<2x128xf32>
    %566 = arith.mulf %563, %565 : vector<2x128xf32>
    %567 = arith.addf %549, %566 : vector<2x128xf32>
    %c125 = arith.constant 125 : index
    %568 = memref.load %arg3[%c125] : memref<128xf32, #tpu.memory_space<smem>>
    %569 = vector.broadcast %568 : f32 to vector<2x128xf32>
    %570 = arith.mulf %563, %569 : vector<2x128xf32>
    %571 = arith.addf %553, %570 : vector<2x128xf32>
    %c126 = arith.constant 126 : index
    %572 = memref.load %arg3[%c126] : memref<128xf32, #tpu.memory_space<smem>>
    %573 = vector.broadcast %572 : f32 to vector<2x128xf32>
    %574 = arith.mulf %563, %573 : vector<2x128xf32>
    %575 = arith.addf %557, %574 : vector<2x128xf32>
    %c127 = arith.constant 127 : index
    %576 = memref.load %arg3[%c127] : memref<128xf32, #tpu.memory_space<smem>>
    %577 = vector.broadcast %576 : f32 to vector<2x128xf32>
    %578 = arith.mulf %563, %577 : vector<2x128xf32>
    %579 = arith.addf %561, %578 : vector<2x128xf32>
    %580 = tpu.concatenate %567, %571, %575, %579 in 1 : vector<2x128xf32>, vector<2x128xf32>, vector<2x128xf32>, vector<2x128xf32> -> vector<2x512xf32>
    %cst_164 = arith.constant dense<0.000000e+00> : vector<2x512xf32>
    %581 = tpu.matmul %580, %0, %cst_164 {dimension_numbers = #tpu.dot_dimension_numbers<[1], [0], [0], [1], [0, 0, 1, 1], [], []>} : vector<2x512xf32>, vector<512x512xf32>, vector<2x512xf32> -> vector<2x512xf32>
    %c0_165 = arith.constant 0 : index
    %c7_166 = arith.constant 7 : index
    %c0_167 = arith.constant 0 : index
    %c0_168 = arith.constant 0 : index
    %582 = vector.load %arg5[%c0_165, %c7_166, %c0_167, %c0_168] : memref<1x8x2x512xf32, #tpu.memory_space<vmem>>, vector<1x1x2x512xf32>
    %583 = vector.shape_cast %582 : vector<1x1x2x512xf32> to vector<2x512xf32>
    %584 = vector.shape_cast %581 : vector<2x512xf32> to vector<1x1x2x512xf32>
    tpu.vector_store %arg5[%c0_165, %c7_166, %c0_167, %c0_168], %584 {strides = array<i32>} : memref<1x8x2x512xf32, #tpu.memory_space<vmem>>, vector<1x1x2x512xf32>,
    return
  }
  func.func @transform_0(%arg0: i32, %arg1: i32) -> (i32, i32, i32, i32) {
    %c0_i32 = arith.constant 0 : i32
    %c0_i32_0 = arith.constant 0 : i32
    %c0_i32_1 = arith.constant 0 : i32
    return %arg0, %c0_i32, %arg1, %c0_i32_0 : i32, i32, i32, i32
  }
  func.func @transform_1(%arg0: i32, %arg1: i32) -> i32 {
    %c0_i32 = arith.constant 0 : i32
    %c0_i32_0 = arith.constant 0 : i32
    return %c0_i32 : i32
  }
  func.func @transform_2(%arg0: i32, %arg1: i32) -> (i32, i32) {
    %c0_i32 = arith.constant 0 : i32
    %c0_i32_0 = arith.constant 0 : i32
    %c0_i32_1 = arith.constant 0 : i32
    return %c0_i32, %c0_i32_0 : i32, i32
  }
  func.func @transform_3(%arg0: i32, %arg1: i32) -> (i32, i32, i32, i32) {
    %c0_i32 = arith.constant 0 : i32
    %c0_i32_0 = arith.constant 0 : i32
    %c0_i32_1 = arith.constant 0 : i32
    return %arg0, %c0_i32, %arg1, %c0_i32_0 : i32, i32, i32, i32
  }
}

</mosaic_0001>

<llo_original>
// kernel: convolution_upscale.1
$region0: #{convolution_upscale.1}
  #allocation0 [shape = 'u32[]', space=smem, size = 0x4, offset = 0x4, fixed_abs, tag = 'smem constant byte address 0x4 - core index']
  #allocation1 [shape = 'u32[144,128]{1,0:T(1,128)}', space=vmem, size = 0x12000, scoped, tag = 'internal scratch']
  %s0 = inlined_call_operand.vmem [shape: f32[2,4,2,128], index: 0, kind: input, shape index: {}]
  %s1 = inlined_call_operand.vmem [shape: f32[128], index: 1, kind: input, shape index: {}]
  %s2 = inlined_call_operand.hbm [shape: f32[512,512], index: 2, kind: input, shape index: {}]
  %s3 = inlined_call_operand.vmem [shape: f32[2,8,2,512], index: 3, kind: output, shape index: {}]
  %s4 = sld [smem:[#allocation0]]
  $region53: #{convolution_upscale.1} parent=0
    _
  %s6 = ssub.s32 1, %s4
  %s7 = scalar_select 0, %s6, %s4
  $region1: #{convolution_upscale.1} parent=0
    #allocation2 [shape = 'u8[512]{0}', space=smem, size = 0x200, scoped, tag = 'input window, operand 1, single buffered']
    #allocation3 [shape = 's32[2]{0}', space=sflag, size = 0x8, scoped, tag = 'scoped memory for convolution_upscale.1']
    #allocation4 [shape = 's32[2]{0}', space=sflag, size = 0x8, scoped, tag = 'scoped memory for convolution_upscale.1']
    #allocation5 [shape = 'u8[1048576]{0}', space=vmem, size = 0x100000, scoped, tag = 'input window, operand 2, single buffered']
    %8 = vsyncpa [#allocation4], 0
    %9 = vsyncpa [#allocation3], 0
    loop: start=0, step=1, limit=4
    $region2: #{convolution_upscale.1} parent=1 // loop_pre_header
      _
    $region3: #{convolution_upscale.1} parent=1 // loop_header
      %s11 = sphi 0, %s15
      %p12 = scmp.ge.s32.totalorder %s11, 4
      %s18 = sphi 0, %s30
      %s19 = sphi 0, %s26
      %s20 = sphi 0, %s18
      %s21 = sphi 0, %s19
      %s22 = sphi 0, %s20
      %s23 = sphi 0, %s21
      %s35 = sphi 0, %s37
      %s38 = sphi 0, %s35
      %s39 = sphi 0, %s38
      %s55 = sphi 0, %s39
      %s59 = sphi 0, %s59
      %s61 = sphi 0, %s59
      %s62 = sphi 0, %s61
      %s76 = sphi 0, %s62
      %s80 = sphi 0, %s80
      %s82 = sphi 0, %s80
      %s83 = sphi 0, %s82
      %s97 = sphi 0, %s83
      %s105 = sphi 0, %s107
      %s108 = sphi 0, %s105
      %s109 = sphi 0, %s108
      %s125 = sphi 0, %s109
    $region4: #{convolution_upscale.1} parent=1 // loop_header_branch
      %14 = sbr.rel (%p12) target = $region8
    $region5: #{convolution_upscale.1} parent=1 // loop_body
      %s16 = ssub.s32 %s11, 1
      %s17 = ssub.s32 %s11, 2
      %s24 = sadd.s32 1, %s19
      %p25 = scmp.ge.s32.totalorder %s24, 1
      %s26 = scalar_select %p25, 0, %s24
      %s27 = sadd.s32 1, %s18
      %s28 = scalar_select %p25, %s27, %s18
      %p29 = scmp.ge.s32.totalorder %s28, 2
      %s30 = scalar_select %p29, 0, %s28
      %s31 = ssub.s32 %s18, %s30
      %s32 = ssub.s32 %s19, %s26
      %s33 = sor.u32 %s31, %s32
      %p34 = scmp.eq.s32.totalorder %s33, 0
      %s36 = sadd.s32 %s35, 1
      %s37 = scalar_select %p34, %s35, %s36
      %p40 = pneg %p34
      %p41 = scmp.eq.s32.totalorder %s11, 1
      %p42 = por %p40, %p41
      %p43 = scmp.ne.s32.totalorder %s35, %s38
      %p44 = scmp.eq.s32.totalorder %s11, 0
      %p45 = por %p43, %p44
      %p46 = scmp.ne.s32.totalorder %s35, %s38
      %p47 = scmp.eq.s32.totalorder %s16, 1
      %p48 = por %p46, %p47
      %p49 = scmp.ne.s32.totalorder %s38, %s39
      %p50 = scmp.eq.s32.totalorder %s16, 0
      %p51 = por %p49, %p50
      %p52 = scmp.ne.s32.totalorder %s38, %s39
      %p53 = scmp.eq.s32.totalorder %s17, 1
      %p54 = por %p52, %p53
      %p56 = scmp.ne.s32.totalorder %s39, %s55
      %p57 = scmp.eq.s32.totalorder %s17, 0
      %p58 = por %p56, %p57
      %s60 = sadd.s32 %s59, 1
      %p63 = scmp.eq.s32.totalorder %s11, 1
      %p64 = scmp.ne.s32.totalorder %s59, %s61
      %p65 = scmp.eq.s32.totalorder %s11, 0
      %p66 = por %p64, %p65
      %p67 = scmp.ne.s32.totalorder %s59, %s61
      %p68 = scmp.eq.s32.totalorder %s16, 1
      %p69 = por %p67, %p68
      %p70 = scmp.ne.s32.totalorder %s61, %s62
      %p71 = scmp.eq.s32.totalorder %s16, 0
      %p72 = por %p70, %p71
      %p73 = scmp.ne.s32.totalorder %s61, %s62
      %p74 = scmp.eq.s32.totalorder %s17, 1
      %p75 = por %p73, %p74
      %p77 = scmp.ne.s32.totalorder %s62, %s76
      %p78 = scmp.eq.s32.totalorder %s17, 0
      %p79 = por %p77, %p78
      %s81 = sadd.s32 %s80, 1
      %p84 = scmp.eq.s32.totalorder %s11, 1
      %p85 = scmp.ne.s32.totalorder %s80, %s82
      %p86 = scmp.eq.s32.totalorder %s11, 0
      %p87 = por %p85, %p86
      %p88 = scmp.ne.s32.totalorder %s80, %s82
      %p89 = scmp.eq.s32.totalorder %s16, 1
      %p90 = por %p88, %p89
      %p91 = scmp.ne.s32.totalorder %s82, %s83
      %p92 = scmp.eq.s32.totalorder %s16, 0
      %p93 = por %p91, %p92
      %p94 = scmp.ne.s32.totalorder %s82, %s83
      %p95 = scmp.eq.s32.totalorder %s17, 1
      %p96 = por %p94, %p95
      %p98 = scmp.ne.s32.totalorder %s83, %s97
      %p99 = scmp.eq.s32.totalorder %s17, 0
      %p100 = por %p98, %p99
      %s101 = ssub.s32 %s18, %s30
      %s102 = ssub.s32 %s19, %s26
      %s103 = sor.u32 %s101, %s102
      %p104 = scmp.eq.s32.totalorder %s103, 0
      %s106 = sadd.s32 %s105, 1
      %s107 = scalar_select %p104, %s105, %s106
      %p110 = pneg %p104
      %p111 = scmp.eq.s32.totalorder %s11, 1
      %p112 = por %p110, %p111
      %p113 = scmp.ne.s32.totalorder %s105, %s108
      %p114 = scmp.eq.s32.totalorder %s11, 0
      %p115 = por %p113, %p114
      %p116 = scmp.ne.s32.totalorder %s105, %s108
      %p117 = scmp.eq.s32.totalorder %s16, 1
      %p118 = por %p116, %p117
      %p119 = scmp.ne.s32.totalorder %s108, %s109
      %p120 = scmp.eq.s32.totalorder %s16, 0
      %p121 = por %p119, %p120
      %p122 = scmp.ne.s32.totalorder %s108, %s109
      %p123 = scmp.eq.s32.totalorder %s17, 1
      %p124 = por %p122, %p123
      %p126 = scmp.ne.s32.totalorder %s109, %s125
      %p127 = scmp.eq.s32.totalorder %s17, 0
      %p128 = por %p126, %p127
      %p129 = scmp.le.s32.totalorder 1, %s11
      %p130 = scmp.lt.s32.totalorder %s11, 3
      %p131 = pnand %p129, %p130
      %p132 = pneg %p131
      // Predicated region
      $region9: #{convolution_upscale.1} parent=5 // pred_check
        _
      $region10: #{convolution_upscale.1} parent=5 // pred_check_branch
        %134 = sbr.rel (%p131) target = $region12
      $region11: #{convolution_upscale.1} parent=5 // pred_region
        %s135 = ssub.s32 %s11, 1
        // Predicated region
        $region13: #{convolution_upscale.1} parent=11 // pred_check
          %p136 = pneg %p72
        $region14: #{convolution_upscale.1} parent=11 // pred_check_branch
          %138 = sbr.rel (%p136) target = $region16
        $region15: #{convolution_upscale.1} parent=11 // pred_region
          %s140 = ssub.s32 16, 16
          %141 = vsyncadd [#allocation4], %s140
          %s143 = sshll.u32 %s1, 4
          %s144 = int_to_ptr.vmem [resolvable:$true] %s143
          %146 = dma.vmem_to_smem %s144, 16, [#allocation2], [#allocation4]
        $region16: #{convolution_upscale.1} parent=11 // pred_fallthru
          _
        // Predicated region
        $region17: #{convolution_upscale.1} parent=11 // pred_check
          %p147 = pneg %p93
        $region18: #{convolution_upscale.1} parent=11 // pred_check_branch
          %149 = sbr.rel (%p147) target = $region20
        $region19: #{convolution_upscale.1} parent=11 // pred_region
          %s151 = ssub.s32 32768, 32768
          %152 = vsyncadd [#allocation3], %s151
          %s153 = sshll.u32 [#allocation5], 4
          %s154 = int_to_ptr.vmem [resolvable:$true] %s153
          %159 = dma.hbm_to_vmem [thread:$0]  %s2, 32768, %s154, [#allocation3], 512, 512, 32
        $region20: #{convolution_upscale.1} parent=11 // pred_fallthru
          _
      $region12: #{convolution_upscale.1} parent=5 // pred_fallthru
        _
      %p160 = scmp.lt.s32.totalorder %s11, 2
      // Predicated region
      $region21: #{convolution_upscale.1} parent=5 // pred_check
        %p161 = pneg %p160
      $region22: #{convolution_upscale.1} parent=5 // pred_check_branch
        %163 = sbr.rel (%p161) target = $region24
      $region23: #{convolution_upscale.1} parent=5 // pred_region
        // Predicated region
        $region25: #{convolution_upscale.1} parent=23 // pred_check
          %p164 = pneg %p45
        $region26: #{convolution_upscale.1} parent=23 // pred_check_branch
          %166 = sbr.rel (%p164) target = $region28
        $region27: #{convolution_upscale.1} parent=23 // pred_region
          %p167 = scmp.lt.s32.totalorder %s18, 1
          %s168 = scalar_select %p167, %s18, 1
          %p169 = scmp.lt.s32.totalorder %s19, 0
          %s170 = scalar_select %p169, %s19, 0
          %s171 = smul.addr %s168, 4
          %s172 = sadd.s32 %s170, %s171
          %s173 = smul.addr %s172, 2
          %s174 = scalar_lea.vmem %s0, %s173
        $region28: #{convolution_upscale.1} parent=23 // pred_fallthru
          _
      $region24: #{convolution_upscale.1} parent=5 // pred_fallthru
        _
      %p175 = scmp.le.s32.totalorder 1, %s11
      %p176 = scmp.lt.s32.totalorder %s11, 3
      %p177 = pnand %p175, %p176
      %p178 = pneg %p177
      // Predicated region
      $region29: #{convolution_upscale.1} parent=5 // pred_check
        _
      $region30: #{convolution_upscale.1} parent=5 // pred_check_branch
        %180 = sbr.rel (%p177) target = $region32
      $region31: #{convolution_upscale.1} parent=5 // pred_region
        %s181 = ssub.s32 %s11, 1
        // Predicated region
        $region33: #{convolution_upscale.1} parent=31 // pred_check
          %p182 = pneg %p72
        $region34: #{convolution_upscale.1} parent=31 // pred_check_branch
          %184 = sbr.rel (%p182) target = $region36
        $region35: #{convolution_upscale.1} parent=31 // pred_region
          %185 = dma.done [#allocation4], 16
        $region36: #{convolution_upscale.1} parent=31 // pred_fallthru
          _
        // Predicated region
        $region37: #{convolution_upscale.1} parent=31 // pred_check
          %p186 = pneg %p93
        $region38: #{convolution_upscale.1} parent=31 // pred_check_branch
          %188 = sbr.rel (%p186) target = $region40
        $region39: #{convolution_upscale.1} parent=31 // pred_region
          %189 = dma.done [#allocation3], 32768
        $region40: #{convolution_upscale.1} parent=31 // pred_fallthru
          _
        %190 = sfence
        %p191 = scmp.lt.s32.totalorder %s20, 1
        %s192 = scalar_select %p191, %s20, 1
        %p193 = scmp.lt.s32.totalorder %s21, 0
        %s194 = scalar_select %p193, %s21, 0
        %s195 = smul.addr %s192, 4
        %s196 = sadd.s32 %s194, %s195
        %s197 = smul.addr %s196, 2
        %s198 = scalar_lea.vmem %s0, %s197
        %p199 = pneg %p51
        %p200 = pneg %p48
        %p201 = pneg %p72
        %p202 = pneg %p69
        %p203 = pneg %p93
        %p204 = pneg %p90
        %p205 = pneg %p121
        %p206 = pneg %p118
        %p207 = scmp.lt.s32.totalorder %s20, 1
        %s208 = scalar_select %p207, %s20, 1
        %p209 = scmp.lt.s32.totalorder %s21, 0
        %s210 = scalar_select %p209, %s21, 0
        %s211 = smul.addr %s210, 4
        %s212 = smul.addr %s208, 32
        %s213 = sadd.s32 %s211, %s212
        %s214 = smul.addr %s213, 2
        %s215 = scalar_lea.vmem %s3, %s214
        %p216 = scmp.lt.s32.totalorder %s20, 1
        %s217 = scalar_select %p216, %s20, 1
        %p218 = scmp.lt.s32.totalorder %s21, 0
        %s219 = scalar_select %p218, %s21, 0
        %s220 = smul.addr %s217, 4
        %s221 = sadd.s32 %s219, %s220
        %s222 = smul.addr %s221, 2
        %s223 = scalar_lea.vmem %s0, %s222
        %p224 = scmp.lt.s32.totalorder %s20, 1
        %s225 = scalar_select %p224, %s20, 1
        %p226 = scmp.lt.s32.totalorder %s21, 0
        %s227 = scalar_select %p226, %s21, 0
        %s228 = smul.addr %s227, 4
        %s229 = smul.addr %s225, 32
        %s230 = sadd.s32 %s228, %s229
        %s231 = smul.addr %s230, 2
        %s232 = scalar_lea.vmem %s3, %s231
        %v233 = vld [vmem:[#allocation5] sm:$0xff]
        %v234 = vld [vmem:[#allocation5 + $0x8] sm:$0xff]
        %v235 = vld [vmem:[#allocation5 + $0x10] sm:$0xff]
        %v236 = vld [vmem:[#allocation5 + $0x18] sm:$0xff]
        %v237 = vld [vmem:[#allocation5 + $0x20] sm:$0xff]
        %v238 = vld [vmem:[#allocation5 + $0x28] sm:$0xff]
        %v239 = vld [vmem:[#allocation5 + $0x30] sm:$0xff]
        %v240 = vld [vmem:[#allocation5 + $0x38] sm:$0xff]
        %v241 = vld [vmem:[#allocation5 + $0x40] sm:$0xff]
        %v242 = vld [vmem:[#allocation5 + $0x48] sm:$0xff]
        %v243 = vld [vmem:[#allocation5 + $0x50] sm:$0xff]
        %v244 = vld [vmem:[#allocation5 + $0x58] sm:$0xff]
        %v245 = vld [vmem:[#allocation5 + $0x60] sm:$0xff]
        %v246 = vld [vmem:[#allocation5 + $0x68] sm:$0xff]
        %v247 = vld [vmem:[#allocation5 + $0x70] sm:$0xff]
        %v248 = vld [vmem:[#allocation5 + $0x78] sm:$0xff]
        %v249 = vld [vmem:[#allocation5 + $0x80] sm:$0xff]
        %v250 = vld [vmem:[#allocation5 + $0x88] sm:$0xff]
        %v251 = vld [vmem:[#allocation5 + $0x90] sm:$0xff]
        %v252 = vld [vmem:[#allocation5 + $0x98] sm:$0xff]
        %v253 = vld [vmem:[#allocation5 + $0xa0] sm:$0xff]
        %v254 = vld [vmem:[#allocation5 + $0xa8] sm:$0xff]
        %v255 = vld [vmem:[#allocation5 + $0xb0] sm:$0xff]
        %v256 = vld [vmem:[#allocation5 + $0xb8] sm:$0xff]
        %v257 = vld [vmem:[#allocation5 + $0xc0] sm:$0xff]
        %v258 = vld [vmem:[#allocation5 + $0xc8] sm:$0xff]
        %v259 = vld [vmem:[#allocation5 + $0xd0] sm:$0xff]
        %v260 = vld [vmem:[#allocation5 + $0xd8] sm:$0xff]
        %v261 = vld [vmem:[#allocation5 + $0xe0] sm:$0xff]
        %v262 = vld [vmem:[#allocation5 + $0xe8] sm:$0xff]
        %v263 = vld [vmem:[#allocation5 + $0xf0] sm:$0xff]
        %v264 = vld [vmem:[#allocation5 + $0xf8] sm:$0xff]
        %v265 = vld [vmem:[#allocation5 + $0x100] sm:$0xff]
        %v266 = vld [vmem:[#allocation5 + $0x108] sm:$0xff]
        %v267 = vld [vmem:[#allocation5 + $0x110] sm:$0xff]
        %v268 = vld [vmem:[#allocation5 + $0x118] sm:$0xff]
        %v269 = vld [vmem:[#allocation5 + $0x120] sm:$0xff]
        %v270 = vld [vmem:[#allocation5 + $0x128] sm:$0xff]
        %v271 = vld [vmem:[#allocation5 + $0x130] sm:$0xff]
        %v272 = vld [vmem:[#allocation5 + $0x138] sm:$0xff]
        %v273 = vld [vmem:[#allocation5 + $0x140] sm:$0xff]
        %v274 = vld [vmem:[#allocation5 + $0x148] sm:$0xff]
        %v275 = vld [vmem:[#allocation5 + $0x150] sm:$0xff]
        %v276 = vld [vmem:[#allocation5 + $0x158] sm:$0xff]
        %v277 = vld [vmem:[#allocation5 + $0x160] sm:$0xff]
        %v278 = vld [vmem:[#allocation5 + $0x168] sm:$0xff]
        %v279 = vld [vmem:[#allocation5 + $0x170] sm:$0xff]
        %v280 = vld [vmem:[#allocation5 + $0x178] sm:$0xff]
        %v281 = vld [vmem:[#allocation5 + $0x180] sm:$0xff]
        %v282 = vld [vmem:[#allocation5 + $0x188] sm:$0xff]
        %v283 = vld [vmem:[#allocation5 + $0x190] sm:$0xff]
        %v284 = vld [vmem:[#allocation5 + $0x198] sm:$0xff]
        %v285 = vld [vmem:[#allocation5 + $0x1a0] sm:$0xff]
        %v286 = vld [vmem:[#allocation5 + $0x1a8] sm:$0xff]
        %v287 = vld [vmem:[#allocation5 + $0x1b0] sm:$0xff]
        %v288 = vld [vmem:[#allocation5 + $0x1b8] sm:$0xff]
        %v289 = vld [vmem:[#allocation5 + $0x1c0] sm:$0xff]
        %v290 = vld [vmem:[#allocation5 + $0x1c8] sm:$0xff]
        %v291 = vld [vmem:[#allocation5 + $0x1d0] sm:$0xff]
        %v292 = vld [vmem:[#allocation5 + $0x1d8] sm:$0xff]
        %v293 = vld [vmem:[#allocation5 + $0x1e0] sm:$0xff]
        %v294 = vld [vmem:[#allocation5 + $0x1e8] sm:$0xff]
        %v295 = vld [vmem:[#allocation5 + $0x1f0] sm:$0xff]
        %v296 = vld [vmem:[#allocation5 + $0x1f8] sm:$0xff]
        %v297 = vld [vmem:[#allocation5 + $0x200] sm:$0xff]
        %v298 = vld [vmem:[#allocation5 + $0x208] sm:$0xff]
        %v299 = vld [vmem:[#allocation5 + $0x210] sm:$0xff]
        %v300 = vld [vmem:[#allocation5 + $0x218] sm:$0xff]
        %v301 = vld [vmem:[#allocation5 + $0x220] sm:$0xff]
        %v302 = vld [vmem:[#allocation5 + $0x228] sm:$0xff]
        %v303 = vld [vmem:[#allocation5 + $0x230] sm:$0xff]
        %v304 = vld [vmem:[#allocation5 + $0x238] sm:$0xff]
        %v305 = vld [vmem:[#allocation5 + $0x240] sm:$0xff]
        %v306 = vld [vmem:[#allocation5 + $0x248] sm:$0xff]
        %v307 = vld [vmem:[#allocation5 + $0x250] sm:$0xff]
        %v308 = vld [vmem:[#allocation5 + $0x258] sm:$0xff]
        %v309 = vld [vmem:[#allocation5 + $0x260] sm:$0xff]
        %v310 = vld [vmem:[#allocation5 + $0x268] sm:$0xff]
        %v311 = vld [vmem:[#allocation5 + $0x270] sm:$0xff]
        %v312 = vld [vmem:[#allocation5 + $0x278] sm:$0xff]
        %v313 = vld [vmem:[#allocation5 + $0x280] sm:$0xff]
        %v314 = vld [vmem:[#allocation5 + $0x288] sm:$0xff]
        %v315 = vld [vmem:[#allocation5 + $0x290] sm:$0xff]
        %v316 = vld [vmem:[#allocation5 + $0x298] sm:$0xff]
        %v317 = vld [vmem:[#allocation5 + $0x2a0] sm:$0xff]
        %v318 = vld [vmem:[#allocation5 + $0x2a8] sm:$0xff]
        %v319 = vld [vmem:[#allocation5 + $0x2b0] sm:$0xff]
        %v320 = vld [vmem:[#allocation5 + $0x2b8] sm:$0xff]
        %v321 = vld [vmem:[#allocation5 + $0x2c0] sm:$0xff]
        %v322 = vld [vmem:[#allocation5 + $0x2c8] sm:$0xff]
        %v323 = vld [vmem:[#allocation5 + $0x2d0] sm:$0xff]
        %v324 = vld [vmem:[#allocation5 + $0x2d8] sm:$0xff]
        %v325 = vld [vmem:[#allocation5 + $0x2e0] sm:$0xff]
        %v326 = vld [vmem:[#allocation5 + $0x2e8] sm:$0xff]
        %v327 = vld [vmem:[#allocation5 + $0x2f0] sm:$0xff]
        %v328 = vld [vmem:[#allocation5 + $0x2f8] sm:$0xff]
        %v329 = vld [vmem:[#allocation5 + $0x300] sm:$0xff]
        %v330 = vld [vmem:[#allocation5 + $0x308] sm:$0xff]
        %v331 = vld [vmem:[#allocation5 + $0x310] sm:$0xff]
        %v332 = vld [vmem:[#allocation5 + $0x318] sm:$0xff]
        %v333 = vld [vmem:[#allocation5 + $0x320] sm:$0xff]
        %v334 = vld [vmem:[#allocation5 + $0x328] sm:$0xff]
        %v335 = vld [vmem:[#allocation5 + $0x330] sm:$0xff]
        %v336 = vld [vmem:[#allocation5 + $0x338] sm:$0xff]
        %v337 = vld [vmem:[#allocation5 + $0x340] sm:$0xff]
        %v338 = vld [vmem:[#allocation5 + $0x348] sm:$0xff]
        %v339 = vld [vmem:[#allocation5 + $0x350] sm:$0xff]
        %v340 = vld [vmem:[#allocation5 + $0x358] sm:$0xff]
        %v341 = vld [vmem:[#allocation5 + $0x360] sm:$0xff]
        %v342 = vld [vmem:[#allocation5 + $0x368] sm:$0xff]
        %v343 = vld [vmem:[#allocation5 + $0x370] sm:$0xff]
        %v344 = vld [vmem:[#allocation5 + $0x378] sm:$0xff]
        %v345 = vld [vmem:[#allocation5 + $0x380] sm:$0xff]
        %v346 = vld [vmem:[#allocation5 + $0x388] sm:$0xff]
        %v347 = vld [vmem:[#allocation5 + $0x390] sm:$0xff]
        %v348 = vld [vmem:[#allocation5 + $0x398] sm:$0xff]
        %v349 = vld [vmem:[#allocation5 + $0x3a0] sm:$0xff]
        %v350 = vld [vmem:[#allocation5 + $0x3a8] sm:$0xff]
        %v351 = vld [vmem:[#allocation5 + $0x3b0] sm:$0xff]
        %v352 = vld [vmem:[#allocation5 + $0x3b8] sm:$0xff]
        %v353 = vld [vmem:[#allocation5 + $0x3c0] sm:$0xff]
        %v354 = vld [vmem:[#allocation5 + $0x3c8] sm:$0xff]
        %v355 = vld [vmem:[#allocation5 + $0x3d0] sm:$0xff]
        %v356 = vld [vmem:[#allocation5 + $0x3d8] sm:$0xff]
        %v357 = vld [vmem:[#allocation5 + $0x3e0] sm:$0xff]
        %v358 = vld [vmem:[#allocation5 + $0x3e8] sm:$0xff]
        %v359 = vld [vmem:[#allocation5 + $0x3f0] sm:$0xff]
        %v360 = vld [vmem:[#allocation5 + $0x3f8] sm:$0xff]
        %v361 = vld [vmem:[#allocation5 + $0x400] sm:$0xff]
        %v362 = vld [vmem:[#allocation5 + $0x408] sm:$0xff]
        %v363 = vld [vmem:[#allocation5 + $0x410] sm:$0xff]
        %v364 = vld [vmem:[#allocation5 + $0x418] sm:$0xff]
        %v365 = vld [vmem:[#allocation5 + $0x420] sm:$0xff]
        %v366 = vld [vmem:[#allocation5 + $0x428] sm:$0xff]
        %v367 = vld [vmem:[#allocation5 + $0x430] sm:$0xff]
        %v368 = vld [vmem:[#allocation5 + $0x438] sm:$0xff]
        %v369 = vld [vmem:[#allocation5 + $0x440] sm:$0xff]
        %v370 = vld [vmem:[#allocation5 + $0x448] sm:$0xff]
        %v371 = vld [vmem:[#allocation5 + $0x450] sm:$0xff]
        %v372 = vld [vmem:[#allocation5 + $0x458] sm:$0xff]
        %v373 = vld [vmem:[#allocation5 + $0x460] sm:$0xff]
        %v374 = vld [vmem:[#allocation5 + $0x468] sm:$0xff]
        %v375 = vld [vmem:[#allocation5 + $0x470] sm:$0xff]
        %v376 = vld [vmem:[#allocation5 + $0x478] sm:$0xff]
        %v377 = vld [vmem:[#allocation5 + $0x480] sm:$0xff]
        %v378 = vld [vmem:[#allocation5 + $0x488] sm:$0xff]
        %v379 = vld [vmem:[#allocation5 + $0x490] sm:$0xff]
        %v380 = vld [vmem:[#allocation5 + $0x498] sm:$0xff]
        %v381 = vld [vmem:[#allocation5 + $0x4a0] sm:$0xff]
        %v382 = vld [vmem:[#allocation5 + $0x4a8] sm:$0xff]
        %v383 = vld [vmem:[#allocation5 + $0x4b0] sm:$0xff]
        %v384 = vld [vmem:[#allocation5 + $0x4b8] sm:$0xff]
        %v385 = vld [vmem:[#allocation5 + $0x4c0] sm:$0xff]
        %v386 = vld [vmem:[#allocation5 + $0x4c8] sm:$0xff]
        %v387 = vld [vmem:[#allocation5 + $0x4d0] sm:$0xff]
        %v388 = vld [vmem:[#allocation5 + $0x4d8] sm:$0xff]
        %v389 = vld [vmem:[#allocation5 + $0x4e0] sm:$0xff]
        %v390 = vld [vmem:[#allocation5 + $0x4e8] sm:$0xff]
        %v391 = vld [vmem:[#allocation5 + $0x4f0] sm:$0xff]
        %v392 = vld [vmem:[#allocation5 + $0x4f8] sm:$0xff]
        %v393 = vld [vmem:[#allocation5 + $0x500] sm:$0xff]
        %v394 = vld [vmem:[#allocation5 + $0x508] sm:$0xff]
        %v395 = vld [vmem:[#allocation5 + $0x510] sm:$0xff]
        %v396 = vld [vmem:[#allocation5 + $0x518] sm:$0xff]
        %v397 = vld [vmem:[#allocation5 + $0x520] sm:$0xff]
        %v398 = vld [vmem:[#allocation5 + $0x528] sm:$0xff]
        %v399 = vld [vmem:[#allocation5 + $0x530] sm:$0xff]
        %v400 = vld [vmem:[#allocation5 + $0x538] sm:$0xff]
        %v401 = vld [vmem:[#allocation5 + $0x540] sm:$0xff]
        %v402 = vld [vmem:[#allocation5 + $0x548] sm:$0xff]
        %v403 = vld [vmem:[#allocation5 + $0x550] sm:$0xff]
        %v404 = vld [vmem:[#allocation5 + $0x558] sm:$0xff]
        %v405 = vld [vmem:[#allocation5 + $0x560] sm:$0xff]
        %v406 = vld [vmem:[#allocation5 + $0x568] sm:$0xff]
        %v407 = vld [vmem:[#allocation5 + $0x570] sm:$0xff]
        %v408 = vld [vmem:[#allocation5 + $0x578] sm:$0xff]
        %v409 = vld [vmem:[#allocation5 + $0x580] sm:$0xff]
        %v410 = vld [vmem:[#allocation5 + $0x588] sm:$0xff]
        %v411 = vld [vmem:[#allocation5 + $0x590] sm:$0xff]
        %v412 = vld [vmem:[#allocation5 + $0x598] sm:$0xff]
        %v413 = vld [vmem:[#allocation5 + $0x5a0] sm:$0xff]
        %v414 = vld [vmem:[#allocation5 + $0x5a8] sm:$0xff]
        %v415 = vld [vmem:[#allocation5 + $0x5b0] sm:$0xff]
        %v416 = vld [vmem:[#allocation5 + $0x5b8] sm:$0xff]
        %v417 = vld [vmem:[#allocation5 + $0x5c0] sm:$0xff]
        %v418 = vld [vmem:[#allocation5 + $0x5c8] sm:$0xff]
        %v419 = vld [vmem:[#allocation5 + $0x5d0] sm:$0xff]
        %v420 = vld [vmem:[#allocation5 + $0x5d8] sm:$0xff]
        %v421 = vld [vmem:[#allocation5 + $0x5e0] sm:$0xff]
        %v422 = vld [vmem:[#allocation5 + $0x5e8] sm:$0xff]
        %v423 = vld [vmem:[#allocation5 + $0x5f0] sm:$0xff]
        %v424 = vld [vmem:[#allocation5 + $0x5f8] sm:$0xff]
        %v425 = vld [vmem:[#allocation5 + $0x600] sm:$0xff]
        %v426 = vld [vmem:[#allocation5 + $0x608] sm:$0xff]
        %v427 = vld [vmem:[#allocation5 + $0x610] sm:$0xff]
        %v428 = vld [vmem:[#allocation5 + $0x618] sm:$0xff]
        %v429 = vld [vmem:[#allocation5 + $0x620] sm:$0xff]
        %v430 = vld [vmem:[#allocation5 + $0x628] sm:$0xff]
        %v431 = vld [vmem:[#allocation5 + $0x630] sm:$0xff]
        %v432 = vld [vmem:[#allocation5 + $0x638] sm:$0xff]
        %v433 = vld [vmem:[#allocation5 + $0x640] sm:$0xff]
        %v434 = vld [vmem:[#allocation5 + $0x648] sm:$0xff]
        %v435 = vld [vmem:[#allocation5 + $0x650] sm:$0xff]
        %v436 = vld [vmem:[#allocation5 + $0x658] sm:$0xff]
        %v437 = vld [vmem:[#allocation5 + $0x660] sm:$0xff]
        %v438 = vld [vmem:[#allocation5 + $0x668] sm:$0xff]
        %v439 = vld [vmem:[#allocation5 + $0x670] sm:$0xff]
        %v440 = vld [vmem:[#allocation5 + $0x678] sm:$0xff]
        %v441 = vld [vmem:[#allocation5 + $0x680] sm:$0xff]
        %v442 = vld [vmem:[#allocation5 + $0x688] sm:$0xff]
        %v443 = vld [vmem:[#allocation5 + $0x690] sm:$0xff]
        %v444 = vld [vmem:[#allocation5 + $0x698] sm:$0xff]
        %v445 = vld [vmem:[#allocation5 + $0x6a0] sm:$0xff]
        %v446 = vld [vmem:[#allocation5 + $0x6a8] sm:$0xff]
        %v447 = vld [vmem:[#allocation5 + $0x6b0] sm:$0xff]
        %v448 = vld [vmem:[#allocation5 + $0x6b8] sm:$0xff]
        %v449 = vld [vmem:[#allocation5 + $0x6c0] sm:$0xff]
        %v450 = vld [vmem:[#allocation5 + $0x6c8] sm:$0xff]
        %v451 = vld [vmem:[#allocation5 + $0x6d0] sm:$0xff]
        %v452 = vld [vmem:[#allocation5 + $0x6d8] sm:$0xff]
        %v453 = vld [vmem:[#allocation5 + $0x6e0] sm:$0xff]
        %v454 = vld [vmem:[#allocation5 + $0x6e8] sm:$0xff]
        %v455 = vld [vmem:[#allocation5 + $0x6f0] sm:$0xff]
        %v456 = vld [vmem:[#allocation5 + $0x6f8] sm:$0xff]
        %v457 = vld [vmem:[#allocation5 + $0x700] sm:$0xff]
        %v458 = vld [vmem:[#allocation5 + $0x708] sm:$0xff]
        %v459 = vld [vmem:[#allocation5 + $0x710] sm:$0xff]
        %v460 = vld [vmem:[#allocation5 + $0x718] sm:$0xff]
        %v461 = vld [vmem:[#allocation5 + $0x720] sm:$0xff]
        %v462 = vld [vmem:[#allocation5 + $0x728] sm:$0xff]
        %v463 = vld [vmem:[#allocation5 + $0x730] sm:$0xff]
        %v464 = vld [vmem:[#allocation5 + $0x738] sm:$0xff]
        %v465 = vld [vmem:[#allocation5 + $0x740] sm:$0xff]
        %v466 = vld [vmem:[#allocation5 + $0x748] sm:$0xff]
        %v467 = vld [vmem:[#allocation5 + $0x750] sm:$0xff]
        %v468 = vld [vmem:[#allocation5 + $0x758] sm:$0xff]
        %v469 = vld [vmem:[#allocation5 + $0x760] sm:$0xff]
        %v470 = vld [vmem:[#allocation5 + $0x768] sm:$0xff]
        %v471 = vld [vmem:[#allocation5 + $0x770] sm:$0xff]
        %v472 = vld [vmem:[#allocation5 + $0x778] sm:$0xff]
        %v473 = vld [vmem:[#allocation5 + $0x780] sm:$0xff]
        %v474 = vld [vmem:[#allocation5 + $0x788] sm:$0xff]
        %v475 = vld [vmem:[#allocation5 + $0x790] sm:$0xff]
        %v476 = vld [vmem:[#allocation5 + $0x798] sm:$0xff]
        %v477 = vld [vmem:[#allocation5 + $0x7a0] sm:$0xff]
        %v478 = vld [vmem:[#allocation5 + $0x7a8] sm:$0xff]
        %v479 = vld [vmem:[#allocation5 + $0x7b0] sm:$0xff]
        %v480 = vld [vmem:[#allocation5 + $0x7b8] sm:$0xff]
        %v481 = vld [vmem:[#allocation5 + $0x7c0] sm:$0xff]
        %v482 = vld [vmem:[#allocation5 + $0x7c8] sm:$0xff]
        %v483 = vld [vmem:[#allocation5 + $0x7d0] sm:$0xff]
        %v484 = vld [vmem:[#allocation5 + $0x7d8] sm:$0xff]
        %v485 = vld [vmem:[#allocation5 + $0x7e0] sm:$0xff]
        %v486 = vld [vmem:[#allocation5 + $0x7e8] sm:$0xff]
        %v487 = vld [vmem:[#allocation5 + $0x7f0] sm:$0xff]
        %v488 = vld [vmem:[#allocation5 + $0x7f8] sm:$0xff]
        %v489 = vld [vmem:[%s223] sm:$0x3]
        %s490 = sld [smem:[#allocation2]]
        %v491 = vstv %s490
        %v492 = vmul.f32 %v489, %v491
        %s493 = sld [smem:[#allocation2 + $0x1]]
        %v494 = vstv %s493
        %v495 = vmul.f32 %v489, %v494
        %s496 = sld [smem:[#allocation2 + $0x2]]
        %v497 = vstv %s496
        %v498 = vmul.f32 %v489, %v497
        %s499 = sld [smem:[#allocation2 + $0x3]]
        %v500 = vstv %s499
        %v501 = vmul.f32 %v489, %v500
        %s502 = scalar_lea.vmem %s223, 2
        %v503 = vld [vmem:[%s502] sm:$0x3]
        %s504 = sld [smem:[#allocation2 + $0x20]]
        %v505 = vstv %s504
        %v506 = vmul.f32 %v503, %v505
        %v507 = vadd.f32 %v492, %v506
        %s508 = sld [smem:[#allocation2 + $0x21]]
        %v509 = vstv %s508
        %v510 = vmul.f32 %v503, %v509
        %v511 = vadd.f32 %v495, %v510
        %s512 = sld [smem:[#allocation2 + $0x22]]
        %v513 = vstv %s512
        %v514 = vmul.f32 %v503, %v513
        %v515 = vadd.f32 %v498, %v514
        %s516 = sld [smem:[#allocation2 + $0x23]]
        %v517 = vstv %s516
        %v518 = vmul.f32 %v503, %v517
        %v519 = vadd.f32 %v501, %v518
        %s520 = scalar_lea.vmem %s223, 4
        %v521 = vld [vmem:[%s520] sm:$0x3]
        %s522 = sld [smem:[#allocation2 + $0x40]]
        %v523 = vstv %s522
        %v524 = vmul.f32 %v521, %v523
        %v525 = vadd.f32 %v507, %v524
        %s526 = sld [smem:[#allocation2 + $0x41]]
        %v527 = vstv %s526
        %v528 = vmul.f32 %v521, %v527
        %v529 = vadd.f32 %v511, %v528
        %s530 = sld [smem:[#allocation2 + $0x42]]
        %v531 = vstv %s530
        %v532 = vmul.f32 %v521, %v531
        %v533 = vadd.f32 %v515, %v532
        %s534 = sld [smem:[#allocation2 + $0x43]]
        %v535 = vstv %s534
        %v536 = vmul.f32 %v521, %v535
        %v537 = vadd.f32 %v519, %v536
        %s538 = scalar_lea.vmem %s223, 6
        %v539 = vld [vmem:[%s538] sm:$0x3]
        %s540 = sld [smem:[#allocation2 + $0x60]]
        %v541 = vstv %s540
        %v542 = vmul.f32 %v539, %v541
        %v543 = vadd.f32 %v525, %v542
        %s544 = sld [smem:[#allocation2 + $0x61]]
        %v545 = vstv %s544
        %v546 = vmul.f32 %v539, %v545
        %v547 = vadd.f32 %v529, %v546
        %s548 = sld [smem:[#allocation2 + $0x62]]
        %v549 = vstv %s548
        %v550 = vmul.f32 %v539, %v549
        %v551 = vadd.f32 %v533, %v550
        %s552 = sld [smem:[#allocation2 + $0x63]]
        %v553 = vstv %s552
        %v554 = vmul.f32 %v539, %v553
        %v555 = vadd.f32 %v537, %v554
        %556 = vmatprep.subr.mxu0 %v234
        %557 = vmatpush1.msra.mxu0 %v233
        %558 = vmatprep.subr.mxu0 %v238
        %559 = vmatpush1.msra.mxu0 %v237
        %560 = vmatprep.subr.mxu0 %v242
        %561 = vmatpush1.msra.mxu0 %v241
        %562 = vmatprep.subr.mxu0 %v246
        %563 = vmatpush1.msra.mxu0 %v245
        %564 = vmatprep.subr.mxu0 %v250
        %565 = vmatpush1.msra.mxu0 %v249
        %566 = vmatprep.subr.mxu0 %v254
        %567 = vmatpush1.msra.mxu0 %v253
        %568 = vmatprep.subr.mxu0 %v258
        %569 = vmatpush1.msra.mxu0 %v257
        %570 = vmatprep.subr.mxu0 %v262
        %571 = vmatpush1.msra.mxu0 %v261
        %572 = vmatprep.subr.mxu0 %v266
        %573 = vmatpush1.msra.mxu0 %v265
        %574 = vmatprep.subr.mxu0 %v270
        %575 = vmatpush1.msra.mxu0 %v269
        %576 = vmatprep.subr.mxu0 %v274
        %577 = vmatpush1.msra.mxu0 %v273
        %578 = vmatprep.subr.mxu0 %v278
        %579 = vmatpush1.msra.mxu0 %v277
        %580 = vmatprep.subr.mxu0 %v282
        %581 = vmatpush1.msra.mxu0 %v281
        %582 = vmatprep.subr.mxu0 %v286
        %583 = vmatpush1.msra.mxu0 %v285
        %584 = vmatprep.subr.mxu0 %v290
        %585 = vmatpush1.msra.mxu0 %v289
        %586 = vmatprep.subr.mxu0 %v294
        %587 = vmatpush1.msra.mxu0 %v293
        %588 = vmatprep.subr.mxu0 %v298
        %589 = vmatpush1.msra.mxu0 %v297
        %590 = vmatprep.subr.mxu0 %v302
        %591 = vmatpush1.msra.mxu0 %v301
        %592 = vmatprep.subr.mxu0 %v306
        %593 = vmatpush1.msra.mxu0 %v305
        %594 = vmatprep.subr.mxu0 %v310
        %595 = vmatpush1.msra.mxu0 %v309
        %596 = vmatprep.subr.mxu0 %v314
        %597 = vmatpush1.msra.mxu0 %v313
        %598 = vmatprep.subr.mxu0 %v318
        %599 = vmatpush1.msra.mxu0 %v317
        %600 = vmatprep.subr.mxu0 %v322
        %601 = vmatpush1.msra.mxu0 %v321
        %602 = vmatprep.subr.mxu0 %v326
        %603 = vmatpush1.msra.mxu0 %v325
        %604 = vmatprep.subr.mxu0 %v330
        %605 = vmatpush1.msra.mxu0 %v329
        %606 = vmatprep.subr.mxu0 %v334
        %607 = vmatpush1.msra.mxu0 %v333
        %608 = vmatprep.subr.mxu0 %v338
        %609 = vmatpush1.msra.mxu0 %v337
        %610 = vmatprep.subr.mxu0 %v342
        %611 = vmatpush1.msra.mxu0 %v341
        %612 = vmatprep.subr.mxu0 %v346
        %613 = vmatpush1.msra.mxu0 %v345
        %614 = vmatprep.subr.mxu0 %v350
        %615 = vmatpush1.msra.mxu0 %v349
        %616 = vmatprep.subr.mxu0 %v354
        %617 = vmatpush1.msra.mxu0 %v353
        %618 = vmatprep.subr.mxu0 %v358
        %619 = vmatpush1.msra.mxu0 %v357
        %620 = vmatprep.mubr.f32.mxu0 %v547
        %621 = vmatmul.mubr.f32.gmra.mrb[0].mxu0 %v543
        %v622 = vpop.f32.mrb[0].mxu0
        %v623 = vadd.f32 0.0, %v622
        %v624 = vpop.f32.mrb[0].mxu0
        %v625 = vadd.f32 0.0, %v624
        %626 = vdwg.mxu0
        %627 = vmatprep.subr.mxu0 %v362
        %628 = vmatpush1.msra.mxu0 %v361
        %629 = vmatprep.subr.mxu0 %v366
        %630 = vmatpush1.msra.mxu0 %v365
        %631 = vmatprep.subr.mxu0 %v370
        %632 = vmatpush1.msra.mxu0 %v369
        %633 = vmatprep.subr.mxu0 %v374
        %634 = vmatpush1.msra.mxu0 %v373
        %635 = vmatprep.subr.mxu0 %v378
        %636 = vmatpush1.msra.mxu0 %v377
        %637 = vmatprep.subr.mxu0 %v382
        %638 = vmatpush1.msra.mxu0 %v381
        %639 = vmatprep.subr.mxu0 %v386
        %640 = vmatpush1.msra.mxu0 %v385
        %641 = vmatprep.subr.mxu0 %v390
        %642 = vmatpush1.msra.mxu0 %v389
        %643 = vmatprep.subr.mxu0 %v394
        %644 = vmatpush1.msra.mxu0 %v393
        %645 = vmatprep.subr.mxu0 %v398
        %646 = vmatpush1.msra.mxu0 %v397
        %647 = vmatprep.subr.mxu0 %v402
        %648 = vmatpush1.msra.mxu0 %v401
        %649 = vmatprep.subr.mxu0 %v406
        %650 = vmatpush1.msra.mxu0 %v405
        %651 = vmatprep.subr.mxu0 %v410
        %652 = vmatpush1.msra.mxu0 %v409
        %653 = vmatprep.subr.mxu0 %v414
        %654 = vmatpush1.msra.mxu0 %v413
        %655 = vmatprep.subr.mxu0 %v418
        %656 = vmatpush1.msra.mxu0 %v417
        %657 = vmatprep.subr.mxu0 %v422
        %658 = vmatpush1.msra.mxu0 %v421
        %659 = vmatprep.subr.mxu0 %v426
        %660 = vmatpush1.msra.mxu0 %v425
        %661 = vmatprep.subr.mxu0 %v430
        %662 = vmatpush1.msra.mxu0 %v429
        %663 = vmatprep.subr.mxu0 %v434
        %664 = vmatpush1.msra.mxu0 %v433
        %665 = vmatprep.subr.mxu0 %v438
        %666 = vmatpush1.msra.mxu0 %v437
        %667 = vmatprep.subr.mxu0 %v442
        %668 = vmatpush1.msra.mxu0 %v441
        %669 = vmatprep.subr.mxu0 %v446
        %670 = vmatpush1.msra.mxu0 %v445
        %671 = vmatprep.subr.mxu0 %v450
        %672 = vmatpush1.msra.mxu0 %v449
        %673 = vmatprep.subr.mxu0 %v454
        %674 = vmatpush1.msra.mxu0 %v453
        %675 = vmatprep.subr.mxu0 %v458
        %676 = vmatpush1.msra.mxu0 %v457
        %677 = vmatprep.subr.mxu0 %v462
        %678 = vmatpush1.msra.mxu0 %v461
        %679 = vmatprep.subr.mxu0 %v466
        %680 = vmatpush1.msra.mxu0 %v465
        %681 = vmatprep.subr.mxu0 %v470
        %682 = vmatpush1.msra.mxu0 %v469
        %683 = vmatprep.subr.mxu0 %v474
        %684 = vmatpush1.msra.mxu0 %v473
        %685 = vmatprep.subr.mxu0 %v478
        %686 = vmatpush1.msra.mxu0 %v477
        %687 = vmatprep.subr.mxu0 %v482
        %688 = vmatpush1.msra.mxu0 %v481
        %689 = vmatprep.subr.mxu0 %v486
        %690 = vmatpush1.msra.mxu0 %v485
        %691 = vmatprep.mubr.f32.mxu0 %v555
        %692 = vmatmul.mubr.f32.gmra.mrb[0].mxu0 %v551
        %v693 = vpop.f32.mrb[0].mxu0
        %v694 = vadd.f32 %v623, %v693
        %v695 = vpop.f32.mrb[0].mxu0
        %v696 = vadd.f32 %v625, %v695
        %697 = vdwg.mxu0
        %698 = vmatprep.subr.mxu0 %v236
        %699 = vmatpush1.msra.mxu0 %v235
        %700 = vmatprep.subr.mxu0 %v240
        %701 = vmatpush1.msra.mxu0 %v239
        %702 = vmatprep.subr.mxu0 %v244
        %703 = vmatpush1.msra.mxu0 %v243
        %704 = vmatprep.subr.mxu0 %v248
        %705 = vmatpush1.msra.mxu0 %v247
        %706 = vmatprep.subr.mxu0 %v252
        %707 = vmatpush1.msra.mxu0 %v251
        %708 = vmatprep.subr.mxu0 %v256
        %709 = vmatpush1.msra.mxu0 %v255
        %710 = vmatprep.subr.mxu0 %v260
        %711 = vmatpush1.msra.mxu0 %v259
        %712 = vmatprep.subr.mxu0 %v264
        %713 = vmatpush1.msra.mxu0 %v263
        %714 = vmatprep.subr.mxu0 %v268
        %715 = vmatpush1.msra.mxu0 %v267
        %716 = vmatprep.subr.mxu0 %v272
        %717 = vmatpush1.msra.mxu0 %v271
        %718 = vmatprep.subr.mxu0 %v276
        %719 = vmatpush1.msra.mxu0 %v275
        %720 = vmatprep.subr.mxu0 %v280
        %721 = vmatpush1.msra.mxu0 %v279
        %722 = vmatprep.subr.mxu0 %v284
        %723 = vmatpush1.msra.mxu0 %v283
        %724 = vmatprep.subr.mxu0 %v288
        %725 = vmatpush1.msra.mxu0 %v287
        %726 = vmatprep.subr.mxu0 %v292
        %727 = vmatpush1.msra.mxu0 %v291
        %728 = vmatprep.subr.mxu0 %v296
        %729 = vmatpush1.msra.mxu0 %v295
        %730 = vmatprep.subr.mxu0 %v300
        %731 = vmatpush1.msra.mxu0 %v299
        %732 = vmatprep.subr.mxu0 %v304
        %733 = vmatpush1.msra.mxu0 %v303
        %734 = vmatprep.subr.mxu0 %v308
        %735 = vmatpush1.msra.mxu0 %v307
        %736 = vmatprep.subr.mxu0 %v312
        %737 = vmatpush1.msra.mxu0 %v311
        %738 = vmatprep.subr.mxu0 %v316
        %739 = vmatpush1.msra.mxu0 %v315
        %740 = vmatprep.subr.mxu0 %v320
        %741 = vmatpush1.msra.mxu0 %v319
        %742 = vmatprep.subr.mxu0 %v324
        %743 = vmatpush1.msra.mxu0 %v323
        %744 = vmatprep.subr.mxu0 %v328
        %745 = vmatpush1.msra.mxu0 %v327
        %746 = vmatprep.subr.mxu0 %v332
        %747 = vmatpush1.msra.mxu0 %v331
        %748 = vmatprep.subr.mxu0 %v336
        %749 = vmatpush1.msra.mxu0 %v335
        %750 = vmatprep.subr.mxu0 %v340
        %751 = vmatpush1.msra.mxu0 %v339
        %752 = vmatprep.subr.mxu0 %v344
        %753 = vmatpush1.msra.mxu0 %v343
        %754 = vmatprep.subr.mxu0 %v348
        %755 = vmatpush1.msra.mxu0 %v347
        %756 = vmatprep.subr.mxu0 %v352
        %757 = vmatpush1.msra.mxu0 %v351
        %758 = vmatprep.subr.mxu0 %v356
        %759 = vmatpush1.msra.mxu0 %v355
        %760 = vmatprep.subr.mxu0 %v360
        %761 = vmatpush1.msra.mxu0 %v359
        %762 = vmatprep.mubr.f32.mxu0 %v547
        %763 = vmatmul.mubr.f32.gmra.mrb[0].mxu0 %v543
        %v764 = vpop.f32.mrb[0].mxu0
        %v765 = vadd.f32 0.0, %v764
        %v766 = vpop.f32.mrb[0].mxu0
        %v767 = vadd.f32 0.0, %v766
        %768 = vdwg.mxu0
        %769 = vmatprep.subr.mxu0 %v364
        %770 = vmatpush1.msra.mxu0 %v363
        %771 = vmatprep.subr.mxu0 %v368
        %772 = vmatpush1.msra.mxu0 %v367
        %773 = vmatprep.subr.mxu0 %v372
        %774 = vmatpush1.msra.mxu0 %v371
        %775 = vmatprep.subr.mxu0 %v376
        %776 = vmatpush1.msra.mxu0 %v375
        %777 = vmatprep.subr.mxu0 %v380
        %778 = vmatpush1.msra.mxu0 %v379
        %779 = vmatprep.subr.mxu0 %v384
        %780 = vmatpush1.msra.mxu0 %v383
        %781 = vmatprep.subr.mxu0 %v388
        %782 = vmatpush1.msra.mxu0 %v387
        %783 = vmatprep.subr.mxu0 %v392
        %784 = vmatpush1.msra.mxu0 %v391
        %785 = vmatprep.subr.mxu0 %v396
        %786 = vmatpush1.msra.mxu0 %v395
        %787 = vmatprep.subr.mxu0 %v400
        %788 = vmatpush1.msra.mxu0 %v399
        %789 = vmatprep.subr.mxu0 %v404
        %790 = vmatpush1.msra.mxu0 %v403
        %791 = vmatprep.subr.mxu0 %v408
        %792 = vmatpush1.msra.mxu0 %v407
        %793 = vmatprep.subr.mxu0 %v412
        %794 = vmatpush1.msra.mxu0 %v411
        %795 = vmatprep.subr.mxu0 %v416
        %796 = vmatpush1.msra.mxu0 %v415
        %797 = vmatprep.subr.mxu0 %v420
        %798 = vmatpush1.msra.mxu0 %v419
        %799 = vmatprep.subr.mxu0 %v424
        %800 = vmatpush1.msra.mxu0 %v423
        %801 = vmatprep.subr.mxu0 %v428
        %802 = vmatpush1.msra.mxu0 %v427
        %803 = vmatprep.subr.mxu0 %v432
        %804 = vmatpush1.msra.mxu0 %v431
        %805 = vmatprep.subr.mxu0 %v436
        %806 = vmatpush1.msra.mxu0 %v435
        %807 = vmatprep.subr.mxu0 %v440
        %808 = vmatpush1.msra.mxu0 %v439
        %809 = vmatprep.subr.mxu0 %v444
        %810 = vmatpush1.msra.mxu0 %v443
        %811 = vmatprep.subr.mxu0 %v448
        %812 = vmatpush1.msra.mxu0 %v447
        %813 = vmatprep.subr.mxu0 %v452
        %814 = vmatpush1.msra.mxu0 %v451
        %815 = vmatprep.subr.mxu0 %v456
        %816 = vmatpush1.msra.mxu0 %v455
        %817 = vmatprep.subr.mxu0 %v460
        %818 = vmatpush1.msra.mxu0 %v459
        %819 = vmatprep.subr.mxu0 %v464
        %820 = vmatpush1.msra.mxu0 %v463
        %821 = vmatprep.subr.mxu0 %v468
        %822 = vmatpush1.msra.mxu0 %v467
        %823 = vmatprep.subr.mxu0 %v472
        %824 = vmatpush1.msra.mxu0 %v471
        %825 = vmatprep.subr.mxu0 %v476
        %826 = vmatpush1.msra.mxu0 %v475
        %827 = vmatprep.subr.mxu0 %v480
        %828 = vmatpush1.msra.mxu0 %v479
        %829 = vmatprep.subr.mxu0 %v484
        %830 = vmatpush1.msra.mxu0 %v483
        %831 = vmatprep.subr.mxu0 %v488
        %832 = vmatpush1.msra.mxu0 %v487
        %833 = vmatprep.mubr.f32.mxu0 %v555
        %834 = vmatmul.mubr.f32.gmra.mrb[0].mxu0 %v551
        %v835 = vpop.f32.mrb[0].mxu0
        %v836 = vadd.f32 %v765, %v835
        %v837 = vpop.f32.mrb[0].mxu0
        %v838 = vadd.f32 %v767, %v837
        %839 = vdwg.mxu0
        %v844 = vcombine.low %v694, %v696
        %v845 = vcombine.low %v836, %v838
        %v847 = vunpack.c.l.s4 1983009808
        %v848 = vunpack.c.0.s8 %v847
        %v849 = vlaneseq
        %v850 = vshrl.u32 %v849, 7
        %v851 = vsub.s32 %v848, %v850
        %v852 = vrot.slane %v844, %v851
        %v854 = vunpack.c.l.s4 1983009808
        %v855 = vunpack.c.0.s8 %v854
        %v856 = vlaneseq
        %v857 = vshrl.u32 %v856, 7
        %v858 = vsub.s32 %v855, %v857
        %v859 = vrot.slane %v845, %v858
        %v860 = vcombine.low %v852, %v859
        %862 = vst [vmem:[%s232] sm:$0xff] %v860
        %v863 = vld [vmem:[%s223] sm:$0x3]
        %s864 = sld [smem:[#allocation2 + $0x4]]
        %v865 = vstv %s864
        %v866 = vmul.f32 %v863, %v865
        %s867 = sld [smem:[#allocation2 + $0x5]]
        %v868 = vstv %s867
        %v869 = vmul.f32 %v863, %v868
        %s870 = sld [smem:[#allocation2 + $0x6]]
        %v871 = vstv %s870
        %v872 = vmul.f32 %v863, %v871
        %s873 = sld [smem:[#allocation2 + $0x7]]
        %v874 = vstv %s873
        %v875 = vmul.f32 %v863, %v874
        %v876 = vld [vmem:[%s502] sm:$0x3]
        %s877 = sld [smem:[#allocation2 + $0x24]]
        %v878 = vstv %s877
        %v879 = vmul.f32 %v876, %v878
        %v880 = vadd.f32 %v866, %v879
        %s881 = sld [smem:[#allocation2 + $0x25]]
        %v882 = vstv %s881
        %v883 = vmul.f32 %v876, %v882
        %v884 = vadd.f32 %v869, %v883
        %s885 = sld [smem:[#allocation2 + $0x26]]
        %v886 = vstv %s885
        %v887 = vmul.f32 %v876, %v886
        %v888 = vadd.f32 %v872, %v887
        %s889 = sld [smem:[#allocation2 + $0x27]]
        %v890 = vstv %s889
        %v891 = vmul.f32 %v876, %v890
        %v892 = vadd.f32 %v875, %v891
        %v893 = vld [vmem:[%s520] sm:$0x3]
        %s894 = sld [smem:[#allocation2 + $0x44]]
        %v895 = vstv %s894
        %v896 = vmul.f32 %v893, %v895
        %v897 = vadd.f32 %v880, %v896
        %s898 = sld [smem:[#allocation2 + $0x45]]
        %v899 = vstv %s898
        %v900 = vmul.f32 %v893, %v899
        %v901 = vadd.f32 %v884, %v900
        %s902 = sld [smem:[#allocation2 + $0x46]]
        %v903 = vstv %s902
        %v904 = vmul.f32 %v893, %v903
        %v905 = vadd.f32 %v888, %v904
        %s906 = sld [smem:[#allocation2 + $0x47]]
        %v907 = vstv %s906
        %v908 = vmul.f32 %v893, %v907
        %v909 = vadd.f32 %v892, %v908
        %v910 = vld [vmem:[%s538] sm:$0x3]
        %s911 = sld [smem:[#allocation2 + $0x64]]
        %v912 = vstv %s911
        %v913 = vmul.f32 %v910, %v912
        %v914 = vadd.f32 %v897, %v913
        %s915 = sld [smem:[#allocation2 + $0x65]]
        %v916 = vstv %s915
        %v917 = vmul.f32 %v910, %v916
        %v918 = vadd.f32 %v901, %v917
        %s919 = sld [smem:[#allocation2 + $0x66]]
        %v920 = vstv %s919
        %v921 = vmul.f32 %v910, %v920
        %v922 = vadd.f32 %v905, %v921
        %s923 = sld [smem:[#allocation2 + $0x67]]
        %v924 = vstv %s923
        %v925 = vmul.f32 %v910, %v924
        %v926 = vadd.f32 %v909, %v925
        %927 = vmatprep.subr.mxu0 %v234
        %928 = vmatpush1.msra.mxu0 %v233
        %929 = vmatprep.subr.mxu0 %v238
        %930 = vmatpush1.msra.mxu0 %v237
        %931 = vmatprep.subr.mxu0 %v242
        %932 = vmatpush1.msra.mxu0 %v241
        %933 = vmatprep.subr.mxu0 %v246
        %934 = vmatpush1.msra.mxu0 %v245
        %935 = vmatprep.subr.mxu0 %v250
        %936 = vmatpush1.msra.mxu0 %v249
        %937 = vmatprep.subr.mxu0 %v254
        %938 = vmatpush1.msra.mxu0 %v253
        %939 = vmatprep.subr.mxu0 %v258
        %940 = vmatpush1.msra.mxu0 %v257
        %941 = vmatprep.subr.mxu0 %v262
        %942 = vmatpush1.msra.mxu0 %v261
        %943 = vmatprep.subr.mxu0 %v266
        %944 = vmatpush1.msra.mxu0 %v265
        %945 = vmatprep.subr.mxu0 %v270
        %946 = vmatpush1.msra.mxu0 %v269
        %947 = vmatprep.subr.mxu0 %v274
        %948 = vmatpush1.msra.mxu0 %v273
        %949 = vmatprep.subr.mxu0 %v278
        %950 = vmatpush1.msra.mxu0 %v277
        %951 = vmatprep.subr.mxu0 %v282
        %952 = vmatpush1.msra.mxu0 %v281
        %953 = vmatprep.subr.mxu0 %v286
        %954 = vmatpush1.msra.mxu0 %v285
        %955 = vmatprep.subr.mxu0 %v290
        %956 = vmatpush1.msra.mxu0 %v289
        %957 = vmatprep.subr.mxu0 %v294
        %958 = vmatpush1.msra.mxu0 %v293
        %959 = vmatprep.subr.mxu0 %v298
        %960 = vmatpush1.msra.mxu0 %v297
        %961 = vmatprep.subr.mxu0 %v302
        %962 = vmatpush1.msra.mxu0 %v301
        %963 = vmatprep.subr.mxu0 %v306
        %964 = vmatpush1.msra.mxu0 %v305
        %965 = vmatprep.subr.mxu0 %v310
        %966 = vmatpush1.msra.mxu0 %v309
        %967 = vmatprep.subr.mxu0 %v314
        %968 = vmatpush1.msra.mxu0 %v313
        %969 = vmatprep.subr.mxu0 %v318
        %970 = vmatpush1.msra.mxu0 %v317
        %971 = vmatprep.subr.mxu0 %v322
        %972 = vmatpush1.msra.mxu0 %v321
        %973 = vmatprep.subr.mxu0 %v326
        %974 = vmatpush1.msra.mxu0 %v325
        %975 = vmatprep.subr.mxu0 %v330
        %976 = vmatpush1.msra.mxu0 %v329
        %977 = vmatprep.subr.mxu0 %v334
        %978 = vmatpush1.msra.mxu0 %v333
        %979 = vmatprep.subr.mxu0 %v338
        %980 = vmatpush1.msra.mxu0 %v337
        %981 = vmatprep.subr.mxu0 %v342
        %982 = vmatpush1.msra.mxu0 %v341
        %983 = vmatprep.subr.mxu0 %v346
        %984 = vmatpush1.msra.mxu0 %v345
        %985 = vmatprep.subr.mxu0 %v350
        %986 = vmatpush1.msra.mxu0 %v349
        %987 = vmatprep.subr.mxu0 %v354
        %988 = vmatpush1.msra.mxu0 %v353
        %989 = vmatprep.subr.mxu0 %v358
        %990 = vmatpush1.msra.mxu0 %v357
        %991 = vmatprep.mubr.f32.mxu0 %v918
        %992 = vmatmul.mubr.f32.gmra.mrb[0].mxu0 %v914
        %v993 = vpop.f32.mrb[0].mxu0
        %v994 = vadd.f32 0.0, %v993
        %v995 = vpop.f32.mrb[0].mxu0
        %v996 = vadd.f32 0.0, %v995
        %997 = vdwg.mxu0
        %998 = vmatprep.subr.mxu0 %v362
        %999 = vmatpush1.msra.mxu0 %v361
        %1000 = vmatprep.subr.mxu0 %v366
        %1001 = vmatpush1.msra.mxu0 %v365
        %1002 = vmatprep.subr.mxu0 %v370
        %1003 = vmatpush1.msra.mxu0 %v369
        %1004 = vmatprep.subr.mxu0 %v374
        %1005 = vmatpush1.msra.mxu0 %v373
        %1006 = vmatprep.subr.mxu0 %v378
        %1007 = vmatpush1.msra.mxu0 %v377
        %1008 = vmatprep.subr.mxu0 %v382
        %1009 = vmatpush1.msra.mxu0 %v381
        %1010 = vmatprep.subr.mxu0 %v386
        %1011 = vmatpush1.msra.mxu0 %v385
        %1012 = vmatprep.subr.mxu0 %v390
        %1013 = vmatpush1.msra.mxu0 %v389
        %1014 = vmatprep.subr.mxu0 %v394
        %1015 = vmatpush1.msra.mxu0 %v393
        %1016 = vmatprep.subr.mxu0 %v398
        %1017 = vmatpush1.msra.mxu0 %v397
        %1018 = vmatprep.subr.mxu0 %v402
        %1019 = vmatpush1.msra.mxu0 %v401
        %1020 = vmatprep.subr.mxu0 %v406
        %1021 = vmatpush1.msra.mxu0 %v405
        %1022 = vmatprep.subr.mxu0 %v410
        %1023 = vmatpush1.msra.mxu0 %v409
        %1024 = vmatprep.subr.mxu0 %v414
        %1025 = vmatpush1.msra.mxu0 %v413
        %1026 = vmatprep.subr.mxu0 %v418
        %1027 = vmatpush1.msra.mxu0 %v417
        %1028 = vmatprep.subr.mxu0 %v422
        %1029 = vmatpush1.msra.mxu0 %v421
        %1030 = vmatprep.subr.mxu0 %v426
        %1031 = vmatpush1.msra.mxu0 %v425
        %1032 = vmatprep.subr.mxu0 %v430
        %1033 = vmatpush1.msra.mxu0 %v429
        %1034 = vmatprep.subr.mxu0 %v434
        %1035 = vmatpush1.msra.mxu0 %v433
        %1036 = vmatprep.subr.mxu0 %v438
        %1037 = vmatpush1.msra.mxu0 %v437
        %1038 = vmatprep.subr.mxu0 %v442
        %1039 = vmatpush1.msra.mxu0 %v441
        %1040 = vmatprep.subr.mxu0 %v446
        %1041 = vmatpush1.msra.mxu0 %v445
        %1042 = vmatprep.subr.mxu0 %v450
        %1043 = vmatpush1.msra.mxu0 %v449
        %1044 = vmatprep.subr.mxu0 %v454
        %1045 = vmatpush1.msra.mxu0 %v453
        %1046 = vmatprep.subr.mxu0 %v458
        %1047 = vmatpush1.msra.mxu0 %v457
        %1048 = vmatprep.subr.mxu0 %v462
        %1049 = vmatpush1.msra.mxu0 %v461
        %1050 = vmatprep.subr.mxu0 %v466
        %1051 = vmatpush1.msra.mxu0 %v465
        %1052 = vmatprep.subr.mxu0 %v470
        %1053 = vmatpush1.msra.mxu0 %v469
        %1054 = vmatprep.subr.mxu0 %v474
        %1055 = vmatpush1.msra.mxu0 %v473
        %1056 = vmatprep.subr.mxu0 %v478
        %1057 = vmatpush1.msra.mxu0 %v477
        %1058 = vmatprep.subr.mxu0 %v482
        %1059 = vmatpush1.msra.mxu0 %v481
        %1060 = vmatprep.subr.mxu0 %v486
        %1061 = vmatpush1.msra.mxu0 %v485
        %1062 = vmatprep.mubr.f32.mxu0 %v926
        %1063 = vmatmul.mubr.f32.gmra.mrb[0].mxu0 %v922
        %v1064 = vpop.f32.mrb[0].mxu0
        %v1065 = vadd.f32 %v994, %v1064
        %v1066 = vpop.f32.mrb[0].mxu0
        %v1067 = vadd.f32 %v996, %v1066
        %1068 = vdwg.mxu0
        %1069 = vmatprep.subr.mxu0 %v236
        %1070 = vmatpush1.msra.mxu0 %v235
        %1071 = vmatprep.subr.mxu0 %v240
        %1072 = vmatpush1.msra.mxu0 %v239
        %1073 = vmatprep.subr.mxu0 %v244
        %1074 = vmatpush1.msra.mxu0 %v243
        %1075 = vmatprep.subr.mxu0 %v248
        %1076 = vmatpush1.msra.mxu0 %v247
        %1077 = vmatprep.subr.mxu0 %v252
        %1078 = vmatpush1.msra.mxu0 %v251
        %1079 = vmatprep.subr.mxu0 %v256
        %1080 = vmatpush1.msra.mxu0 %v255
        %1081 = vmatprep.subr.mxu0 %v260
        %1082 = vmatpush1.msra.mxu0 %v259
        %1083 = vmatprep.subr.mxu0 %v264
        %1084 = vmatpush1.msra.mxu0 %v263
        %1085 = vmatprep.subr.mxu0 %v268
        %1086 = vmatpush1.msra.mxu0 %v267
        %1087 = vmatprep.subr.mxu0 %v272
        %1088 = vmatpush1.msra.mxu0 %v271
        %1089 = vmatprep.subr.mxu0 %v276
        %1090 = vmatpush1.msra.mxu0 %v275
        %1091 = vmatprep.subr.mxu0 %v280
        %1092 = vmatpush1.msra.mxu0 %v279
        %1093 = vmatprep.subr.mxu0 %v284
        %1094 = vmatpush1.msra.mxu0 %v283
        %1095 = vmatprep.subr.mxu0 %v288
        %1096 = vmatpush1.msra.mxu0 %v287
        %1097 = vmatprep.subr.mxu0 %v292
        %1098 = vmatpush1.msra.mxu0 %v291
        %1099 = vmatprep.subr.mxu0 %v296
        %1100 = vmatpush1.msra.mxu0 %v295
        %1101 = vmatprep.subr.mxu0 %v300
        %1102 = vmatpush1.msra.mxu0 %v299
        %1103 = vmatprep.subr.mxu0 %v304
        %1104 = vmatpush1.msra.mxu0 %v303
        %1105 = vmatprep.subr.mxu0 %v308
        %1106 = vmatpush1.msra.mxu0 %v307
        %1107 = vmatprep.subr.mxu0 %v312
        %1108 = vmatpush1.msra.mxu0 %v311
        %1109 = vmatprep.subr.mxu0 %v316
        %1110 = vmatpush1.msra.mxu0 %v315
        %1111 = vmatprep.subr.mxu0 %v320
        %1112 = vmatpush1.msra.mxu0 %v319
        %1113 = vmatprep.subr.mxu0 %v324
        %1114 = vmatpush1.msra.mxu0 %v323
        %1115 = vmatprep.subr.mxu0 %v328
        %1116 = vmatpush1.msra.mxu0 %v327
        %1117 = vmatprep.subr.mxu0 %v332
        %1118 = vmatpush1.msra.mxu0 %v331
        %1119 = vmatprep.subr.mxu0 %v336
        %1120 = vmatpush1.msra.mxu0 %v335
        %1121 = vmatprep.subr.mxu0 %v340
        %1122 = vmatpush1.msra.mxu0 %v339
        %1123 = vmatprep.subr.mxu0 %v344
        %1124 = vmatpush1.msra.mxu0 %v343
        %1125 = vmatprep.subr.mxu0 %v348
        %1126 = vmatpush1.msra.mxu0 %v347
        %1127 = vmatprep.subr.mxu0 %v352
        %1128 = vmatpush1.msra.mxu0 %v351
        %1129 = vmatprep.subr.mxu0 %v356
        %1130 = vmatpush1.msra.mxu0 %v355
        %1131 = vmatprep.subr.mxu0 %v360
        %1132 = vmatpush1.msra.mxu0 %v359
        %1133 = vmatprep.mubr.f32.mxu0 %v918
        %1134 = vmatmul.mubr.f32.gmra.mrb[0].mxu0 %v914
        %v1135 = vpop.f32.mrb[0].mxu0
        %v1136 = vadd.f32 0.0, %v1135
        %v1137 = vpop.f32.mrb[0].mxu0
        %v1138 = vadd.f32 0.0, %v1137
        %1139 = vdwg.mxu0
        %1140 = vmatprep.subr.mxu0 %v364
        %1141 = vmatpush1.msra.mxu0 %v363
        %1142 = vmatprep.subr.mxu0 %v368
        %1143 = vmatpush1.msra.mxu0 %v367
        %1144 = vmatprep.subr.mxu0 %v372
        %1145 = vmatpush1.msra.mxu0 %v371
        %1146 = vmatprep.subr.mxu0 %v376
        %1147 = vmatpush1.msra.mxu0 %v375
        %1148 = vmatprep.subr.mxu0 %v380
        %1149 = vmatpush1.msra.mxu0 %v379
        %1150 = vmatprep.subr.mxu0 %v384
        %1151 = vmatpush1.msra.mxu0 %v383
        %1152 = vmatprep.subr.mxu0 %v388
        %1153 = vmatpush1.msra.mxu0 %v387
        %1154 = vmatprep.subr.mxu0 %v392
        %1155 = vmatpush1.msra.mxu0 %v391
        %1156 = vmatprep.subr.mxu0 %v396
        %1157 = vmatpush1.msra.mxu0 %v395
        %1158 = vmatprep.subr.mxu0 %v400
        %1159 = vmatpush1.msra.mxu0 %v399
        %1160 = vmatprep.subr.mxu0 %v404
        %1161 = vmatpush1.msra.mxu0 %v403
        %1162 = vmatprep.subr.mxu0 %v408
        %1163 = vmatpush1.msra.mxu0 %v407
        %1164 = vmatprep.subr.mxu0 %v412
        %1165 = vmatpush1.msra.mxu0 %v411
        %1166 = vmatprep.subr.mxu0 %v416
        %1167 = vmatpush1.msra.mxu0 %v415
        %1168 = vmatprep.subr.mxu0 %v420
        %1169 = vmatpush1.msra.mxu0 %v419
        %1170 = vmatprep.subr.mxu0 %v424
        %1171 = vmatpush1.msra.mxu0 %v423
        %1172 = vmatprep.subr.mxu0 %v428
        %1173 = vmatpush1.msra.mxu0 %v427
        %1174 = vmatprep.subr.mxu0 %v432
        %1175 = vmatpush1.msra.mxu0 %v431
        %1176 = vmatprep.subr.mxu0 %v436
        %1177 = vmatpush1.msra.mxu0 %v435
        %1178 = vmatprep.subr.mxu0 %v440
        %1179 = vmatpush1.msra.mxu0 %v439
        %1180 = vmatprep.subr.mxu0 %v444
        %1181 = vmatpush1.msra.mxu0 %v443
        %1182 = vmatprep.subr.mxu0 %v448
        %1183 = vmatpush1.msra.mxu0 %v447
        %1184 = vmatprep.subr.mxu0 %v452
        %1185 = vmatpush1.msra.mxu0 %v451
        %1186 = vmatprep.subr.mxu0 %v456
        %1187 = vmatpush1.msra.mxu0 %v455
        %1188 = vmatprep.subr.mxu0 %v460
        %1189 = vmatpush1.msra.mxu0 %v459
        %1190 = vmatprep.subr.mxu0 %v464
        %1191 = vmatpush1.msra.mxu0 %v463
        %1192 = vmatprep.subr.mxu0 %v468
        %1193 = vmatpush1.msra.mxu0 %v467
        %1194 = vmatprep.subr.mxu0 %v472
        %1195 = vmatpush1.msra.mxu0 %v471
        %1196 = vmatprep.subr.mxu0 %v476
        %1197 = vmatpush1.msra.mxu0 %v475
        %1198 = vmatprep.subr.mxu0 %v480
        %1199 = vmatpush1.msra.mxu0 %v479
        %1200 = vmatprep.subr.mxu0 %v484
        %1201 = vmatpush1.msra.mxu0 %v483
        %1202 = vmatprep.subr.mxu0 %v488
        %1203 = vmatpush1.msra.mxu0 %v487
        %1204 = vmatprep.mubr.f32.mxu0 %v926
        %1205 = vmatmul.mubr.f32.gmra.mrb[0].mxu0 %v922
        %v1206 = vpop.f32.mrb[0].mxu0
        %v1207 = vadd.f32 %v1136, %v1206
        %v1208 = vpop.f32.mrb[0].mxu0
        %v1209 = vadd.f32 %v1138, %v1208
        %1210 = vdwg.mxu0
        %v1215 = vcombine.low %v1065, %v1067
        %v1216 = vcombine.low %v1207, %v1209
        %v1218 = vunpack.c.l.s4 1983009808
        %v1219 = vunpack.c.0.s8 %v1218
        %v1220 = vlaneseq
        %v1221 = vshrl.u32 %v1220, 7
        %v1222 = vsub.s32 %v1219, %v1221
        %v1223 = vrot.slane %v1215, %v1222
        %v1225 = vunpack.c.l.s4 1983009808
        %v1226 = vunpack.c.0.s8 %v1225
        %v1227 = vlaneseq
        %v1228 = vshrl.u32 %v1227, 7
        %v1229 = vsub.s32 %v1226, %v1228
        %v1230 = vrot.slane %v1216, %v1229
        %v1231 = vcombine.low %v1223, %v1230
        %s1233 = scalar_lea.vmem %s232, 8
        %1234 = vst [vmem:[%s1233] sm:$0xff] %v1231
        %v1235 = vld [vmem:[%s223] sm:$0x3]
        %s1236 = sld [smem:[#allocation2 + $0x8]]
        %v1237 = vstv %s1236
        %v1238 = vmul.f32 %v1235, %v1237
        %s1239 = sld [smem:[#allocation2 + $0x9]]
        %v1240 = vstv %s1239
        %v1241 = vmul.f32 %v1235, %v1240
        %s1242 = sld [smem:[#allocation2 + $0xa]]
        %v1243 = vstv %s1242
        %v1244 = vmul.f32 %v1235, %v1243
        %s1245 = sld [smem:[#allocation2 + $0xb]]
        %v1246 = vstv %s1245
        %v1247 = vmul.f32 %v1235, %v1246
        %v1248 = vld [vmem:[%s502] sm:$0x3]
        %s1249 = sld [smem:[#allocation2 + $0x28]]
        %v1250 = vstv %s1249
        %v1251 = vmul.f32 %v1248, %v1250
        %v1252 = vadd.f32 %v1238, %v1251
        %s1253 = sld [smem:[#allocation2 + $0x29]]
        %v1254 = vstv %s1253
        %v1255 = vmul.f32 %v1248, %v1254
        %v1256 = vadd.f32 %v1241, %v1255
        %s1257 = sld [smem:[#allocation2 + $0x2a]]
        %v1258 = vstv %s1257
        %v1259 = vmul.f32 %v1248, %v1258
        %v1260 = vadd.f32 %v1244, %v1259
        %s1261 = sld [smem:[#allocation2 + $0x2b]]
        %v1262 = vstv %s1261
        %v1263 = vmul.f32 %v1248, %v1262
        %v1264 = vadd.f32 %v1247, %v1263
        %v1265 = vld [vmem:[%s520] sm:$0x3]
        %s1266 = sld [smem:[#allocation2 + $0x48]]
        %v1267 = vstv %s1266
        %v1268 = vmul.f32 %v1265, %v1267
        %v1269 = vadd.f32 %v1252, %v1268
        %s1270 = sld [smem:[#allocation2 + $0x49]]
        %v1271 = vstv %s1270
        %v1272 = vmul.f32 %v1265, %v1271
        %v1273 = vadd.f32 %v1256, %v1272
        %s1274 = sld [smem:[#allocation2 + $0x4a]]
        %v1275 = vstv %s1274
        %v1276 = vmul.f32 %v1265, %v1275
        %v1277 = vadd.f32 %v1260, %v1276
        %s1278 = sld [smem:[#allocation2 + $0x4b]]
        %v1279 = vstv %s1278
        %v1280 = vmul.f32 %v1265, %v1279
        %v1281 = vadd.f32 %v1264, %v1280
        %v1282 = vld [vmem:[%s538] sm:$0x3]
        %s1283 = sld [smem:[#allocation2 + $0x68]]
        %v1284 = vstv %s1283
        %v1285 = vmul.f32 %v1282, %v1284
        %v1286 = vadd.f32 %v1269, %v1285
        %s1287 = sld [smem:[#allocation2 + $0x69]]
        %v1288 = vstv %s1287
        %v1289 = vmul.f32 %v1282, %v1288
        %v1290 = vadd.f32 %v1273, %v1289
        %s1291 = sld [smem:[#allocation2 + $0x6a]]
        %v1292 = vstv %s1291
        %v1293 = vmul.f32 %v1282, %v1292
        %v1294 = vadd.f32 %v1277, %v1293
        %s1295 = sld [smem:[#allocation2 + $0x6b]]
        %v1296 = vstv %s1295
        %v1297 = vmul.f32 %v1282, %v1296
        %v1298 = vadd.f32 %v1281, %v1297
        %1299 = vmatprep.subr.mxu0 %v234
        %1300 = vmatpush1.msra.mxu0 %v233
        %1301 = vmatprep.subr.mxu0 %v238
        %1302 = vmatpush1.msra.mxu0 %v237
        %1303 = vmatprep.subr.mxu0 %v242
        %1304 = vmatpush1.msra.mxu0 %v241
        %1305 = vmatprep.subr.mxu0 %v246
        %1306 = vmatpush1.msra.mxu0 %v245
        %1307 = vmatprep.subr.mxu0 %v250
        %1308 = vmatpush1.msra.mxu0 %v249
        %1309 = vmatprep.subr.mxu0 %v254
        %1310 = vmatpush1.msra.mxu0 %v253
        %1311 = vmatprep.subr.mxu0 %v258
        %1312 = vmatpush1.msra.mxu0 %v257
        %1313 = vmatprep.subr.mxu0 %v262
        %1314 = vmatpush1.msra.mxu0 %v261
        %1315 = vmatprep.subr.mxu0 %v266
        %1316 = vmatpush1.msra.mxu0 %v265
        %1317 = vmatprep.subr.mxu0 %v270
        %1318 = vmatpush1.msra.mxu0 %v269
        %1319 = vmatprep.subr.mxu0 %v274
        %1320 = vmatpush1.msra.mxu0 %v273
        %1321 = vmatprep.subr.mxu0 %v278
        %1322 = vmatpush1.msra.mxu0 %v277
        %1323 = vmatprep.subr.mxu0 %v282
        %1324 = vmatpush1.msra.mxu0 %v281
        %1325 = vmatprep.subr.mxu0 %v286
        %1326 = vmatpush1.msra.mxu0 %v285
        %1327 = vmatprep.subr.mxu0 %v290
        %1328 = vmatpush1.msra.mxu0 %v289
        %1329 = vmatprep.subr.mxu0 %v294
        %1330 = vmatpush1.msra.mxu0 %v293
        %1331 = vmatprep.subr.mxu0 %v298
        %1332 = vmatpush1.msra.mxu0 %v297
        %1333 = vmatprep.subr.mxu0 %v302
        %1334 = vmatpush1.msra.mxu0 %v301
        %1335 = vmatprep.subr.mxu0 %v306
        %1336 = vmatpush1.msra.mxu0 %v305
        %1337 = vmatprep.subr.mxu0 %v310
        %1338 = vmatpush1.msra.mxu0 %v309
        %1339 = vmatprep.subr.mxu0 %v314
        %1340 = vmatpush1.msra.mxu0 %v313
        %1341 = vmatprep.subr.mxu0 %v318
        %1342 = vmatpush1.msra.mxu0 %v317
        %1343 = vmatprep.subr.mxu0 %v322
        %1344 = vmatpush1.msra.mxu0 %v321
        %1345 = vmatprep.subr.mxu0 %v326
        %1346 = vmatpush1.msra.mxu0 %v325
        %1347 = vmatprep.subr.mxu0 %v330
        %1348 = vmatpush1.msra.mxu0 %v329
        %1349 = vmatprep.subr.mxu0 %v334
        %1350 = vmatpush1.msra.mxu0 %v333
        %1351 = vmatprep.subr.mxu0 %v338
        %1352 = vmatpush1.msra.mxu0 %v337
        %1353 = vmatprep.subr.mxu0 %v342
        %1354 = vmatpush1.msra.mxu0 %v341
        %1355 = vmatprep.subr.mxu0 %v346
        %1356 = vmatpush1.msra.mxu0 %v345
        %1357 = vmatprep.subr.mxu0 %v350
        %1358 = vmatpush1.msra.mxu0 %v349
        %1359 = vmatprep.subr.mxu0 %v354
        %1360 = vmatpush1.msra.mxu0 %v353
        %1361 = vmatprep.subr.mxu0 %v358
        %1362 = vmatpush1.msra.mxu0 %v357
        %1363 = vmatprep.mubr.f32.mxu0 %v1290
        %1364 = vmatmul.mubr.f32.gmra.mrb[0].mxu0 %v1286
        %v1365 = vpop.f32.mrb[0].mxu0
        %v1366 = vadd.f32 0.0, %v1365
        %v1367 = vpop.f32.mrb[0].mxu0
        %v1368 = vadd.f32 0.0, %v1367
        %1369 = vdwg.mxu0
        %1370 = vmatprep.subr.mxu0 %v362
        %1371 = vmatpush1.msra.mxu0 %v361
        %1372 = vmatprep.subr.mxu0 %v366
        %1373 = vmatpush1.msra.mxu0 %v365
        %1374 = vmatprep.subr.mxu0 %v370
        %1375 = vmatpush1.msra.mxu0 %v369
        %1376 = vmatprep.subr.mxu0 %v374
        %1377 = vmatpush1.msra.mxu0 %v373
        %1378 = vmatprep.subr.mxu0 %v378
        %1379 = vmatpush1.msra.mxu0 %v377
        %1380 = vmatprep.subr.mxu0 %v382
        %1381 = vmatpush1.msra.mxu0 %v381
        %1382 = vmatprep.subr.mxu0 %v386
        %1383 = vmatpush1.msra.mxu0 %v385
        %1384 = vmatprep.subr.mxu0 %v390
        %1385 = vmatpush1.msra.mxu0 %v389
        %1386 = vmatprep.subr.mxu0 %v394
        %1387 = vmatpush1.msra.mxu0 %v393
        %1388 = vmatprep.subr.mxu0 %v398
        %1389 = vmatpush1.msra.mxu0 %v397
        %1390 = vmatprep.subr.mxu0 %v402
        %1391 = vmatpush1.msra.mxu0 %v401
        %1392 = vmatprep.subr.mxu0 %v406
        %1393 = vmatpush1.msra.mxu0 %v405
        %1394 = vmatprep.subr.mxu0 %v410
        %1395 = vmatpush1.msra.mxu0 %v409
        %1396 = vmatprep.subr.mxu0 %v414
        %1397 = vmatpush1.msra.mxu0 %v413
        %1398 = vmatprep.subr.mxu0 %v418
        %1399 = vmatpush1.msra.mxu0 %v417
        %1400 = vmatprep.subr.mxu0 %v422
        %1401 = vmatpush1.msra.mxu0 %v421
        %1402 = vmatprep.subr.mxu0 %v426
        %1403 = vmatpush1.msra.mxu0 %v425
        %1404 = vmatprep.subr.mxu0 %v430
        %1405 = vmatpush1.msra.mxu0 %v429
        %1406 = vmatprep.subr.mxu0 %v434
        %1407 = vmatpush1.msra.mxu0 %v433
        %1408 = vmatprep.subr.mxu0 %v438
        %1409 = vmatpush1.msra.mxu0 %v437
        %1410 = vmatprep.subr.mxu0 %v442
        %1411 = vmatpush1.msra.mxu0 %v441
        %1412 = vmatprep.subr.mxu0 %v446
        %1413 = vmatpush1.msra.mxu0 %v445
        %1414 = vmatprep.subr.mxu0 %v450
        %1415 = vmatpush1.msra.mxu0 %v449
        %1416 = vmatprep.subr.mxu0 %v454
        %1417 = vmatpush1.msra.mxu0 %v453
        %1418 = vmatprep.subr.mxu0 %v458
        %1419 = vmatpush1.msra.mxu0 %v457
        %1420 = vmatprep.subr.mxu0 %v462
        %1421 = vmatpush1.msra.mxu0 %v461
        %1422 = vmatprep.subr.mxu0 %v466
        %1423 = vmatpush1.msra.mxu0 %v465
        %1424 = vmatprep.subr.mxu0 %v470
        %1425 = vmatpush1.msra.mxu0 %v469
        %1426 = vmatprep.subr.mxu0 %v474
        %1427 = vmatpush1.msra.mxu0 %v473
        %1428 = vmatprep.subr.mxu0 %v478
        %1429 = vmatpush1.msra.mxu0 %v477
        %1430 = vmatprep.subr.mxu0 %v482
        %1431 = vmatpush1.msra.mxu0 %v481
        %1432 = vmatprep.subr.mxu0 %v486
        %1433 = vmatpush1.msra.mxu0 %v485
        %1434 = vmatprep.mubr.f32.mxu0 %v1298
        %1435 = vmatmul.mubr.f32.gmra.mrb[0].mxu0 %v1294
        %v1436 = vpop.f32.mrb[0].mxu0
        %v1437 = vadd.f32 %v1366, %v1436
        %v1438 = vpop.f32.mrb[0].mxu0
        %v1439 = vadd.f32 %v1368, %v1438
        %1440 = vdwg.mxu0
        %1441 = vmatprep.subr.mxu0 %v236
        %1442 = vmatpush1.msra.mxu0 %v235
        %1443 = vmatprep.subr.mxu0 %v240
        %1444 = vmatpush1.msra.mxu0 %v239
        %1445 = vmatprep.subr.mxu0 %v244
        %1446 = vmatpush1.msra.mxu0 %v243
        %1447 = vmatprep.subr.mxu0 %v248
        %1448 = vmatpush1.msra.mxu0 %v247
        %1449 = vmatprep.subr.mxu0 %v252
        %1450 = vmatpush1.msra.mxu0 %v251
        %1451 = vmatprep.subr.mxu0 %v256
        %1452 = vmatpush1.msra.mxu0 %v255
        %1453 = vmatprep.subr.mxu0 %v260
        %1454 = vmatpush1.msra.mxu0 %v259
        %1455 = vmatprep.subr.mxu0 %v264
        %1456 = vmatpush1.msra.mxu0 %v263
        %1457 = vmatprep.subr.mxu0 %v268
        %1458 = vmatpush1.msra.mxu0 %v267
        %1459 = vmatprep.subr.mxu0 %v272
        %1460 = vmatpush1.msra.mxu0 %v271
        %1461 = vmatprep.subr.mxu0 %v276
        %1462 = vmatpush1.msra.mxu0 %v275
        %1463 = vmatprep.subr.mxu0 %v280
        %1464 = vmatpush1.msra.mxu0 %v279
        %1465 = vmatprep.subr.mxu0 %v284
        %1466 = vmatpush1.msra.mxu0 %v283
        %1467 = vmatprep.subr.mxu0 %v288
        %1468 = vmatpush1.msra.mxu0 %v287
        %1469 = vmatprep.subr.mxu0 %v292
        %1470 = vmatpush1.msra.mxu0 %v291
        %1471 = vmatprep.subr.mxu0 %v296
        %1472 = vmatpush1.msra.mxu0 %v295
        %1473 = vmatprep.subr.mxu0 %v300
        %1474 = vmatpush1.msra.mxu0 %v299
        %1475 = vmatprep.subr.mxu0 %v304
        %1476 = vmatpush1.msra.mxu0 %v303
        %1477 = vmatprep.subr.mxu0 %v308
        %1478 = vmatpush1.msra.mxu0 %v307
        %1479 = vmatprep.subr.mxu0 %v312
        %1480 = vmatpush1.msra.mxu0 %v311
        %1481 = vmatprep.subr.mxu0 %v316
        %1482 = vmatpush1.msra.mxu0 %v315
        %1483 = vmatprep.subr.mxu0 %v320
        %1484 = vmatpush1.msra.mxu0 %v319
        %1485 = vmatprep.subr.mxu0 %v324
        %1486 = vmatpush1.msra.mxu0 %v323
        %1487 = vmatprep.subr.mxu0 %v328
        %1488 = vmatpush1.msra.mxu0 %v327
        %1489 = vmatprep.subr.mxu0 %v332
        %1490 = vmatpush1.msra.mxu0 %v331
        %1491 = vmatprep.subr.mxu0 %v336
        %1492 = vmatpush1.msra.mxu0 %v335
        %1493 = vmatprep.subr.mxu0 %v340
        %1494 = vmatpush1.msra.mxu0 %v339
        %1495 = vmatprep.subr.mxu0 %v344
        %1496 = vmatpush1.msra.mxu0 %v343
        %1497 = vmatprep.subr.mxu0 %v348
        %1498 = vmatpush1.msra.mxu0 %v347
        %1499 = vmatprep.subr.mxu0 %v352
        %1500 = vmatpush1.msra.mxu0 %v351
        %1501 = vmatprep.subr.mxu0 %v356
        %1502 = vmatpush1.msra.mxu0 %v355
        %1503 = vmatprep.subr.mxu0 %v360
        %1504 = vmatpush1.msra.mxu0 %v359
        %1505 = vmatprep.mubr.f32.mxu0 %v1290
        %1506 = vmatmul.mubr.f32.gmra.mrb[0].mxu0 %v1286
        %v1507 = vpop.f32.mrb[0].mxu0
        %v1508 = vadd.f32 0.0, %v1507
        %v1509 = vpop.f32.mrb[0].mxu0
        %v1510 = vadd.f32 0.0, %v1509
        %1511 = vdwg.mxu0
        %1512 = vmatprep.subr.mxu0 %v364
        %1513 = vmatpush1.msra.mxu0 %v363
        %1514 = vmatprep.subr.mxu0 %v368
        %1515 = vmatpush1.msra.mxu0 %v367
        %1516 = vmatprep.subr.mxu0 %v372
        %1517 = vmatpush1.msra.mxu0 %v371
        %1518 = vmatprep.subr.mxu0 %v376
        %1519 = vmatpush1.msra.mxu0 %v375
        %1520 = vmatprep.subr.mxu0 %v380
        %1521 = vmatpush1.msra.mxu0 %v379
        %1522 = vmatprep.subr.mxu0 %v384
        %1523 = vmatpush1.msra.mxu0 %v383
        %1524 = vmatprep.subr.mxu0 %v388
        %1525 = vmatpush1.msra.mxu0 %v387
        %1526 = vmatprep.subr.mxu0 %v392
        %1527 = vmatpush1.msra.mxu0 %v391
        %1528 = vmatprep.subr.mxu0 %v396
        %1529 = vmatpush1.msra.mxu0 %v395
        %1530 = vmatprep.subr.mxu0 %v400
        %1531 = vmatpush1.msra.mxu0 %v399
        %1532 = vmatprep.subr.mxu0 %v404
        %1533 = vmatpush1.msra.mxu0 %v403
        %1534 = vmatprep.subr.mxu0 %v408
        %1535 = vmatpush1.msra.mxu0 %v407
        %1536 = vmatprep.subr.mxu0 %v412
        %1537 = vmatpush1.msra.mxu0 %v411
        %1538 = vmatprep.subr.mxu0 %v416
        %1539 = vmatpush1.msra.mxu0 %v415
        %1540 = vmatprep.subr.mxu0 %v420
        %1541 = vmatpush1.msra.mxu0 %v419
        %1542 = vmatprep.subr.mxu0 %v424
        %1543 = vmatpush1.msra.mxu0 %v423
        %1544 = vmatprep.subr.mxu0 %v428
        %1545 = vmatpush1.msra.mxu0 %v427
        %1546 = vmatprep.subr.mxu0 %v432
        %1547 = vmatpush1.msra.mxu0 %v431
        %1548 = vmatprep.subr.mxu0 %v436
        %1549 = vmatpush1.msra.mxu0 %v435
        %1550 = vmatprep.subr.mxu0 %v440
        %1551 = vmatpush1.msra.mxu0 %v439
        %1552 = vmatprep.subr.mxu0 %v444
        %1553 = vmatpush1.msra.mxu0 %v443
        %1554 = vmatprep.subr.mxu0 %v448
        %1555 = vmatpush1.msra.mxu0 %v447
        %1556 = vmatprep.subr.mxu0 %v452
        %1557 = vmatpush1.msra.mxu0 %v451
        %1558 = vmatprep.subr.mxu0 %v456
        %1559 = vmatpush1.msra.mxu0 %v455
        %1560 = vmatprep.subr.mxu0 %v460
        %1561 = vmatpush1.msra.mxu0 %v459
        %1562 = vmatprep.subr.mxu0 %v464
        %1563 = vmatpush1.msra.mxu0 %v463
        %1564 = vmatprep.subr.mxu0 %v468
        %1565 = vmatpush1.msra.mxu0 %v467
        %1566 = vmatprep.subr.mxu0 %v472
        %1567 = vmatpush1.msra.mxu0 %v471
        %1568 = vmatprep.subr.mxu0 %v476
        %1569 = vmatpush1.msra.mxu0 %v475
        %1570 = vmatprep.subr.mxu0 %v480
        %1571 = vmatpush1.msra.mxu0 %v479
        %1572 = vmatprep.subr.mxu0 %v484
        %1573 = vmatpush1.msra.mxu0 %v483
        %1574 = vmatprep.subr.mxu0 %v488
        %1575 = vmatpush1.msra.mxu0 %v487
        %1576 = vmatprep.mubr.f32.mxu0 %v1298
        %1577 = vmatmul.mubr.f32.gmra.mrb[0].mxu0 %v1294
        %v1578 = vpop.f32.mrb[0].mxu0
        %v1579 = vadd.f32 %v1508, %v1578
        %v1580 = vpop.f32.mrb[0].mxu0
        %v1581 = vadd.f32 %v1510, %v1580
        %1582 = vdwg.mxu0
        %v1587 = vcombine.low %v1437, %v1439
        %v1588 = vcombine.low %v1579, %v1581
        %v1590 = vunpack.c.l.s4 1983009808
        %v1591 = vunpack.c.0.s8 %v1590
        %v1592 = vlaneseq
        %v1593 = vshrl.u32 %v1592, 7
        %v1594 = vsub.s32 %v1591, %v1593
        %v1595 = vrot.slane %v1587, %v1594
        %v1597 = vunpack.c.l.s4 1983009808
        %v1598 = vunpack.c.0.s8 %v1597
        %v1599 = vlaneseq
        %v1600 = vshrl.u32 %v1599, 7
        %v1601 = vsub.s32 %v1598, %v1600
        %v1602 = vrot.slane %v1588, %v1601
        %v1603 = vcombine.low %v1595, %v1602
        %s1605 = scalar_lea.vmem %s232, 16
        %1606 = vst [vmem:[%s1605] sm:$0xff] %v1603
        %v1607 = vld [vmem:[%s223] sm:$0x3]
        %s1608 = sld [smem:[#allocation2 + $0xc]]
        %v1609 = vstv %s1608
        %v1610 = vmul.f32 %v1607, %v1609
        %s1611 = sld [smem:[#allocation2 + $0xd]]
        %v1612 = vstv %s1611
        %v1613 = vmul.f32 %v1607, %v1612
        %s1614 = sld [smem:[#allocation2 + $0xe]]
        %v1615 = vstv %s1614
        %v1616 = vmul.f32 %v1607, %v1615
        %s1617 = sld [smem:[#allocation2 + $0xf]]
        %v1618 = vstv %s1617
        %v1619 = vmul.f32 %v1607, %v1618
        %v1620 = vld [vmem:[%s502] sm:$0x3]
        %s1621 = sld [smem:[#allocation2 + $0x2c]]
        %v1622 = vstv %s1621
        %v1623 = vmul.f32 %v1620, %v1622
        %v1624 = vadd.f32 %v1610, %v1623
        %s1625 = sld [smem:[#allocation2 + $0x2d]]
        %v1626 = vstv %s1625
        %v1627 = vmul.f32 %v1620, %v1626
        %v1628 = vadd.f32 %v1613, %v1627
        %s1629 = sld [smem:[#allocation2 + $0x2e]]
        %v1630 = vstv %s1629
        %v1631 = vmul.f32 %v1620, %v1630
        %v1632 = vadd.f32 %v1616, %v1631
        %s1633 = sld [smem:[#allocation2 + $0x2f]]
        %v1634 = vstv %s1633
        %v1635 = vmul.f32 %v1620, %v1634
        %v1636 = vadd.f32 %v1619, %v1635
        %v1637 = vld [vmem:[%s520] sm:$0x3]
        %s1638 = sld [smem:[#allocation2 + $0x4c]]
        %v1639 = vstv %s1638
        %v1640 = vmul.f32 %v1637, %v1639
        %v1641 = vadd.f32 %v1624, %v1640
        %s1642 = sld [smem:[#allocation2 + $0x4d]]
        %v1643 = vstv %s1642
        %v1644 = vmul.f32 %v1637, %v1643
        %v1645 = vadd.f32 %v1628, %v1644
        %s1646 = sld [smem:[#allocation2 + $0x4e]]
        %v1647 = vstv %s1646
        %v1648 = vmul.f32 %v1637, %v1647
        %v1649 = vadd.f32 %v1632, %v1648
        %s1650 = sld [smem:[#allocation2 + $0x4f]]
        %v1651 = vstv %s1650
        %v1652 = vmul.f32 %v1637, %v1651
        %v1653 = vadd.f32 %v1636, %v1652
        %v1654 = vld [vmem:[%s538] sm:$0x3]
        %s1655 = sld [smem:[#allocation2 + $0x6c]]
        %v1656 = vstv %s1655
        %v1657 = vmul.f32 %v1654, %v1656
        %v1658 = vadd.f32 %v1641, %v1657
        %s1659 = sld [smem:[#allocation2 + $0x6d]]
        %v1660 = vstv %s1659
        %v1661 = vmul.f32 %v1654, %v1660
        %v1662 = vadd.f32 %v1645, %v1661
        %s1663 = sld [smem:[#allocation2 + $0x6e]]
        %v1664 = vstv %s1663
        %v1665 = vmul.f32 %v1654, %v1664
        %v1666 = vadd.f32 %v1649, %v1665
        %s1667 = sld [smem:[#allocation2 + $0x6f]]
        %v1668 = vstv %s1667
        %v1669 = vmul.f32 %v1654, %v1668
        %v1670 = vadd.f32 %v1653, %v1669
        %1671 = vmatprep.subr.mxu0 %v234
        %1672 = vmatpush1.msra.mxu0 %v233
        %1673 = vmatprep.subr.mxu0 %v238
        %1674 = vmatpush1.msra.mxu0 %v237
        %1675 = vmatprep.subr.mxu0 %v242
        %1676 = vmatpush1.msra.mxu0 %v241
        %1677 = vmatprep.subr.mxu0 %v246
        %1678 = vmatpush1.msra.mxu0 %v245
        %1679 = vmatprep.subr.mxu0 %v250
        %1680 = vmatpush1.msra.mxu0 %v249
        %1681 = vmatprep.subr.mxu0 %v254
        %1682 = vmatpush1.msra.mxu0 %v253
        %1683 = vmatprep.subr.mxu0 %v258
        %1684 = vmatpush1.msra.mxu0 %v257
        %1685 = vmatprep.subr.mxu0 %v262
        %1686 = vmatpush1.msra.mxu0 %v261
        %1687 = vmatprep.subr.mxu0 %v266
        %1688 = vmatpush1.msra.mxu0 %v265
        %1689 = vmatprep.subr.mxu0 %v270
        %1690 = vmatpush1.msra.mxu0 %v269
        %1691 = vmatprep.subr.mxu0 %v274
        %1692 = vmatpush1.msra.mxu0 %v273
        %1693 = vmatprep.subr.mxu0 %v278
        %1694 = vmatpush1.msra.mxu0 %v277
        %1695 = vmatprep.subr.mxu0 %v282
        %1696 = vmatpush1.msra.mxu0 %v281
        %1697 = vmatprep.subr.mxu0 %v286
        %1698 = vmatpush1.msra.mxu0 %v285
        %1699 = vmatprep.subr.mxu0 %v290
        %1700 = vmatpush1.msra.mxu0 %v289
        %1701 = vmatprep.subr.mxu0 %v294
        %1702 = vmatpush1.msra.mxu0 %v293
        %1703 = vmatprep.subr.mxu0 %v298
        %1704 = vmatpush1.msra.mxu0 %v297
        %1705 = vmatprep.subr.mxu0 %v302
        %1706 = vmatpush1.msra.mxu0 %v301
        %1707 = vmatprep.subr.mxu0 %v306
        %1708 = vmatpush1.msra.mxu0 %v305
        %1709 = vmatprep.subr.mxu0 %v310
        %1710 = vmatpush1.msra.mxu0 %v309
        %1711 = vmatprep.subr.mxu0 %v314
        %1712 = vmatpush1.msra.mxu0 %v313
        %1713 = vmatprep.subr.mxu0 %v318
        %1714 = vmatpush1.msra.mxu0 %v317
        %1715 = vmatprep.subr.mxu0 %v322
        %1716 = vmatpush1.msra.mxu0 %v321
        %1717 = vmatprep.subr.mxu0 %v326
        %1718 = vmatpush1.msra.mxu0 %v325
        %1719 = vmatprep.subr.mxu0 %v330
        %1720 = vmatpush1.msra.mxu0 %v329
        %1721 = vmatprep.subr.mxu0 %v334
        %1722 = vmatpush1.msra.mxu0 %v333
        %1723 = vmatprep.subr.mxu0 %v338
        %1724 = vmatpush1.msra.mxu0 %v337
        %1725 = vmatprep.subr.mxu0 %v342
        %1726 = vmatpush1.msra.mxu0 %v341
        %1727 = vmatprep.subr.mxu0 %v346
        %1728 = vmatpush1.msra.mxu0 %v345
        %1729 = vmatprep.subr.mxu0 %v350
        %1730 = vmatpush1.msra.mxu0 %v349
        %1731 = vmatprep.subr.mxu0 %v354
        %1732 = vmatpush1.msra.mxu0 %v353
        %1733 = vmatprep.subr.mxu0 %v358
        %1734 = vmatpush1.msra.mxu0 %v357
        %1735 = vmatprep.mubr.f32.mxu0 %v1662
        %1736 = vmatmul.mubr.f32.gmra.mrb[0].mxu0 %v1658
        %v1737 = vpop.f32.mrb[0].mxu0
        %v1738 = vadd.f32 0.0, %v1737
        %v1739 = vpop.f32.mrb[0].mxu0
        %v1740 = vadd.f32 0.0, %v1739
        %1741 = vdwg.mxu0
        %1742 = vmatprep.subr.mxu0 %v362
        %1743 = vmatpush1.msra.mxu0 %v361
        %1744 = vmatprep.subr.mxu0 %v366
        %1745 = vmatpush1.msra.mxu0 %v365
        %1746 = vmatprep.subr.mxu0 %v370
        %1747 = vmatpush1.msra.mxu0 %v369
        %1748 = vmatprep.subr.mxu0 %v374
        %1749 = vmatpush1.msra.mxu0 %v373
        %1750 = vmatprep.subr.mxu0 %v378
        %1751 = vmatpush1.msra.mxu0 %v377
        %1752 = vmatprep.subr.mxu0 %v382
        %1753 = vmatpush1.msra.mxu0 %v381
        %1754 = vmatprep.subr.mxu0 %v386
        %1755 = vmatpush1.msra.mxu0 %v385
        %1756 = vmatprep.subr.mxu0 %v390
        %1757 = vmatpush1.msra.mxu0 %v389
        %1758 = vmatprep.subr.mxu0 %v394
        %1759 = vmatpush1.msra.mxu0 %v393
        %1760 = vmatprep.subr.mxu0 %v398
        %1761 = vmatpush1.msra.mxu0 %v397
        %1762 = vmatprep.subr.mxu0 %v402
        %1763 = vmatpush1.msra.mxu0 %v401
        %1764 = vmatprep.subr.mxu0 %v406
        %1765 = vmatpush1.msra.mxu0 %v405
        %1766 = vmatprep.subr.mxu0 %v410
        %1767 = vmatpush1.msra.mxu0 %v409
        %1768 = vmatprep.subr.mxu0 %v414
        %1769 = vmatpush1.msra.mxu0 %v413
        %1770 = vmatprep.subr.mxu0 %v418
        %1771 = vmatpush1.msra.mxu0 %v417
        %1772 = vmatprep.subr.mxu0 %v422
        %1773 = vmatpush1.msra.mxu0 %v421
        %1774 = vmatprep.subr.mxu0 %v426
        %1775 = vmatpush1.msra.mxu0 %v425
        %1776 = vmatprep.subr.mxu0 %v430
        %1777 = vmatpush1.msra.mxu0 %v429
        %1778 = vmatprep.subr.mxu0 %v434
        %1779 = vmatpush1.msra.mxu0 %v433
        %1780 = vmatprep.subr.mxu0 %v438
        %1781 = vmatpush1.msra.mxu0 %v437
        %1782 = vmatprep.subr.mxu0 %v442
        %1783 = vmatpush1.msra.mxu0 %v441
        %1784 = vmatprep.subr.mxu0 %v446
        %1785 = vmatpush1.msra.mxu0 %v445
        %1786 = vmatprep.subr.mxu0 %v450
        %1787 = vmatpush1.msra.mxu0 %v449
        %1788 = vmatprep.subr.mxu0 %v454
        %1789 = vmatpush1.msra.mxu0 %v453
        %1790 = vmatprep.subr.mxu0 %v458
        %1791 = vmatpush1.msra.mxu0 %v457
        %1792 = vmatprep.subr.mxu0 %v462
        %1793 = vmatpush1.msra.mxu0 %v461
        %1794 = vmatprep.subr.mxu0 %v466
        %1795 = vmatpush1.msra.mxu0 %v465
        %1796 = vmatprep.subr.mxu0 %v470
        %1797 = vmatpush1.msra.mxu0 %v469
        %1798 = vmatprep.subr.mxu0 %v474
        %1799 = vmatpush1.msra.mxu0 %v473
        %1800 = vmatprep.subr.mxu0 %v478
        %1801 = vmatpush1.msra.mxu0 %v477
        %1802 = vmatprep.subr.mxu0 %v482
        %1803 = vmatpush1.msra.mxu0 %v481
        %1804 = vmatprep.subr.mxu0 %v486
        %1805 = vmatpush1.msra.mxu0 %v485
        %1806 = vmatprep.mubr.f32.mxu0 %v1670
        %1807 = vmatmul.mubr.f32.gmra.mrb[0].mxu0 %v1666
        %v1808 = vpop.f32.mrb[0].mxu0
        %v1809 = vadd.f32 %v1738, %v1808
        %v1810 = vpop.f32.mrb[0].mxu0
        %v1811 = vadd.f32 %v1740, %v1810
        %1812 = vdwg.mxu0
        %1813 = vmatprep.subr.mxu0 %v236
        %1814 = vmatpush1.msra.mxu0 %v235
        %1815 = vmatprep.subr.mxu0 %v240
        %1816 = vmatpush1.msra.mxu0 %v239
        %1817 = vmatprep.subr.mxu0 %v244
        %1818 = vmatpush1.msra.mxu0 %v243
        %1819 = vmatprep.subr.mxu0 %v248
        %1820 = vmatpush1.msra.mxu0 %v247
        %1821 = vmatprep.subr.mxu0 %v252
        %1822 = vmatpush1.msra.mxu0 %v251
        %1823 = vmatprep.subr.mxu0 %v256
        %1824 = vmatpush1.msra.mxu0 %v255
        %1825 = vmatprep.subr.mxu0 %v260
        %1826 = vmatpush1.msra.mxu0 %v259
        %1827 = vmatprep.subr.mxu0 %v264
        %1828 = vmatpush1.msra.mxu0 %v263
        %1829 = vmatprep.subr.mxu0 %v268
        %1830 = vmatpush1.msra.mxu0 %v267
        %1831 = vmatprep.subr.mxu0 %v272
        %1832 = vmatpush1.msra.mxu0 %v271
        %1833 = vmatprep.subr.mxu0 %v276
        %1834 = vmatpush1.msra.mxu0 %v275
        %1835 = vmatprep.subr.mxu0 %v280
        %1836 = vmatpush1.msra.mxu0 %v279
        %1837 = vmatprep.subr.mxu0 %v284
        %1838 = vmatpush1.msra.mxu0 %v283
        %1839 = vmatprep.subr.mxu0 %v288
        %1840 = vmatpush1.msra.mxu0 %v287
        %1841 = vmatprep.subr.mxu0 %v292
        %1842 = vmatpush1.msra.mxu0 %v291
        %1843 = vmatprep.subr.mxu0 %v296
        %1844 = vmatpush1.msra.mxu0 %v295
        %1845 = vmatprep.subr.mxu0 %v300
        %1846 = vmatpush1.msra.mxu0 %v299
        %1847 = vmatprep.subr.mxu0 %v304
        %1848 = vmatpush1.msra.mxu0 %v303
        %1849 = vmatprep.subr.mxu0 %v308
        %1850 = vmatpush1.msra.mxu0 %v307
        %1851 = vmatprep.subr.mxu0 %v312
        %1852 = vmatpush1.msra.mxu0 %v311
        %1853 = vmatprep.subr.mxu0 %v316
        %1854 = vmatpush1.msra.mxu0 %v315
        %1855 = vmatprep.subr.mxu0 %v320
        %1856 = vmatpush1.msra.mxu0 %v319
        %1857 = vmatprep.subr.mxu0 %v324
        %1858 = vmatpush1.msra.mxu0 %v323
        %1859 = vmatprep.subr.mxu0 %v328
        %1860 = vmatpush1.msra.mxu0 %v327
        %1861 = vmatprep.subr.mxu0 %v332
        %1862 = vmatpush1.msra.mxu0 %v331
        %1863 = vmatprep.subr.mxu0 %v336
        %1864 = vmatpush1.msra.mxu0 %v335
        %1865 = vmatprep.subr.mxu0 %v340
        %1866 = vmatpush1.msra.mxu0 %v339
        %1867 = vmatprep.subr.mxu0 %v344
        %1868 = vmatpush1.msra.mxu0 %v343
        %1869 = vmatprep.subr.mxu0 %v348
        %1870 = vmatpush1.msra.mxu0 %v347
        %1871 = vmatprep.subr.mxu0 %v352
        %1872 = vmatpush1.msra.mxu0 %v351
        %1873 = vmatprep.subr.mxu0 %v356
        %1874 = vmatpush1.msra.mxu0 %v355
        %1875 = vmatprep.subr.mxu0 %v360
        %1876 = vmatpush1.msra.mxu0 %v359
        %1877 = vmatprep.mubr.f32.mxu0 %v1662
        %1878 = vmatmul.mubr.f32.gmra.mrb[0].mxu0 %v1658
        %v1879 = vpop.f32.mrb[0].mxu0
        %v1880 = vadd.f32 0.0, %v1879
        %v1881 = vpop.f32.mrb[0].mxu0
        %v1882 = vadd.f32 0.0, %v1881
        %1883 = vdwg.mxu0
        %1884 = vmatprep.subr.mxu0 %v364
        %1885 = vmatpush1.msra.mxu0 %v363
        %1886 = vmatprep.subr.mxu0 %v368
        %1887 = vmatpush1.msra.mxu0 %v367
        %1888 = vmatprep.subr.mxu0 %v372
        %1889 = vmatpush1.msra.mxu0 %v371
        %1890 = vmatprep.subr.mxu0 %v376
        %1891 = vmatpush1.msra.mxu0 %v375
        %1892 = vmatprep.subr.mxu0 %v380
        %1893 = vmatpush1.msra.mxu0 %v379
        %1894 = vmatprep.subr.mxu0 %v384
        %1895 = vmatpush1.msra.mxu0 %v383
        %1896 = vmatprep.subr.mxu0 %v388
        %1897 = vmatpush1.msra.mxu0 %v387
        %1898 = vmatprep.subr.mxu0 %v392
        %1899 = vmatpush1.msra.mxu0 %v391
        %1900 = vmatprep.subr.mxu0 %v396
        %1901 = vmatpush1.msra.mxu0 %v395
        %1902 = vmatprep.subr.mxu0 %v400
        %1903 = vmatpush1.msra.mxu0 %v399
        %1904 = vmatprep.subr.mxu0 %v404
        %1905 = vmatpush1.msra.mxu0 %v403
        %1906 = vmatprep.subr.mxu0 %v408
        %1907 = vmatpush1.msra.mxu0 %v407
        %1908 = vmatprep.subr.mxu0 %v412
        %1909 = vmatpush1.msra.mxu0 %v411
        %1910 = vmatprep.subr.mxu0 %v416
        %1911 = vmatpush1.msra.mxu0 %v415
        %1912 = vmatprep.subr.mxu0 %v420
        %1913 = vmatpush1.msra.mxu0 %v419
        %1914 = vmatprep.subr.mxu0 %v424
        %1915 = vmatpush1.msra.mxu0 %v423
        %1916 = vmatprep.subr.mxu0 %v428
        %1917 = vmatpush1.msra.mxu0 %v427
        %1918 = vmatprep.subr.mxu0 %v432
        %1919 = vmatpush1.msra.mxu0 %v431
        %1920 = vmatprep.subr.mxu0 %v436
        %1921 = vmatpush1.msra.mxu0 %v435
        %1922 = vmatprep.subr.mxu0 %v440
        %1923 = vmatpush1.msra.mxu0 %v439
        %1924 = vmatprep.subr.mxu0 %v444
        %1925 = vmatpush1.msra.mxu0 %v443
        %1926 = vmatprep.subr.mxu0 %v448
        %1927 = vmatpush1.msra.mxu0 %v447
        %1928 = vmatprep.subr.mxu0 %v452
        %1929 = vmatpush1.msra.mxu0 %v451
        %1930 = vmatprep.subr.mxu0 %v456
        %1931 = vmatpush1.msra.mxu0 %v455
        %1932 = vmatprep.subr.mxu0 %v460
        %1933 = vmatpush1.msra.mxu0 %v459
        %1934 = vmatprep.subr.mxu0 %v464
        %1935 = vmatpush1.msra.mxu0 %v463
        %1936 = vmatprep.subr.mxu0 %v468
        %1937 = vmatpush1.msra.mxu0 %v467
        %1938 = vmatprep.subr.mxu0 %v472
        %1939 = vmatpush1.msra.mxu0 %v471
        %1940 = vmatprep.subr.mxu0 %v476
        %1941 = vmatpush1.msra.mxu0 %v475
        %1942 = vmatprep.subr.mxu0 %v480
        %1943 = vmatpush1.msra.mxu0 %v479
        %1944 = vmatprep.subr.mxu0 %v484
        %1945 = vmatpush1.msra.mxu0 %v483
        %1946 = vmatprep.subr.mxu0 %v488
        %1947 = vmatpush1.msra.mxu0 %v487
        %1948 = vmatprep.mubr.f32.mxu0 %v1670
        %1949 = vmatmul.mubr.f32.gmra.mrb[0].mxu0 %v1666
        %v1950 = vpop.f32.mrb[0].mxu0
        %v1951 = vadd.f32 %v1880, %v1950
        %v1952 = vpop.f32.mrb[0].mxu0
        %v1953 = vadd.f32 %v1882, %v1952
        %1954 = vdwg.mxu0
        %v1959 = vcombine.low %v1809, %v1811
        %v1960 = vcombine.low %v1951, %v1953
        %v1962 = vunpack.c.l.s4 1983009808
        %v1963 = vunpack.c.0.s8 %v1962
        %v1964 = vlaneseq
        %v1965 = vshrl.u32 %v1964, 7
        %v1966 = vsub.s32 %v1963, %v1965
        %v1967 = vrot.slane %v1959, %v1966
        %v1969 = vunpack.c.l.s4 1983009808
        %v1970 = vunpack.c.0.s8 %v1969
        %v1971 = vlaneseq
        %v1972 = vshrl.u32 %v1971, 7
        %v1973 = vsub.s32 %v1970, %v1972
        %v1974 = vrot.slane %v1960, %v1973
        %v1975 = vcombine.low %v1967, %v1974
        %s1977 = scalar_lea.vmem %s232, 24
        %1978 = vst [vmem:[%s1977] sm:$0xff] %v1975
        %v1979 = vld [vmem:[%s223] sm:$0x3]
        %s1980 = sld [smem:[#allocation2 + $0x10]]
        %v1981 = vstv %s1980
        %v1982 = vmul.f32 %v1979, %v1981
        %s1983 = sld [smem:[#allocation2 + $0x11]]
        %v1984 = vstv %s1983
        %v1985 = vmul.f32 %v1979, %v1984
        %s1986 = sld [smem:[#allocation2 + $0x12]]
        %v1987 = vstv %s1986
        %v1988 = vmul.f32 %v1979, %v1987
        %s1989 = sld [smem:[#allocation2 + $0x13]]
        %v1990 = vstv %s1989
        %v1991 = vmul.f32 %v1979, %v1990
        %v1992 = vld [vmem:[%s502] sm:$0x3]
        %s1993 = sld [smem:[#allocation2 + $0x30]]
        %v1994 = vstv %s1993
        %v1995 = vmul.f32 %v1992, %v1994
        %v1996 = vadd.f32 %v1982, %v1995
        %s1997 = sld [smem:[#allocation2 + $0x31]]
        %v1998 = vstv %s1997
        %v1999 = vmul.f32 %v1992, %v1998
        %v2000 = vadd.f32 %v1985, %v1999
        %s2001 = sld [smem:[#allocation2 + $0x32]]
        %v2002 = vstv %s2001
        %v2003 = vmul.f32 %v1992, %v2002
        %v2004 = vadd.f32 %v1988, %v2003
        %s2005 = sld [smem:[#allocation2 + $0x33]]
        %v2006 = vstv %s2005
        %v2007 = vmul.f32 %v1992, %v2006
        %v2008 = vadd.f32 %v1991, %v2007
        %v2009 = vld [vmem:[%s520] sm:$0x3]
        %s2010 = sld [smem:[#allocation2 + $0x50]]
        %v2011 = vstv %s2010
        %v2012 = vmul.f32 %v2009, %v2011
        %v2013 = vadd.f32 %v1996, %v2012
        %s2014 = sld [smem:[#allocation2 + $0x51]]
        %v2015 = vstv %s2014
        %v2016 = vmul.f32 %v2009, %v2015
        %v2017 = vadd.f32 %v2000, %v2016
        %s2018 = sld [smem:[#allocation2 + $0x52]]
        %v2019 = vstv %s2018
        %v2020 = vmul.f32 %v2009, %v2019
        %v2021 = vadd.f32 %v2004, %v2020
        %s2022 = sld [smem:[#allocation2 + $0x53]]
        %v2023 = vstv %s2022
        %v2024 = vmul.f32 %v2009, %v2023
        %v2025 = vadd.f32 %v2008, %v2024
        %v2026 = vld [vmem:[%s538] sm:$0x3]
        %s2027 = sld [smem:[#allocation2 + $0x70]]
        %v2028 = vstv %s2027
        %v2029 = vmul.f32 %v2026, %v2028
        %v2030 = vadd.f32 %v2013, %v2029
        %s2031 = sld [smem:[#allocation2 + $0x71]]
        %v2032 = vstv %s2031
        %v2033 = vmul.f32 %v2026, %v2032
        %v2034 = vadd.f32 %v2017, %v2033
        %s2035 = sld [smem:[#allocation2 + $0x72]]
        %v2036 = vstv %s2035
        %v2037 = vmul.f32 %v2026, %v2036
        %v2038 = vadd.f32 %v2021, %v2037
        %s2039 = sld [smem:[#allocation2 + $0x73]]
        %v2040 = vstv %s2039
        %v2041 = vmul.f32 %v2026, %v2040
        %v2042 = vadd.f32 %v2025, %v2041
        %2043 = vmatprep.subr.mxu0 %v234
        %2044 = vmatpush1.msra.mxu0 %v233
        %2045 = vmatprep.subr.mxu0 %v238
        %2046 = vmatpush1.msra.mxu0 %v237
        %2047 = vmatprep.subr.mxu0 %v242
        %2048 = vmatpush1.msra.mxu0 %v241
        %2049 = vmatprep.subr.mxu0 %v246
        %2050 = vmatpush1.msra.mxu0 %v245
        %2051 = vmatprep.subr.mxu0 %v250
        %2052 = vmatpush1.msra.mxu0 %v249
        %2053 = vmatprep.subr.mxu0 %v254
        %2054 = vmatpush1.msra.mxu0 %v253
        %2055 = vmatprep.subr.mxu0 %v258
        %2056 = vmatpush1.msra.mxu0 %v257
        %2057 = vmatprep.subr.mxu0 %v262
        %2058 = vmatpush1.msra.mxu0 %v261
        %2059 = vmatprep.subr.mxu0 %v266
        %2060 = vmatpush1.msra.mxu0 %v265
        %2061 = vmatprep.subr.mxu0 %v270
        %2062 = vmatpush1.msra.mxu0 %v269
        %2063 = vmatprep.subr.mxu0 %v274
        %2064 = vmatpush1.msra.mxu0 %v273
        %2065 = vmatprep.subr.mxu0 %v278
        %2066 = vmatpush1.msra.mxu0 %v277
        %2067 = vmatprep.subr.mxu0 %v282
        %2068 = vmatpush1.msra.mxu0 %v281
        %2069 = vmatprep.subr.mxu0 %v286
        %2070 = vmatpush1.msra.mxu0 %v285
        %2071 = vmatprep.subr.mxu0 %v290
        %2072 = vmatpush1.msra.mxu0 %v289
        %2073 = vmatprep.subr.mxu0 %v294
        %2074 = vmatpush1.msra.mxu0 %v293
        %2075 = vmatprep.subr.mxu0 %v298
        %2076 = vmatpush1.msra.mxu0 %v297
        %2077 = vmatprep.subr.mxu0 %v302
        %2078 = vmatpush1.msra.mxu0 %v301
        %2079 = vmatprep.subr.mxu0 %v306
        %2080 = vmatpush1.msra.mxu0 %v305
        %2081 = vmatprep.subr.mxu0 %v310
        %2082 = vmatpush1.msra.mxu0 %v309
        %2083 = vmatprep.subr.mxu0 %v314
        %2084 = vmatpush1.msra.mxu0 %v313
        %2085 = vmatprep.subr.mxu0 %v318
        %2086 = vmatpush1.msra.mxu0 %v317
        %2087 = vmatprep.subr.mxu0 %v322
        %2088 = vmatpush1.msra.mxu0 %v321
        %2089 = vmatprep.subr.mxu0 %v326
        %2090 = vmatpush1.msra.mxu0 %v325
        %2091 = vmatprep.subr.mxu0 %v330
        %2092 = vmatpush1.msra.mxu0 %v329
        %2093 = vmatprep.subr.mxu0 %v334
        %2094 = vmatpush1.msra.mxu0 %v333
        %2095 = vmatprep.subr.mxu0 %v338
        %2096 = vmatpush1.msra.mxu0 %v337
        %2097 = vmatprep.subr.mxu0 %v342
        %2098 = vmatpush1.msra.mxu0 %v341
        %2099 = vmatprep.subr.mxu0 %v346
        %2100 = vmatpush1.msra.mxu0 %v345
        %2101 = vmatprep.subr.mxu0 %v350
        %2102 = vmatpush1.msra.mxu0 %v349
        %2103 = vmatprep.subr.mxu0 %v354
        %2104 = vmatpush1.msra.mxu0 %v353
        %2105 = vmatprep.subr.mxu0 %v358
        %2106 = vmatpush1.msra.mxu0 %v357
        %2107 = vmatprep.mubr.f32.mxu0 %v2034
        %2108 = vmatmul.mubr.f32.gmra.mrb[0].mxu0 %v2030
        %v2109 = vpop.f32.mrb[0].mxu0
        %v2110 = vadd.f32 0.0, %v2109
        %v2111 = vpop.f32.mrb[0].mxu0
        %v2112 = vadd.f32 0.0, %v2111
        %2113 = vdwg.mxu0
        %2114 = vmatprep.subr.mxu0 %v362
        %2115 = vmatpush1.msra.mxu0 %v361
        %2116 = vmatprep.subr.mxu0 %v366
        %2117 = vmatpush1.msra.mxu0 %v365
        %2118 = vmatprep.subr.mxu0 %v370
        %2119 = vmatpush1.msra.mxu0 %v369
        %2120 = vmatprep.subr.mxu0 %v374
        %2121 = vmatpush1.msra.mxu0 %v373
        %2122 = vmatprep.subr.mxu0 %v378
        %2123 = vmatpush1.msra.mxu0 %v377
        %2124 = vmatprep.subr.mxu0 %v382
        %2125 = vmatpush1.msra.mxu0 %v381
        %2126 = vmatprep.subr.mxu0 %v386
        %2127 = vmatpush1.msra.mxu0 %v385
        %2128 = vmatprep.subr.mxu0 %v390
        %2129 = vmatpush1.msra.mxu0 %v389
        %2130 = vmatprep.subr.mxu0 %v394
        %2131 = vmatpush1.msra.mxu0 %v393
        %2132 = vmatprep.subr.mxu0 %v398
        %2133 = vmatpush1.msra.mxu0 %v397
        %2134 = vmatprep.subr.mxu0 %v402
        %2135 = vmatpush1.msra.mxu0 %v401
        %2136 = vmatprep.subr.mxu0 %v406
        %2137 = vmatpush1.msra.mxu0 %v405
        %2138 = vmatprep.subr.mxu0 %v410
        %2139 = vmatpush1.msra.mxu0 %v409
        %2140 = vmatprep.subr.mxu0 %v414
        %2141 = vmatpush1.msra.mxu0 %v413
        %2142 = vmatprep.subr.mxu0 %v418
        %2143 = vmatpush1.msra.mxu0 %v417
        %2144 = vmatprep.subr.mxu0 %v422
        %2145 = vmatpush1.msra.mxu0 %v421
        %2146 = vmatprep.subr.mxu0 %v426
        %2147 = vmatpush1.msra.mxu0 %v425
        %2148 = vmatprep.subr.mxu0 %v430
        %2149 = vmatpush1.msra.mxu0 %v429
        %2150 = vmatprep.subr.mxu0 %v434
        %2151 = vmatpush1.msra.mxu0 %v433
        %2152 = vmatprep.subr.mxu0 %v438
        %2153 = vmatpush1.msra.mxu0 %v437
        %2154 = vmatprep.subr.mxu0 %v442
        %2155 = vmatpush1.msra.mxu0 %v441
        %2156 = vmatprep.subr.mxu0 %v446
        %2157 = vmatpush1.msra.mxu0 %v445
        %2158 = vmatprep.subr.mxu0 %v450
        %2159 = vmatpush1.msra.mxu0 %v449
        %2160 = vmatprep.subr.mxu0 %v454
        %2161 = vmatpush1.msra.mxu0 %v453
        %2162 = vmatprep.subr.mxu0 %v458
        %2163 = vmatpush1.msra.mxu0 %v457
        %2164 = vmatprep.subr.mxu0 %v462
        %2165 = vmatpush1.msra.mxu0 %v461
        %2166 = vmatprep.subr.mxu0 %v466
        %2167 = vmatpush1.msra.mxu0 %v465
        %2168 = vmatprep.subr.mxu0 %v470
        %2169 = vmatpush1.msra.mxu0 %v469
        %2170 = vmatprep.subr.mxu0 %v474
        %2171 = vmatpush1.msra.mxu0 %v473
        %2172 = vmatprep.subr.mxu0 %v478
        %2173 = vmatpush1.msra.mxu0 %v477
        %2174 = vmatprep.subr.mxu0 %v482
        %2175 = vmatpush1.msra.mxu0 %v481
        %2176 = vmatprep.subr.mxu0 %v486
        %2177 = vmatpush1.msra.mxu0 %v485
        %2178 = vmatprep.mubr.f32.mxu0 %v2042
        %2179 = vmatmul.mubr.f32.gmra.mrb[0].mxu0 %v2038
        %v2180 = vpop.f32.mrb[0].mxu0
        %v2181 = vadd.f32 %v2110, %v2180
        %v2182 = vpop.f32.mrb[0].mxu0
        %v2183 = vadd.f32 %v2112, %v2182
        %2184 = vdwg.mxu0
        %2185 = vmatprep.subr.mxu0 %v236
        %2186 = vmatpush1.msra.mxu0 %v235
        %2187 = vmatprep.subr.mxu0 %v240
        %2188 = vmatpush1.msra.mxu0 %v239
        %2189 = vmatprep.subr.mxu0 %v244
        %2190 = vmatpush1.msra.mxu0 %v243
        %2191 = vmatprep.subr.mxu0 %v248
        %2192 = vmatpush1.msra.mxu0 %v247
        %2193 = vmatprep.subr.mxu0 %v252
        %2194 = vmatpush1.msra.mxu0 %v251
        %2195 = vmatprep.subr.mxu0 %v256
        %2196 = vmatpush1.msra.mxu0 %v255
        %2197 = vmatprep.subr.mxu0 %v260
        %2198 = vmatpush1.msra.mxu0 %v259
        %2199 = vmatprep.subr.mxu0 %v264
        %2200 = vmatpush1.msra.mxu0 %v263
        %2201 = vmatprep.subr.mxu0 %v268
        %2202 = vmatpush1.msra.mxu0 %v267
        %2203 = vmatprep.subr.mxu0 %v272
        %2204 = vmatpush1.msra.mxu0 %v271
        %2205 = vmatprep.subr.mxu0 %v276
        %2206 = vmatpush1.msra.mxu0 %v275
        %2207 = vmatprep.subr.mxu0 %v280
        %2208 = vmatpush1.msra.mxu0 %v279
        %2209 = vmatprep.subr.mxu0 %v284
        %2210 = vmatpush1.msra.mxu0 %v283
        %2211 = vmatprep.subr.mxu0 %v288
        %2212 = vmatpush1.msra.mxu0 %v287
        %2213 = vmatprep.subr.mxu0 %v292
        %2214 = vmatpush1.msra.mxu0 %v291
        %2215 = vmatprep.subr.mxu0 %v296
        %2216 = vmatpush1.msra.mxu0 %v295
        %2217 = vmatprep.subr.mxu0 %v300
        %2218 = vmatpush1.msra.mxu0 %v299
        %2219 = vmatprep.subr.mxu0 %v304
        %2220 = vmatpush1.msra.mxu0 %v303
        %2221 = vmatprep.subr.mxu0 %v308
        %2222 = vmatpush1.msra.mxu0 %v307
        %2223 = vmatprep.subr.mxu0 %v312
        %2224 = vmatpush1.msra.mxu0 %v311
        %2225 = vmatprep.subr.mxu0 %v316
        %2226 = vmatpush1.msra.mxu0 %v315
        %2227 = vmatprep.subr.mxu0 %v320
        %2228 = vmatpush1.msra.mxu0 %v319
        %2229 = vmatprep.subr.mxu0 %v324
        %2230 = vmatpush1.msra.mxu0 %v323
        %2231 = vmatprep.subr.mxu0 %v328
        %2232 = vmatpush1.msra.mxu0 %v327
        %2233 = vmatprep.subr.mxu0 %v332
        %2234 = vmatpush1.msra.mxu0 %v331
        %2235 = vmatprep.subr.mxu0 %v336
        %2236 = vmatpush1.msra.mxu0 %v335
        %2237 = vmatprep.subr.mxu0 %v340
        %2238 = vmatpush1.msra.mxu0 %v339
        %2239 = vmatprep.subr.mxu0 %v344
        %2240 = vmatpush1.msra.mxu0 %v343
        %2241 = vmatprep.subr.mxu0 %v348
        %2242 = vmatpush1.msra.mxu0 %v347
        %2243 = vmatprep.subr.mxu0 %v352
        %2244 = vmatpush1.msra.mxu0 %v351
        %2245 = vmatprep.subr.mxu0 %v356
        %2246 = vmatpush1.msra.mxu0 %v355
        %2247 = vmatprep.subr.mxu0 %v360
        %2248 = vmatpush1.msra.mxu0 %v359
        %2249 = vmatprep.mubr.f32.mxu0 %v2034
        %2250 = vmatmul.mubr.f32.gmra.mrb[0].mxu0 %v2030
        %v2251 = vpop.f32.mrb[0].mxu0
        %v2252 = vadd.f32 0.0, %v2251
        %v2253 = vpop.f32.mrb[0].mxu0
        %v2254 = vadd.f32 0.0, %v2253
        %2255 = vdwg.mxu0
        %2256 = vmatprep.subr.mxu0 %v364
        %2257 = vmatpush1.msra.mxu0 %v363
        %2258 = vmatprep.subr.mxu0 %v368
        %2259 = vmatpush1.msra.mxu0 %v367
        %2260 = vmatprep.subr.mxu0 %v372
        %2261 = vmatpush1.msra.mxu0 %v371
        %2262 = vmatprep.subr.mxu0 %v376
        %2263 = vmatpush1.msra.mxu0 %v375
        %2264 = vmatprep.subr.mxu0 %v380
        %2265 = vmatpush1.msra.mxu0 %v379
        %2266 = vmatprep.subr.mxu0 %v384
        %2267 = vmatpush1.msra.mxu0 %v383
        %2268 = vmatprep.subr.mxu0 %v388
        %2269 = vmatpush1.msra.mxu0 %v387
        %2270 = vmatprep.subr.mxu0 %v392
        %2271 = vmatpush1.msra.mxu0 %v391
        %2272 = vmatprep.subr.mxu0 %v396
        %2273 = vmatpush1.msra.mxu0 %v395
        %2274 = vmatprep.subr.mxu0 %v400
        %2275 = vmatpush1.msra.mxu0 %v399
        %2276 = vmatprep.subr.mxu0 %v404
        %2277 = vmatpush1.msra.mxu0 %v403
        %2278 = vmatprep.subr.mxu0 %v408
        %2279 = vmatpush1.msra.mxu0 %v407
        %2280 = vmatprep.subr.mxu0 %v412
        %2281 = vmatpush1.msra.mxu0 %v411
        %2282 = vmatprep.subr.mxu0 %v416
        %2283 = vmatpush1.msra.mxu0 %v415
        %2284 = vmatprep.subr.mxu0 %v420
        %2285 = vmatpush1.msra.mxu0 %v419
        %2286 = vmatprep.subr.mxu0 %v424
        %2287 = vmatpush1.msra.mxu0 %v423
        %2288 = vmatprep.subr.mxu0 %v428
        %2289 = vmatpush1.msra.mxu0 %v427
        %2290 = vmatprep.subr.mxu0 %v432
        %2291 = vmatpush1.msra.mxu0 %v431
        %2292 = vmatprep.subr.mxu0 %v436
        %2293 = vmatpush1.msra.mxu0 %v435
        %2294 = vmatprep.subr.mxu0 %v440
        %2295 = vmatpush1.msra.mxu0 %v439
        %2296 = vmatprep.subr.mxu0 %v444
        %2297 = vmatpush1.msra.mxu0 %v443
        %2298 = vmatprep.subr.mxu0 %v448
        %2299 = vmatpush1.msra.mxu0 %v447
        %2300 = vmatprep.subr.mxu0 %v452
        %2301 = vmatpush1.msra.mxu0 %v451
        %2302 = vmatprep.subr.mxu0 %v456
        %2303 = vmatpush1.msra.mxu0 %v455
        %2304 = vmatprep.subr.mxu0 %v460
        %2305 = vmatpush1.msra.mxu0 %v459
        %2306 = vmatprep.subr.mxu0 %v464
        %2307 = vmatpush1.msra.mxu0 %v463
        %2308 = vmatprep.subr.mxu0 %v468
        %2309 = vmatpush1.msra.mxu0 %v467
        %2310 = vmatprep.subr.mxu0 %v472
        %2311 = vmatpush1.msra.mxu0 %v471
        %2312 = vmatprep.subr.mxu0 %v476
        %2313 = vmatpush1.msra.mxu0 %v475
        %2314 = vmatprep.subr.mxu0 %v480
        %2315 = vmatpush1.msra.mxu0 %v479
        %2316 = vmatprep.subr.mxu0 %v484
        %2317 = vmatpush1.msra.mxu0 %v483
        %2318 = vmatprep.subr.mxu0 %v488
        %2319 = vmatpush1.msra.mxu0 %v487
        %2320 = vmatprep.mubr.f32.mxu0 %v2042
        %2321 = vmatmul.mubr.f32.gmra.mrb[0].mxu0 %v2038
        %v2322 = vpop.f32.mrb[0].mxu0
        %v2323 = vadd.f32 %v2252, %v2322
        %v2324 = vpop.f32.mrb[0].mxu0
        %v2325 = vadd.f32 %v2254, %v2324
        %2326 = vdwg.mxu0
        %v2331 = vcombine.low %v2181, %v2183
        %v2332 = vcombine.low %v2323, %v2325
        %v2334 = vunpack.c.l.s4 1983009808
        %v2335 = vunpack.c.0.s8 %v2334
        %v2336 = vlaneseq
        %v2337 = vshrl.u32 %v2336, 7
        %v2338 = vsub.s32 %v2335, %v2337
        %v2339 = vrot.slane %v2331, %v2338
        %v2341 = vunpack.c.l.s4 1983009808
        %v2342 = vunpack.c.0.s8 %v2341
        %v2343 = vlaneseq
        %v2344 = vshrl.u32 %v2343, 7
        %v2345 = vsub.s32 %v2342, %v2344
        %v2346 = vrot.slane %v2332, %v2345
        %v2347 = vcombine.low %v2339, %v2346
        %s2349 = scalar_lea.vmem %s232, 32
        %2350 = vst [vmem:[%s2349] sm:$0xff] %v2347
        %v2351 = vld [vmem:[%s223] sm:$0x3]
        %s2352 = sld [smem:[#allocation2 + $0x14]]
        %v2353 = vstv %s2352
        %v2354 = vmul.f32 %v2351, %v2353
        %s2355 = sld [smem:[#allocation2 + $0x15]]
        %v2356 = vstv %s2355
        %v2357 = vmul.f32 %v2351, %v2356
        %s2358 = sld [smem:[#allocation2 + $0x16]]
        %v2359 = vstv %s2358
        %v2360 = vmul.f32 %v2351, %v2359
        %s2361 = sld [smem:[#allocation2 + $0x17]]
        %v2362 = vstv %s2361
        %v2363 = vmul.f32 %v2351, %v2362
        %v2364 = vld [vmem:[%s502] sm:$0x3]
        %s2365 = sld [smem:[#allocation2 + $0x34]]
        %v2366 = vstv %s2365
        %v2367 = vmul.f32 %v2364, %v2366
        %v2368 = vadd.f32 %v2354, %v2367
        %s2369 = sld [smem:[#allocation2 + $0x35]]
        %v2370 = vstv %s2369
        %v2371 = vmul.f32 %v2364, %v2370
        %v2372 = vadd.f32 %v2357, %v2371
        %s2373 = sld [smem:[#allocation2 + $0x36]]
        %v2374 = vstv %s2373
        %v2375 = vmul.f32 %v2364, %v2374
        %v2376 = vadd.f32 %v2360, %v2375
        %s2377 = sld [smem:[#allocation2 + $0x37]]
        %v2378 = vstv %s2377
        %v2379 = vmul.f32 %v2364, %v2378
        %v2380 = vadd.f32 %v2363, %v2379
        %v2381 = vld [vmem:[%s520] sm:$0x3]
        %s2382 = sld [smem:[#allocation2 + $0x54]]
        %v2383 = vstv %s2382
        %v2384 = vmul.f32 %v2381, %v2383
        %v2385 = vadd.f32 %v2368, %v2384
        %s2386 = sld [smem:[#allocation2 + $0x55]]
        %v2387 = vstv %s2386
        %v2388 = vmul.f32 %v2381, %v2387
        %v2389 = vadd.f32 %v2372, %v2388
        %s2390 = sld [smem:[#allocation2 + $0x56]]
        %v2391 = vstv %s2390
        %v2392 = vmul.f32 %v2381, %v2391
        %v2393 = vadd.f32 %v2376, %v2392
        %s2394 = sld [smem:[#allocation2 + $0x57]]
        %v2395 = vstv %s2394
        %v2396 = vmul.f32 %v2381, %v2395
        %v2397 = vadd.f32 %v2380, %v2396
        %v2398 = vld [vmem:[%s538] sm:$0x3]
        %s2399 = sld [smem:[#allocation2 + $0x74]]
        %v2400 = vstv %s2399
        %v2401 = vmul.f32 %v2398, %v2400
        %v2402 = vadd.f32 %v2385, %v2401
        %s2403 = sld [smem:[#allocation2 + $0x75]]
        %v2404 = vstv %s2403
        %v2405 = vmul.f32 %v2398, %v2404
        %v2406 = vadd.f32 %v2389, %v2405
        %s2407 = sld [smem:[#allocation2 + $0x76]]
        %v2408 = vstv %s2407
        %v2409 = vmul.f32 %v2398, %v2408
        %v2410 = vadd.f32 %v2393, %v2409
        %s2411 = sld [smem:[#allocation2 + $0x77]]
        %v2412 = vstv %s2411
        %v2413 = vmul.f32 %v2398, %v2412
        %v2414 = vadd.f32 %v2397, %v2413
        %2415 = vmatprep.subr.mxu0 %v234
        %2416 = vmatpush1.msra.mxu0 %v233
        %2417 = vmatprep.subr.mxu0 %v238
        %2418 = vmatpush1.msra.mxu0 %v237
        %2419 = vmatprep.subr.mxu0 %v242
        %2420 = vmatpush1.msra.mxu0 %v241
        %2421 = vmatprep.subr.mxu0 %v246
        %2422 = vmatpush1.msra.mxu0 %v245
        %2423 = vmatprep.subr.mxu0 %v250
        %2424 = vmatpush1.msra.mxu0 %v249
        %2425 = vmatprep.subr.mxu0 %v254
        %2426 = vmatpush1.msra.mxu0 %v253
        %2427 = vmatprep.subr.mxu0 %v258
        %2428 = vmatpush1.msra.mxu0 %v257
        %2429 = vmatprep.subr.mxu0 %v262
        %2430 = vmatpush1.msra.mxu0 %v261
        %2431 = vmatprep.subr.mxu0 %v266
        %2432 = vmatpush1.msra.mxu0 %v265
        %2433 = vmatprep.subr.mxu0 %v270
        %2434 = vmatpush1.msra.mxu0 %v269
        %2435 = vmatprep.subr.mxu0 %v274
        %2436 = vmatpush1.msra.mxu0 %v273
        %2437 = vmatprep.subr.mxu0 %v278
        %2438 = vmatpush1.msra.mxu0 %v277
        %2439 = vmatprep.subr.mxu0 %v282
        %2440 = vmatpush1.msra.mxu0 %v281
        %2441 = vmatprep.subr.mxu0 %v286
        %2442 = vmatpush1.msra.mxu0 %v285
        %2443 = vmatprep.subr.mxu0 %v290
        %2444 = vmatpush1.msra.mxu0 %v289
        %2445 = vmatprep.subr.mxu0 %v294
        %2446 = vmatpush1.msra.mxu0 %v293
        %2447 = vmatprep.subr.mxu0 %v298
        %2448 = vmatpush1.msra.mxu0 %v297
        %2449 = vmatprep.subr.mxu0 %v302
        %2450 = vmatpush1.msra.mxu0 %v301
        %2451 = vmatprep.subr.mxu0 %v306
        %2452 = vmatpush1.msra.mxu0 %v305
        %2453 = vmatprep.subr.mxu0 %v310
        %2454 = vmatpush1.msra.mxu0 %v309
        %2455 = vmatprep.subr.mxu0 %v314
        %2456 = vmatpush1.msra.mxu0 %v313
        %2457 = vmatprep.subr.mxu0 %v318
        %2458 = vmatpush1.msra.mxu0 %v317
        %2459 = vmatprep.subr.mxu0 %v322
        %2460 = vmatpush1.msra.mxu0 %v321
        %2461 = vmatprep.subr.mxu0 %v326
        %2462 = vmatpush1.msra.mxu0 %v325
        %2463 = vmatprep.subr.mxu0 %v330
        %2464 = vmatpush1.msra.mxu0 %v329
        %2465 = vmatprep.subr.mxu0 %v334
        %2466 = vmatpush1.msra.mxu0 %v333
        %2467 = vmatprep.subr.mxu0 %v338
        %2468 = vmatpush1.msra.mxu0 %v337
        %2469 = vmatprep.subr.mxu0 %v342
        %2470 = vmatpush1.msra.mxu0 %v341
        %2471 = vmatprep.subr.mxu0 %v346
        %2472 = vmatpush1.msra.mxu0 %v345
        %2473 = vmatprep.subr.mxu0 %v350
        %2474 = vmatpush1.msra.mxu0 %v349
        %2475 = vmatprep.subr.mxu0 %v354
        %2476 = vmatpush1.msra.mxu0 %v353
        %2477 = vmatprep.subr.mxu0 %v358
        %2478 = vmatpush1.msra.mxu0 %v357
        %2479 = vmatprep.mubr.f32.mxu0 %v2406
        %2480 = vmatmul.mubr.f32.gmra.mrb[0].mxu0 %v2402
        %v2481 = vpop.f32.mrb[0].mxu0
        %v2482 = vadd.f32 0.0, %v2481
        %v2483 = vpop.f32.mrb[0].mxu0
        %v2484 = vadd.f32 0.0, %v2483
        %2485 = vdwg.mxu0
        %2486 = vmatprep.subr.mxu0 %v362
        %2487 = vmatpush1.msra.mxu0 %v361
        %2488 = vmatprep.subr.mxu0 %v366
        %2489 = vmatpush1.msra.mxu0 %v365
        %2490 = vmatprep.subr.mxu0 %v370
        %2491 = vmatpush1.msra.mxu0 %v369
        %2492 = vmatprep.subr.mxu0 %v374
        %2493 = vmatpush1.msra.mxu0 %v373
        %2494 = vmatprep.subr.mxu0 %v378
        %2495 = vmatpush1.msra.mxu0 %v377
        %2496 = vmatprep.subr.mxu0 %v382
        %2497 = vmatpush1.msra.mxu0 %v381
        %2498 = vmatprep.subr.mxu0 %v386
        %2499 = vmatpush1.msra.mxu0 %v385
        %2500 = vmatprep.subr.mxu0 %v390
        %2501 = vmatpush1.msra.mxu0 %v389
        %2502 = vmatprep.subr.mxu0 %v394
        %2503 = vmatpush1.msra.mxu0 %v393
        %2504 = vmatprep.subr.mxu0 %v398
        %2505 = vmatpush1.msra.mxu0 %v397
        %2506 = vmatprep.subr.mxu0 %v402
        %2507 = vmatpush1.msra.mxu0 %v401
        %2508 = vmatprep.subr.mxu0 %v406
        %2509 = vmatpush1.msra.mxu0 %v405
        %2510 = vmatprep.subr.mxu0 %v410
        %2511 = vmatpush1.msra.mxu0 %v409
        %2512 = vmatprep.subr.mxu0 %v414
        %2513 = vmatpush1.msra.mxu0 %v413
        %2514 = vmatprep.subr.mxu0 %v418
        %2515 = vmatpush1.msra.mxu0 %v417
        %2516 = vmatprep.subr.mxu0 %v422
        %2517 = vmatpush1.msra.mxu0 %v421
        %2518 = vmatprep.subr.mxu0 %v426
        %2519 = vmatpush1.msra.mxu0 %v425
        %2520 = vmatprep.subr.mxu0 %v430
        %2521 = vmatpush1.msra.mxu0 %v429
        %2522 = vmatprep.subr.mxu0 %v434
        %2523 = vmatpush1.msra.mxu0 %v433
        %2524 = vmatprep.subr.mxu0 %v438
        %2525 = vmatpush1.msra.mxu0 %v437
        %2526 = vmatprep.subr.mxu0 %v442
        %2527 = vmatpush1.msra.mxu0 %v441
        %2528 = vmatprep.subr.mxu0 %v446
        %2529 = vmatpush1.msra.mxu0 %v445
        %2530 = vmatprep.subr.mxu0 %v450
        %2531 = vmatpush1.msra.mxu0 %v449
        %2532 = vmatprep.subr.mxu0 %v454
        %2533 = vmatpush1.msra.mxu0 %v453
        %2534 = vmatprep.subr.mxu0 %v458
        %2535 = vmatpush1.msra.mxu0 %v457
        %2536 = vmatprep.subr.mxu0 %v462
        %2537 = vmatpush1.msra.mxu0 %v461
        %2538 = vmatprep.subr.mxu0 %v466
        %2539 = vmatpush1.msra.mxu0 %v465
        %2540 = vmatprep.subr.mxu0 %v470
        %2541 = vmatpush1.msra.mxu0 %v469
        %2542 = vmatprep.subr.mxu0 %v474
        %2543 = vmatpush1.msra.mxu0 %v473
        %2544 = vmatprep.subr.mxu0 %v478
        %2545 = vmatpush1.msra.mxu0 %v477
        %2546 = vmatprep.subr.mxu0 %v482
        %2547 = vmatpush1.msra.mxu0 %v481
        %2548 = vmatprep.subr.mxu0 %v486
        %2549 = vmatpush1.msra.mxu0 %v485
        %2550 = vmatprep.mubr.f32.mxu0 %v2414
        %2551 = vmatmul.mubr.f32.gmra.mrb[0].mxu0 %v2410
        %v2552 = vpop.f32.mrb[0].mxu0
        %v2553 = vadd.f32 %v2482, %v2552
        %v2554 = vpop.f32.mrb[0].mxu0
        %v2555 = vadd.f32 %v2484, %v2554
        %2556 = vdwg.mxu0
        %2557 = vmatprep.subr.mxu0 %v236
        %2558 = vmatpush1.msra.mxu0 %v235
        %2559 = vmatprep.subr.mxu0 %v240
        %2560 = vmatpush1.msra.mxu0 %v239
        %2561 = vmatprep.subr.mxu0 %v244
        %2562 = vmatpush1.msra.mxu0 %v243
        %2563 = vmatprep.subr.mxu0 %v248
        %2564 = vmatpush1.msra.mxu0 %v247
        %2565 = vmatprep.subr.mxu0 %v252
        %2566 = vmatpush1.msra.mxu0 %v251
        %2567 = vmatprep.subr.mxu0 %v256
        %2568 = vmatpush1.msra.mxu0 %v255
        %2569 = vmatprep.subr.mxu0 %v260
        %2570 = vmatpush1.msra.mxu0 %v259
        %2571 = vmatprep.subr.mxu0 %v264
        %2572 = vmatpush1.msra.mxu0 %v263
        %2573 = vmatprep.subr.mxu0 %v268
        %2574 = vmatpush1.msra.mxu0 %v267
        %2575 = vmatprep.subr.mxu0 %v272
        %2576 = vmatpush1.msra.mxu0 %v271
        %2577 = vmatprep.subr.mxu0 %v276
        %2578 = vmatpush1.msra.mxu0 %v275
        %2579 = vmatprep.subr.mxu0 %v280
        %2580 = vmatpush1.msra.mxu0 %v279
        %2581 = vmatprep.subr.mxu0 %v284
        %2582 = vmatpush1.msra.mxu0 %v283
        %2583 = vmatprep.subr.mxu0 %v288
        %2584 = vmatpush1.msra.mxu0 %v287
        %2585 = vmatprep.subr.mxu0 %v292
        %2586 = vmatpush1.msra.mxu0 %v291
        %2587 = vmatprep.subr.mxu0 %v296
        %2588 = vmatpush1.msra.mxu0 %v295
        %2589 = vmatprep.subr.mxu0 %v300
        %2590 = vmatpush1.msra.mxu0 %v299
        %2591 = vmatprep.subr.mxu0 %v304
        %2592 = vmatpush1.msra.mxu0 %v303
        %2593 = vmatprep.subr.mxu0 %v308
        %2594 = vmatpush1.msra.mxu0 %v307
        %2595 = vmatprep.subr.mxu0 %v312
        %2596 = vmatpush1.msra.mxu0 %v311
        %2597 = vmatprep.subr.mxu0 %v316
        %2598 = vmatpush1.msra.mxu0 %v315
        %2599 = vmatprep.subr.mxu0 %v320
        %2600 = vmatpush1.msra.mxu0 %v319
        %2601 = vmatprep.subr.mxu0 %v324
        %2602 = vmatpush1.msra.mxu0 %v323
        %2603 = vmatprep.subr.mxu0 %v328
        %2604 = vmatpush1.msra.mxu0 %v327
        %2605 = vmatprep.subr.mxu0 %v332
        %2606 = vmatpush1.msra.mxu0 %v331
        %2607 = vmatprep.subr.mxu0 %v336
        %2608 = vmatpush1.msra.mxu0 %v335
        %2609 = vmatprep.subr.mxu0 %v340
        %2610 = vmatpush1.msra.mxu0 %v339
        %2611 = vmatprep.subr.mxu0 %v344
        %2612 = vmatpush1.msra.mxu0 %v343
        %2613 = vmatprep.subr.mxu0 %v348
        %2614 = vmatpush1.msra.mxu0 %v347
        %2615 = vmatprep.subr.mxu0 %v352
        %2616 = vmatpush1.msra.mxu0 %v351
        %2617 = vmatprep.subr.mxu0 %v356
        %2618 = vmatpush1.msra.mxu0 %v355
        %2619 = vmatprep.subr.mxu0 %v360
        %2620 = vmatpush1.msra.mxu0 %v359
        %2621 = vmatprep.mubr.f32.mxu0 %v2406
        %2622 = vmatmul.mubr.f32.gmra.mrb[0].mxu0 %v2402
        %v2623 = vpop.f32.mrb[0].mxu0
        %v2624 = vadd.f32 0.0, %v2623
        %v2625 = vpop.f32.mrb[0].mxu0
        %v2626 = vadd.f32 0.0, %v2625
        %2627 = vdwg.mxu0
        %2628 = vmatprep.subr.mxu0 %v364
        %2629 = vmatpush1.msra.mxu0 %v363
        %2630 = vmatprep.subr.mxu0 %v368
        %2631 = vmatpush1.msra.mxu0 %v367
        %2632 = vmatprep.subr.mxu0 %v372
        %2633 = vmatpush1.msra.mxu0 %v371
        %2634 = vmatprep.subr.mxu0 %v376
        %2635 = vmatpush1.msra.mxu0 %v375
        %2636 = vmatprep.subr.mxu0 %v380
        %2637 = vmatpush1.msra.mxu0 %v379
        %2638 = vmatprep.subr.mxu0 %v384
        %2639 = vmatpush1.msra.mxu0 %v383
        %2640 = vmatprep.subr.mxu0 %v388
        %2641 = vmatpush1.msra.mxu0 %v387
        %2642 = vmatprep.subr.mxu0 %v392
        %2643 = vmatpush1.msra.mxu0 %v391
        %2644 = vmatprep.subr.mxu0 %v396
        %2645 = vmatpush1.msra.mxu0 %v395
        %2646 = vmatprep.subr.mxu0 %v400
        %2647 = vmatpush1.msra.mxu0 %v399
        %2648 = vmatprep.subr.mxu0 %v404
        %2649 = vmatpush1.msra.mxu0 %v403
        %2650 = vmatprep.subr.mxu0 %v408
        %2651 = vmatpush1.msra.mxu0 %v407
        %2652 = vmatprep.subr.mxu0 %v412
        %2653 = vmatpush1.msra.mxu0 %v411
        %2654 = vmatprep.subr.mxu0 %v416
        %2655 = vmatpush1.msra.mxu0 %v415
        %2656 = vmatprep.subr.mxu0 %v420
        %2657 = vmatpush1.msra.mxu0 %v419
        %2658 = vmatprep.subr.mxu0 %v424
        %2659 = vmatpush1.msra.mxu0 %v423
        %2660 = vmatprep.subr.mxu0 %v428
        %2661 = vmatpush1.msra.mxu0 %v427
        %2662 = vmatprep.subr.mxu0 %v432
        %2663 = vmatpush1.msra.mxu0 %v431
        %2664 = vmatprep.subr.mxu0 %v436
        %2665 = vmatpush1.msra.mxu0 %v435
        %2666 = vmatprep.subr.mxu0 %v440
        %2667 = vmatpush1.msra.mxu0 %v439
        %2668 = vmatprep.subr.mxu0 %v444
        %2669 = vmatpush1.msra.mxu0 %v443
        %2670 = vmatprep.subr.mxu0 %v448
        %2671 = vmatpush1.msra.mxu0 %v447
        %2672 = vmatprep.subr.mxu0 %v452
        %2673 = vmatpush1.msra.mxu0 %v451
        %2674 = vmatprep.subr.mxu0 %v456
        %2675 = vmatpush1.msra.mxu0 %v455
        %2676 = vmatprep.subr.mxu0 %v460
        %2677 = vmatpush1.msra.mxu0 %v459
        %2678 = vmatprep.subr.mxu0 %v464
        %2679 = vmatpush1.msra.mxu0 %v463
        %2680 = vmatprep.subr.mxu0 %v468
        %2681 = vmatpush1.msra.mxu0 %v467
        %2682 = vmatprep.subr.mxu0 %v472
        %2683 = vmatpush1.msra.mxu0 %v471
        %2684 = vmatprep.subr.mxu0 %v476
        %2685 = vmatpush1.msra.mxu0 %v475
        %2686 = vmatprep.subr.mxu0 %v480
        %2687 = vmatpush1.msra.mxu0 %v479
        %2688 = vmatprep.subr.mxu0 %v484
        %2689 = vmatpush1.msra.mxu0 %v483
        %2690 = vmatprep.subr.mxu0 %v488
        %2691 = vmatpush1.msra.mxu0 %v487
        %2692 = vmatprep.mubr.f32.mxu0 %v2414
        %2693 = vmatmul.mubr.f32.gmra.mrb[0].mxu0 %v2410
        %v2694 = vpop.f32.mrb[0].mxu0
        %v2695 = vadd.f32 %v2624, %v2694
        %v2696 = vpop.f32.mrb[0].mxu0
        %v2697 = vadd.f32 %v2626, %v2696
        %2698 = vdwg.mxu0
        %v2703 = vcombine.low %v2553, %v2555
        %v2704 = vcombine.low %v2695, %v2697
        %v2706 = vunpack.c.l.s4 1983009808
        %v2707 = vunpack.c.0.s8 %v2706
        %v2708 = vlaneseq
        %v2709 = vshrl.u32 %v2708, 7
        %v2710 = vsub.s32 %v2707, %v2709
        %v2711 = vrot.slane %v2703, %v2710
        %v2713 = vunpack.c.l.s4 1983009808
        %v2714 = vunpack.c.0.s8 %v2713
        %v2715 = vlaneseq
        %v2716 = vshrl.u32 %v2715, 7
        %v2717 = vsub.s32 %v2714, %v2716
        %v2718 = vrot.slane %v2704, %v2717
        %v2719 = vcombine.low %v2711, %v2718
        %s2721 = scalar_lea.vmem %s232, 40
        %2722 = vst [vmem:[%s2721] sm:$0xff] %v2719
        %v2723 = vld [vmem:[%s223] sm:$0x3]
        %s2724 = sld [smem:[#allocation2 + $0x18]]
        %v2725 = vstv %s2724
        %v2726 = vmul.f32 %v2723, %v2725
        %s2727 = sld [smem:[#allocation2 + $0x19]]
        %v2728 = vstv %s2727
        %v2729 = vmul.f32 %v2723, %v2728
        %s2730 = sld [smem:[#allocation2 + $0x1a]]
        %v2731 = vstv %s2730
        %v2732 = vmul.f32 %v2723, %v2731
        %s2733 = sld [smem:[#allocation2 + $0x1b]]
        %v2734 = vstv %s2733
        %v2735 = vmul.f32 %v2723, %v2734
        %v2736 = vld [vmem:[%s502] sm:$0x3]
        %s2737 = sld [smem:[#allocation2 + $0x38]]
        %v2738 = vstv %s2737
        %v2739 = vmul.f32 %v2736, %v2738
        %v2740 = vadd.f32 %v2726, %v2739
        %s2741 = sld [smem:[#allocation2 + $0x39]]
        %v2742 = vstv %s2741
        %v2743 = vmul.f32 %v2736, %v2742
        %v2744 = vadd.f32 %v2729, %v2743
        %s2745 = sld [smem:[#allocation2 + $0x3a]]
        %v2746 = vstv %s2745
        %v2747 = vmul.f32 %v2736, %v2746
        %v2748 = vadd.f32 %v2732, %v2747
        %s2749 = sld [smem:[#allocation2 + $0x3b]]
        %v2750 = vstv %s2749
        %v2751 = vmul.f32 %v2736, %v2750
        %v2752 = vadd.f32 %v2735, %v2751
        %v2753 = vld [vmem:[%s520] sm:$0x3]
        %s2754 = sld [smem:[#allocation2 + $0x58]]
        %v2755 = vstv %s2754
        %v2756 = vmul.f32 %v2753, %v2755
        %v2757 = vadd.f32 %v2740, %v2756
        %s2758 = sld [smem:[#allocation2 + $0x59]]
        %v2759 = vstv %s2758
        %v2760 = vmul.f32 %v2753, %v2759
        %v2761 = vadd.f32 %v2744, %v2760
        %s2762 = sld [smem:[#allocation2 + $0x5a]]
        %v2763 = vstv %s2762
        %v2764 = vmul.f32 %v2753, %v2763
        %v2765 = vadd.f32 %v2748, %v2764
        %s2766 = sld [smem:[#allocation2 + $0x5b]]
        %v2767 = vstv %s2766
        %v2768 = vmul.f32 %v2753, %v2767
        %v2769 = vadd.f32 %v2752, %v2768
        %v2770 = vld [vmem:[%s538] sm:$0x3]
        %s2771 = sld [smem:[#allocation2 + $0x78]]
        %v2772 = vstv %s2771
        %v2773 = vmul.f32 %v2770, %v2772
        %v2774 = vadd.f32 %v2757, %v2773
        %s2775 = sld [smem:[#allocation2 + $0x79]]
        %v2776 = vstv %s2775
        %v2777 = vmul.f32 %v2770, %v2776
        %v2778 = vadd.f32 %v2761, %v2777
        %s2779 = sld [smem:[#allocation2 + $0x7a]]
        %v2780 = vstv %s2779
        %v2781 = vmul.f32 %v2770, %v2780
        %v2782 = vadd.f32 %v2765, %v2781
        %s2783 = sld [smem:[#allocation2 + $0x7b]]
        %v2784 = vstv %s2783
        %v2785 = vmul.f32 %v2770, %v2784
        %v2786 = vadd.f32 %v2769, %v2785
        %2787 = vmatprep.subr.mxu0 %v234
        %2788 = vmatpush1.msra.mxu0 %v233
        %2789 = vmatprep.subr.mxu0 %v238
        %2790 = vmatpush1.msra.mxu0 %v237
        %2791 = vmatprep.subr.mxu0 %v242
        %2792 = vmatpush1.msra.mxu0 %v241
        %2793 = vmatprep.subr.mxu0 %v246
        %2794 = vmatpush1.msra.mxu0 %v245
        %2795 = vmatprep.subr.mxu0 %v250
        %2796 = vmatpush1.msra.mxu0 %v249
        %2797 = vmatprep.subr.mxu0 %v254
        %2798 = vmatpush1.msra.mxu0 %v253
        %2799 = vmatprep.subr.mxu0 %v258
        %2800 = vmatpush1.msra.mxu0 %v257
        %2801 = vmatprep.subr.mxu0 %v262
        %2802 = vmatpush1.msra.mxu0 %v261
        %2803 = vmatprep.subr.mxu0 %v266
        %2804 = vmatpush1.msra.mxu0 %v265
        %2805 = vmatprep.subr.mxu0 %v270
        %2806 = vmatpush1.msra.mxu0 %v269
        %2807 = vmatprep.subr.mxu0 %v274
        %2808 = vmatpush1.msra.mxu0 %v273
        %2809 = vmatprep.subr.mxu0 %v278
        %2810 = vmatpush1.msra.mxu0 %v277
        %2811 = vmatprep.subr.mxu0 %v282
        %2812 = vmatpush1.msra.mxu0 %v281
        %2813 = vmatprep.subr.mxu0 %v286
        %2814 = vmatpush1.msra.mxu0 %v285
        %2815 = vmatprep.subr.mxu0 %v290
        %2816 = vmatpush1.msra.mxu0 %v289
        %2817 = vmatprep.subr.mxu0 %v294
        %2818 = vmatpush1.msra.mxu0 %v293
        %2819 = vmatprep.subr.mxu0 %v298
        %2820 = vmatpush1.msra.mxu0 %v297
        %2821 = vmatprep.subr.mxu0 %v302
        %2822 = vmatpush1.msra.mxu0 %v301
        %2823 = vmatprep.subr.mxu0 %v306
        %2824 = vmatpush1.msra.mxu0 %v305
        %2825 = vmatprep.subr.mxu0 %v310
        %2826 = vmatpush1.msra.mxu0 %v309
        %2827 = vmatprep.subr.mxu0 %v314
        %2828 = vmatpush1.msra.mxu0 %v313
        %2829 = vmatprep.subr.mxu0 %v318
        %2830 = vmatpush1.msra.mxu0 %v317
        %2831 = vmatprep.subr.mxu0 %v322
        %2832 = vmatpush1.msra.mxu0 %v321
        %2833 = vmatprep.subr.mxu0 %v326
        %2834 = vmatpush1.msra.mxu0 %v325
        %2835 = vmatprep.subr.mxu0 %v330
        %2836 = vmatpush1.msra.mxu0 %v329
        %2837 = vmatprep.subr.mxu0 %v334
        %2838 = vmatpush1.msra.mxu0 %v333
        %2839 = vmatprep.subr.mxu0 %v338
        %2840 = vmatpush1.msra.mxu0 %v337
        %2841 = vmatprep.subr.mxu0 %v342
        %2842 = vmatpush1.msra.mxu0 %v341
        %2843 = vmatprep.subr.mxu0 %v346
        %2844 = vmatpush1.msra.mxu0 %v345
        %2845 = vmatprep.subr.mxu0 %v350
        %2846 = vmatpush1.msra.mxu0 %v349
        %2847 = vmatprep.subr.mxu0 %v354
        %2848 = vmatpush1.msra.mxu0 %v353
        %2849 = vmatprep.subr.mxu0 %v358
        %2850 = vmatpush1.msra.mxu0 %v357
        %2851 = vmatprep.mubr.f32.mxu0 %v2778
        %2852 = vmatmul.mubr.f32.gmra.mrb[0].mxu0 %v2774
        %v2853 = vpop.f32.mrb[0].mxu0
        %v2854 = vadd.f32 0.0, %v2853
        %v2855 = vpop.f32.mrb[0].mxu0
        %v2856 = vadd.f32 0.0, %v2855
        %2857 = vdwg.mxu0
        %2858 = vmatprep.subr.mxu0 %v362
        %2859 = vmatpush1.msra.mxu0 %v361
        %2860 = vmatprep.subr.mxu0 %v366
        %2861 = vmatpush1.msra.mxu0 %v365
        %2862 = vmatprep.subr.mxu0 %v370
        %2863 = vmatpush1.msra.mxu0 %v369
        %2864 = vmatprep.subr.mxu0 %v374
        %2865 = vmatpush1.msra.mxu0 %v373
        %2866 = vmatprep.subr.mxu0 %v378
        %2867 = vmatpush1.msra.mxu0 %v377
        %2868 = vmatprep.subr.mxu0 %v382
        %2869 = vmatpush1.msra.mxu0 %v381
        %2870 = vmatprep.subr.mxu0 %v386
        %2871 = vmatpush1.msra.mxu0 %v385
        %2872 = vmatprep.subr.mxu0 %v390
        %2873 = vmatpush1.msra.mxu0 %v389
        %2874 = vmatprep.subr.mxu0 %v394
        %2875 = vmatpush1.msra.mxu0 %v393
        %2876 = vmatprep.subr.mxu0 %v398
        %2877 = vmatpush1.msra.mxu0 %v397
        %2878 = vmatprep.subr.mxu0 %v402
        %2879 = vmatpush1.msra.mxu0 %v401
        %2880 = vmatprep.subr.mxu0 %v406
        %2881 = vmatpush1.msra.mxu0 %v405
        %2882 = vmatprep.subr.mxu0 %v410
        %2883 = vmatpush1.msra.mxu0 %v409
        %2884 = vmatprep.subr.mxu0 %v414
        %2885 = vmatpush1.msra.mxu0 %v413
        %2886 = vmatprep.subr.mxu0 %v418
        %2887 = vmatpush1.msra.mxu0 %v417
        %2888 = vmatprep.subr.mxu0 %v422
        %2889 = vmatpush1.msra.mxu0 %v421
        %2890 = vmatprep.subr.mxu0 %v426
        %2891 = vmatpush1.msra.mxu0 %v425
        %2892 = vmatprep.subr.mxu0 %v430
        %2893 = vmatpush1.msra.mxu0 %v429
        %2894 = vmatprep.subr.mxu0 %v434
        %2895 = vmatpush1.msra.mxu0 %v433
        %2896 = vmatprep.subr.mxu0 %v438
        %2897 = vmatpush1.msra.mxu0 %v437
        %2898 = vmatprep.subr.mxu0 %v442
        %2899 = vmatpush1.msra.mxu0 %v441
        %2900 = vmatprep.subr.mxu0 %v446
        %2901 = vmatpush1.msra.mxu0 %v445
        %2902 = vmatprep.subr.mxu0 %v450
        %2903 = vmatpush1.msra.mxu0 %v449
        %2904 = vmatprep.subr.mxu0 %v454
        %2905 = vmatpush1.msra.mxu0 %v453
        %2906 = vmatprep.subr.mxu0 %v458
        %2907 = vmatpush1.msra.mxu0 %v457
        %2908 = vmatprep.subr.mxu0 %v462
        %2909 = vmatpush1.msra.mxu0 %v461
        %2910 = vmatprep.subr.mxu0 %v466
        %2911 = vmatpush1.msra.mxu0 %v465
        %2912 = vmatprep.subr.mxu0 %v470
        %2913 = vmatpush1.msra.mxu0 %v469
        %2914 = vmatprep.subr.mxu0 %v474
        %2915 = vmatpush1.msra.mxu0 %v473
        %2916 = vmatprep.subr.mxu0 %v478
        %2917 = vmatpush1.msra.mxu0 %v477
        %2918 = vmatprep.subr.mxu0 %v482
        %2919 = vmatpush1.msra.mxu0 %v481
        %2920 = vmatprep.subr.mxu0 %v486
        %2921 = vmatpush1.msra.mxu0 %v485
        %2922 = vmatprep.mubr.f32.mxu0 %v2786
        %2923 = vmatmul.mubr.f32.gmra.mrb[0].mxu0 %v2782
        %v2924 = vpop.f32.mrb[0].mxu0
        %v2925 = vadd.f32 %v2854, %v2924
        %v2926 = vpop.f32.mrb[0].mxu0
        %v2927 = vadd.f32 %v2856, %v2926
        %2928 = vdwg.mxu0
        %2929 = vmatprep.subr.mxu0 %v236
        %2930 = vmatpush1.msra.mxu0 %v235
        %2931 = vmatprep.subr.mxu0 %v240
        %2932 = vmatpush1.msra.mxu0 %v239
        %2933 = vmatprep.subr.mxu0 %v244
        %2934 = vmatpush1.msra.mxu0 %v243
        %2935 = vmatprep.subr.mxu0 %v248
        %2936 = vmatpush1.msra.mxu0 %v247
        %2937 = vmatprep.subr.mxu0 %v252
        %2938 = vmatpush1.msra.mxu0 %v251
        %2939 = vmatprep.subr.mxu0 %v256
        %2940 = vmatpush1.msra.mxu0 %v255
        %2941 = vmatprep.subr.mxu0 %v260
        %2942 = vmatpush1.msra.mxu0 %v259
        %2943 = vmatprep.subr.mxu0 %v264
        %2944 = vmatpush1.msra.mxu0 %v263
        %2945 = vmatprep.subr.mxu0 %v268
        %2946 = vmatpush1.msra.mxu0 %v267
        %2947 = vmatprep.subr.mxu0 %v272
        %2948 = vmatpush1.msra.mxu0 %v271
        %2949 = vmatprep.subr.mxu0 %v276
        %2950 = vmatpush1.msra.mxu0 %v275
        %2951 = vmatprep.subr.mxu0 %v280
        %2952 = vmatpush1.msra.mxu0 %v279
        %2953 = vmatprep.subr.mxu0 %v284
        %2954 = vmatpush1.msra.mxu0 %v283
        %2955 = vmatprep.subr.mxu0 %v288
        %2956 = vmatpush1.msra.mxu0 %v287
        %2957 = vmatprep.subr.mxu0 %v292
        %2958 = vmatpush1.msra.mxu0 %v291
        %2959 = vmatprep.subr.mxu0 %v296
        %2960 = vmatpush1.msra.mxu0 %v295
        %2961 = vmatprep.subr.mxu0 %v300
        %2962 = vmatpush1.msra.mxu0 %v299
        %2963 = vmatprep.subr.mxu0 %v304
        %2964 = vmatpush1.msra.mxu0 %v303
        %2965 = vmatprep.subr.mxu0 %v308
        %2966 = vmatpush1.msra.mxu0 %v307
        %2967 = vmatprep.subr.mxu0 %v312
        %2968 = vmatpush1.msra.mxu0 %v311
        %2969 = vmatprep.subr.mxu0 %v316
        %2970 = vmatpush1.msra.mxu0 %v315
        %2971 = vmatprep.subr.mxu0 %v320
        %2972 = vmatpush1.msra.mxu0 %v319
        %2973 = vmatprep.subr.mxu0 %v324
        %2974 = vmatpush1.msra.mxu0 %v323
        %2975 = vmatprep.subr.mxu0 %v328
        %2976 = vmatpush1.msra.mxu0 %v327
        %2977 = vmatprep.subr.mxu0 %v332
        %2978 = vmatpush1.msra.mxu0 %v331
        %2979 = vmatprep.subr.mxu0 %v336
        %2980 = vmatpush1.msra.mxu0 %v335
        %2981 = vmatprep.subr.mxu0 %v340
        %2982 = vmatpush1.msra.mxu0 %v339
        %2983 = vmatprep.subr.mxu0 %v344
        %2984 = vmatpush1.msra.mxu0 %v343
        %2985 = vmatprep.subr.mxu0 %v348
        %2986 = vmatpush1.msra.mxu0 %v347
        %2987 = vmatprep.subr.mxu0 %v352
        %2988 = vmatpush1.msra.mxu0 %v351
        %2989 = vmatprep.subr.mxu0 %v356
        %2990 = vmatpush1.msra.mxu0 %v355
        %2991 = vmatprep.subr.mxu0 %v360
        %2992 = vmatpush1.msra.mxu0 %v359
        %2993 = vmatprep.mubr.f32.mxu0 %v2778
        %2994 = vmatmul.mubr.f32.gmra.mrb[0].mxu0 %v2774
        %v2995 = vpop.f32.mrb[0].mxu0
        %v2996 = vadd.f32 0.0, %v2995
        %v2997 = vpop.f32.mrb[0].mxu0
        %v2998 = vadd.f32 0.0, %v2997
        %2999 = vdwg.mxu0
        %3000 = vmatprep.subr.mxu0 %v364
        %3001 = vmatpush1.msra.mxu0 %v363
        %3002 = vmatprep.subr.mxu0 %v368
        %3003 = vmatpush1.msra.mxu0 %v367
        %3004 = vmatprep.subr.mxu0 %v372
        %3005 = vmatpush1.msra.mxu0 %v371
        %3006 = vmatprep.subr.mxu0 %v376
        %3007 = vmatpush1.msra.mxu0 %v375
        %3008 = vmatprep.subr.mxu0 %v380
        %3009 = vmatpush1.msra.mxu0 %v379
        %3010 = vmatprep.subr.mxu0 %v384
        %3011 = vmatpush1.msra.mxu0 %v383
        %3012 = vmatprep.subr.mxu0 %v388
        %3013 = vmatpush1.msra.mxu0 %v387
        %3014 = vmatprep.subr.mxu0 %v392
        %3015 = vmatpush1.msra.mxu0 %v391
        %3016 = vmatprep.subr.mxu0 %v396
        %3017 = vmatpush1.msra.mxu0 %v395
        %3018 = vmatprep.subr.mxu0 %v400
        %3019 = vmatpush1.msra.mxu0 %v399
        %3020 = vmatprep.subr.mxu0 %v404
        %3021 = vmatpush1.msra.mxu0 %v403
        %3022 = vmatprep.subr.mxu0 %v408
        %3023 = vmatpush1.msra.mxu0 %v407
        %3024 = vmatprep.subr.mxu0 %v412
        %3025 = vmatpush1.msra.mxu0 %v411
        %3026 = vmatprep.subr.mxu0 %v416
        %3027 = vmatpush1.msra.mxu0 %v415
        %3028 = vmatprep.subr.mxu0 %v420
        %3029 = vmatpush1.msra.mxu0 %v419
        %3030 = vmatprep.subr.mxu0 %v424
        %3031 = vmatpush1.msra.mxu0 %v423
        %3032 = vmatprep.subr.mxu0 %v428
        %3033 = vmatpush1.msra.mxu0 %v427
        %3034 = vmatprep.subr.mxu0 %v432
        %3035 = vmatpush1.msra.mxu0 %v431
        %3036 = vmatprep.subr.mxu0 %v436
        %3037 = vmatpush1.msra.mxu0 %v435
        %3038 = vmatprep.subr.mxu0 %v440
        %3039 = vmatpush1.msra.mxu0 %v439
        %3040 = vmatprep.subr.mxu0 %v444
        %3041 = vmatpush1.msra.mxu0 %v443
        %3042 = vmatprep.subr.mxu0 %v448
        %3043 = vmatpush1.msra.mxu0 %v447
        %3044 = vmatprep.subr.mxu0 %v452
        %3045 = vmatpush1.msra.mxu0 %v451
        %3046 = vmatprep.subr.mxu0 %v456
        %3047 = vmatpush1.msra.mxu0 %v455
        %3048 = vmatprep.subr.mxu0 %v460
        %3049 = vmatpush1.msra.mxu0 %v459
        %3050 = vmatprep.subr.mxu0 %v464
        %3051 = vmatpush1.msra.mxu0 %v463
        %3052 = vmatprep.subr.mxu0 %v468
        %3053 = vmatpush1.msra.mxu0 %v467
        %3054 = vmatprep.subr.mxu0 %v472
        %3055 = vmatpush1.msra.mxu0 %v471
        %3056 = vmatprep.subr.mxu0 %v476
        %3057 = vmatpush1.msra.mxu0 %v475
        %3058 = vmatprep.subr.mxu0 %v480
        %3059 = vmatpush1.msra.mxu0 %v479
        %3060 = vmatprep.subr.mxu0 %v484
        %3061 = vmatpush1.msra.mxu0 %v483
        %3062 = vmatprep.subr.mxu0 %v488
        %3063 = vmatpush1.msra.mxu0 %v487
        %3064 = vmatprep.mubr.f32.mxu0 %v2786
        %3065 = vmatmul.mubr.f32.gmra.mrb[0].mxu0 %v2782
        %v3066 = vpop.f32.mrb[0].mxu0
        %v3067 = vadd.f32 %v2996, %v3066
        %v3068 = vpop.f32.mrb[0].mxu0
        %v3069 = vadd.f32 %v2998, %v3068
        %3070 = vdwg.mxu0
        %v3075 = vcombine.low %v2925, %v2927
        %v3076 = vcombine.low %v3067, %v3069
        %v3078 = vunpack.c.l.s4 1983009808
        %v3079 = vunpack.c.0.s8 %v3078
        %v3080 = vlaneseq
        %v3081 = vshrl.u32 %v3080, 7
        %v3082 = vsub.s32 %v3079, %v3081
        %v3083 = vrot.slane %v3075, %v3082
        %v3085 = vunpack.c.l.s4 1983009808
        %v3086 = vunpack.c.0.s8 %v3085
        %v3087 = vlaneseq
        %v3088 = vshrl.u32 %v3087, 7
        %v3089 = vsub.s32 %v3086, %v3088
        %v3090 = vrot.slane %v3076, %v3089
        %v3091 = vcombine.low %v3083, %v3090
        %s3093 = scalar_lea.vmem %s232, 48
        %3094 = vst [vmem:[%s3093] sm:$0xff] %v3091
        %v3095 = vld [vmem:[%s223] sm:$0x3]
        %s3096 = sld [smem:[#allocation2 + $0x1c]]
        %v3097 = vstv %s3096
        %v3098 = vmul.f32 %v3095, %v3097
        %s3099 = sld [smem:[#allocation2 + $0x1d]]
        %v3100 = vstv %s3099
        %v3101 = vmul.f32 %v3095, %v3100
        %s3102 = sld [smem:[#allocation2 + $0x1e]]
        %v3103 = vstv %s3102
        %v3104 = vmul.f32 %v3095, %v3103
        %s3105 = sld [smem:[#allocation2 + $0x1f]]
        %v3106 = vstv %s3105
        %v3107 = vmul.f32 %v3095, %v3106
        %v3108 = vld [vmem:[%s502] sm:$0x3]
        %s3109 = sld [smem:[#allocation2 + $0x3c]]
        %v3110 = vstv %s3109
        %v3111 = vmul.f32 %v3108, %v3110
        %v3112 = vadd.f32 %v3098, %v3111
        %s3113 = sld [smem:[#allocation2 + $0x3d]]
        %v3114 = vstv %s3113
        %v3115 = vmul.f32 %v3108, %v3114
        %v3116 = vadd.f32 %v3101, %v3115
        %s3117 = sld [smem:[#allocation2 + $0x3e]]
        %v3118 = vstv %s3117
        %v3119 = vmul.f32 %v3108, %v3118
        %v3120 = vadd.f32 %v3104, %v3119
        %s3121 = sld [smem:[#allocation2 + $0x3f]]
        %v3122 = vstv %s3121
        %v3123 = vmul.f32 %v3108, %v3122
        %v3124 = vadd.f32 %v3107, %v3123
        %v3125 = vld [vmem:[%s520] sm:$0x3]
        %s3126 = sld [smem:[#allocation2 + $0x5c]]
        %v3127 = vstv %s3126
        %v3128 = vmul.f32 %v3125, %v3127
        %v3129 = vadd.f32 %v3112, %v3128
        %s3130 = sld [smem:[#allocation2 + $0x5d]]
        %v3131 = vstv %s3130
        %v3132 = vmul.f32 %v3125, %v3131
        %v3133 = vadd.f32 %v3116, %v3132
        %s3134 = sld [smem:[#allocation2 + $0x5e]]
        %v3135 = vstv %s3134
        %v3136 = vmul.f32 %v3125, %v3135
        %v3137 = vadd.f32 %v3120, %v3136
        %s3138 = sld [smem:[#allocation2 + $0x5f]]
        %v3139 = vstv %s3138
        %v3140 = vmul.f32 %v3125, %v3139
        %v3141 = vadd.f32 %v3124, %v3140
        %v3142 = vld [vmem:[%s538] sm:$0x3]
        %s3143 = sld [smem:[#allocation2 + $0x7c]]
        %v3144 = vstv %s3143
        %v3145 = vmul.f32 %v3142, %v3144
        %v3146 = vadd.f32 %v3129, %v3145
        %s3147 = sld [smem:[#allocation2 + $0x7d]]
        %v3148 = vstv %s3147
        %v3149 = vmul.f32 %v3142, %v3148
        %v3150 = vadd.f32 %v3133, %v3149
        %s3151 = sld [smem:[#allocation2 + $0x7e]]
        %v3152 = vstv %s3151
        %v3153 = vmul.f32 %v3142, %v3152
        %v3154 = vadd.f32 %v3137, %v3153
        %s3155 = sld [smem:[#allocation2 + $0x7f]]
        %v3156 = vstv %s3155
        %v3157 = vmul.f32 %v3142, %v3156
        %v3158 = vadd.f32 %v3141, %v3157
        %3159 = vmatprep.subr.mxu0 %v234
        %3160 = vmatpush1.msra.mxu0 %v233
        %3161 = vmatprep.subr.mxu0 %v238
        %3162 = vmatpush1.msra.mxu0 %v237
        %3163 = vmatprep.subr.mxu0 %v242
        %3164 = vmatpush1.msra.mxu0 %v241
        %3165 = vmatprep.subr.mxu0 %v246
        %3166 = vmatpush1.msra.mxu0 %v245
        %3167 = vmatprep.subr.mxu0 %v250
        %3168 = vmatpush1.msra.mxu0 %v249
        %3169 = vmatprep.subr.mxu0 %v254
        %3170 = vmatpush1.msra.mxu0 %v253
        %3171 = vmatprep.subr.mxu0 %v258
        %3172 = vmatpush1.msra.mxu0 %v257
        %3173 = vmatprep.subr.mxu0 %v262
        %3174 = vmatpush1.msra.mxu0 %v261
        %3175 = vmatprep.subr.mxu0 %v266
        %3176 = vmatpush1.msra.mxu0 %v265
        %3177 = vmatprep.subr.mxu0 %v270
        %3178 = vmatpush1.msra.mxu0 %v269
        %3179 = vmatprep.subr.mxu0 %v274
        %3180 = vmatpush1.msra.mxu0 %v273
        %3181 = vmatprep.subr.mxu0 %v278
        %3182 = vmatpush1.msra.mxu0 %v277
        %3183 = vmatprep.subr.mxu0 %v282
        %3184 = vmatpush1.msra.mxu0 %v281
        %3185 = vmatprep.subr.mxu0 %v286
        %3186 = vmatpush1.msra.mxu0 %v285
        %3187 = vmatprep.subr.mxu0 %v290
        %3188 = vmatpush1.msra.mxu0 %v289
        %3189 = vmatprep.subr.mxu0 %v294
        %3190 = vmatpush1.msra.mxu0 %v293
        %3191 = vmatprep.subr.mxu0 %v298
        %3192 = vmatpush1.msra.mxu0 %v297
        %3193 = vmatprep.subr.mxu0 %v302
        %3194 = vmatpush1.msra.mxu0 %v301
        %3195 = vmatprep.subr.mxu0 %v306
        %3196 = vmatpush1.msra.mxu0 %v305
        %3197 = vmatprep.subr.mxu0 %v310
        %3198 = vmatpush1.msra.mxu0 %v309
        %3199 = vmatprep.subr.mxu0 %v314
        %3200 = vmatpush1.msra.mxu0 %v313
        %3201 = vmatprep.subr.mxu0 %v318
        %3202 = vmatpush1.msra.mxu0 %v317
        %3203 = vmatprep.subr.mxu0 %v322
        %3204 = vmatpush1.msra.mxu0 %v321
        %3205 = vmatprep.subr.mxu0 %v326
        %3206 = vmatpush1.msra.mxu0 %v325
        %3207 = vmatprep.subr.mxu0 %v330
        %3208 = vmatpush1.msra.mxu0 %v329
        %3209 = vmatprep.subr.mxu0 %v334
        %3210 = vmatpush1.msra.mxu0 %v333
        %3211 = vmatprep.subr.mxu0 %v338
        %3212 = vmatpush1.msra.mxu0 %v337
        %3213 = vmatprep.subr.mxu0 %v342
        %3214 = vmatpush1.msra.mxu0 %v341
        %3215 = vmatprep.subr.mxu0 %v346
        %3216 = vmatpush1.msra.mxu0 %v345
        %3217 = vmatprep.subr.mxu0 %v350
        %3218 = vmatpush1.msra.mxu0 %v349
        %3219 = vmatprep.subr.mxu0 %v354
        %3220 = vmatpush1.msra.mxu0 %v353
        %3221 = vmatprep.subr.mxu0 %v358
        %3222 = vmatpush1.msra.mxu0 %v357
        %3223 = vmatprep.mubr.f32.mxu0 %v3150
        %3224 = vmatmul.mubr.f32.gmra.mrb[0].mxu0 %v3146
        %v3225 = vpop.f32.mrb[0].mxu0
        %v3226 = vadd.f32 0.0, %v3225
        %v3227 = vpop.f32.mrb[0].mxu0
        %v3228 = vadd.f32 0.0, %v3227
        %3229 = vdwg.mxu0
        %3230 = vmatprep.subr.mxu0 %v362
        %3231 = vmatpush1.msra.mxu0 %v361
        %3232 = vmatprep.subr.mxu0 %v366
        %3233 = vmatpush1.msra.mxu0 %v365
        %3234 = vmatprep.subr.mxu0 %v370
        %3235 = vmatpush1.msra.mxu0 %v369
        %3236 = vmatprep.subr.mxu0 %v374
        %3237 = vmatpush1.msra.mxu0 %v373
        %3238 = vmatprep.subr.mxu0 %v378
        %3239 = vmatpush1.msra.mxu0 %v377
        %3240 = vmatprep.subr.mxu0 %v382
        %3241 = vmatpush1.msra.mxu0 %v381
        %3242 = vmatprep.subr.mxu0 %v386
        %3243 = vmatpush1.msra.mxu0 %v385
        %3244 = vmatprep.subr.mxu0 %v390
        %3245 = vmatpush1.msra.mxu0 %v389
        %3246 = vmatprep.subr.mxu0 %v394
        %3247 = vmatpush1.msra.mxu0 %v393
        %3248 = vmatprep.subr.mxu0 %v398
        %3249 = vmatpush1.msra.mxu0 %v397
        %3250 = vmatprep.subr.mxu0 %v402
        %3251 = vmatpush1.msra.mxu0 %v401
        %3252 = vmatprep.subr.mxu0 %v406
        %3253 = vmatpush1.msra.mxu0 %v405
        %3254 = vmatprep.subr.mxu0 %v410
        %3255 = vmatpush1.msra.mxu0 %v409
        %3256 = vmatprep.subr.mxu0 %v414
        %3257 = vmatpush1.msra.mxu0 %v413
        %3258 = vmatprep.subr.mxu0 %v418
        %3259 = vmatpush1.msra.mxu0 %v417
        %3260 = vmatprep.subr.mxu0 %v422
        %3261 = vmatpush1.msra.mxu0 %v421
        %3262 = vmatprep.subr.mxu0 %v426
        %3263 = vmatpush1.msra.mxu0 %v425
        %3264 = vmatprep.subr.mxu0 %v430
        %3265 = vmatpush1.msra.mxu0 %v429
        %3266 = vmatprep.subr.mxu0 %v434
        %3267 = vmatpush1.msra.mxu0 %v433
        %3268 = vmatprep.subr.mxu0 %v438
        %3269 = vmatpush1.msra.mxu0 %v437
        %3270 = vmatprep.subr.mxu0 %v442
        %3271 = vmatpush1.msra.mxu0 %v441
        %3272 = vmatprep.subr.mxu0 %v446
        %3273 = vmatpush1.msra.mxu0 %v445
        %3274 = vmatprep.subr.mxu0 %v450
        %3275 = vmatpush1.msra.mxu0 %v449
        %3276 = vmatprep.subr.mxu0 %v454
        %3277 = vmatpush1.msra.mxu0 %v453
        %3278 = vmatprep.subr.mxu0 %v458
        %3279 = vmatpush1.msra.mxu0 %v457
        %3280 = vmatprep.subr.mxu0 %v462
        %3281 = vmatpush1.msra.mxu0 %v461
        %3282 = vmatprep.subr.mxu0 %v466
        %3283 = vmatpush1.msra.mxu0 %v465
        %3284 = vmatprep.subr.mxu0 %v470
        %3285 = vmatpush1.msra.mxu0 %v469
        %3286 = vmatprep.subr.mxu0 %v474
        %3287 = vmatpush1.msra.mxu0 %v473
        %3288 = vmatprep.subr.mxu0 %v478
        %3289 = vmatpush1.msra.mxu0 %v477
        %3290 = vmatprep.subr.mxu0 %v482
        %3291 = vmatpush1.msra.mxu0 %v481
        %3292 = vmatprep.subr.mxu0 %v486
        %3293 = vmatpush1.msra.mxu0 %v485
        %3294 = vmatprep.mubr.f32.mxu0 %v3158
        %3295 = vmatmul.mubr.f32.gmra.mrb[0].mxu0 %v3154
        %v3296 = vpop.f32.mrb[0].mxu0
        %v3297 = vadd.f32 %v3226, %v3296
        %v3298 = vpop.f32.mrb[0].mxu0
        %v3299 = vadd.f32 %v3228, %v3298
        %3300 = vdwg.mxu0
        %3301 = vmatprep.subr.mxu0 %v236
        %3302 = vmatpush1.msra.mxu0 %v235
        %3303 = vmatprep.subr.mxu0 %v240
        %3304 = vmatpush1.msra.mxu0 %v239
        %3305 = vmatprep.subr.mxu0 %v244
        %3306 = vmatpush1.msra.mxu0 %v243
        %3307 = vmatprep.subr.mxu0 %v248
        %3308 = vmatpush1.msra.mxu0 %v247
        %3309 = vmatprep.subr.mxu0 %v252
        %3310 = vmatpush1.msra.mxu0 %v251
        %3311 = vmatprep.subr.mxu0 %v256
        %3312 = vmatpush1.msra.mxu0 %v255
        %3313 = vmatprep.subr.mxu0 %v260
        %3314 = vmatpush1.msra.mxu0 %v259
        %3315 = vmatprep.subr.mxu0 %v264
        %3316 = vmatpush1.msra.mxu0 %v263
        %3317 = vmatprep.subr.mxu0 %v268
        %3318 = vmatpush1.msra.mxu0 %v267
        %3319 = vmatprep.subr.mxu0 %v272
        %3320 = vmatpush1.msra.mxu0 %v271
        %3321 = vmatprep.subr.mxu0 %v276
        %3322 = vmatpush1.msra.mxu0 %v275
        %3323 = vmatprep.subr.mxu0 %v280
        %3324 = vmatpush1.msra.mxu0 %v279
        %3325 = vmatprep.subr.mxu0 %v284
        %3326 = vmatpush1.msra.mxu0 %v283
        %3327 = vmatprep.subr.mxu0 %v288
        %3328 = vmatpush1.msra.mxu0 %v287
        %3329 = vmatprep.subr.mxu0 %v292
        %3330 = vmatpush1.msra.mxu0 %v291
        %3331 = vmatprep.subr.mxu0 %v296
        %3332 = vmatpush1.msra.mxu0 %v295
        %3333 = vmatprep.subr.mxu0 %v300
        %3334 = vmatpush1.msra.mxu0 %v299
        %3335 = vmatprep.subr.mxu0 %v304
        %3336 = vmatpush1.msra.mxu0 %v303
        %3337 = vmatprep.subr.mxu0 %v308
        %3338 = vmatpush1.msra.mxu0 %v307
        %3339 = vmatprep.subr.mxu0 %v312
        %3340 = vmatpush1.msra.mxu0 %v311
        %3341 = vmatprep.subr.mxu0 %v316
        %3342 = vmatpush1.msra.mxu0 %v315
        %3343 = vmatprep.subr.mxu0 %v320
        %3344 = vmatpush1.msra.mxu0 %v319
        %3345 = vmatprep.subr.mxu0 %v324
        %3346 = vmatpush1.msra.mxu0 %v323
        %3347 = vmatprep.subr.mxu0 %v328
        %3348 = vmatpush1.msra.mxu0 %v327
        %3349 = vmatprep.subr.mxu0 %v332
        %3350 = vmatpush1.msra.mxu0 %v331
        %3351 = vmatprep.subr.mxu0 %v336
        %3352 = vmatpush1.msra.mxu0 %v335
        %3353 = vmatprep.subr.mxu0 %v340
        %3354 = vmatpush1.msra.mxu0 %v339
        %3355 = vmatprep.subr.mxu0 %v344
        %3356 = vmatpush1.msra.mxu0 %v343
        %3357 = vmatprep.subr.mxu0 %v348
        %3358 = vmatpush1.msra.mxu0 %v347
        %3359 = vmatprep.subr.mxu0 %v352
        %3360 = vmatpush1.msra.mxu0 %v351
        %3361 = vmatprep.subr.mxu0 %v356
        %3362 = vmatpush1.msra.mxu0 %v355
        %3363 = vmatprep.subr.mxu0 %v360
        %3364 = vmatpush1.msra.mxu0 %v359
        %3365 = vmatprep.mubr.f32.mxu0 %v3150
        %3366 = vmatmul.mubr.f32.gmra.mrb[0].mxu0 %v3146
        %v3367 = vpop.f32.mrb[0].mxu0
        %v3368 = vadd.f32 0.0, %v3367
        %v3369 = vpop.f32.mrb[0].mxu0
        %v3370 = vadd.f32 0.0, %v3369
        %3371 = vdwg.mxu0
        %3372 = vmatprep.subr.mxu0 %v364
        %3373 = vmatpush1.msra.mxu0 %v363
        %3374 = vmatprep.subr.mxu0 %v368
        %3375 = vmatpush1.msra.mxu0 %v367
        %3376 = vmatprep.subr.mxu0 %v372
        %3377 = vmatpush1.msra.mxu0 %v371
        %3378 = vmatprep.subr.mxu0 %v376
        %3379 = vmatpush1.msra.mxu0 %v375
        %3380 = vmatprep.subr.mxu0 %v380
        %3381 = vmatpush1.msra.mxu0 %v379
        %3382 = vmatprep.subr.mxu0 %v384
        %3383 = vmatpush1.msra.mxu0 %v383
        %3384 = vmatprep.subr.mxu0 %v388
        %3385 = vmatpush1.msra.mxu0 %v387
        %3386 = vmatprep.subr.mxu0 %v392
        %3387 = vmatpush1.msra.mxu0 %v391
        %3388 = vmatprep.subr.mxu0 %v396
        %3389 = vmatpush1.msra.mxu0 %v395
        %3390 = vmatprep.subr.mxu0 %v400
        %3391 = vmatpush1.msra.mxu0 %v399
        %3392 = vmatprep.subr.mxu0 %v404
        %3393 = vmatpush1.msra.mxu0 %v403
        %3394 = vmatprep.subr.mxu0 %v408
        %3395 = vmatpush1.msra.mxu0 %v407
        %3396 = vmatprep.subr.mxu0 %v412
        %3397 = vmatpush1.msra.mxu0 %v411
        %3398 = vmatprep.subr.mxu0 %v416
        %3399 = vmatpush1.msra.mxu0 %v415
        %3400 = vmatprep.subr.mxu0 %v420
        %3401 = vmatpush1.msra.mxu0 %v419
        %3402 = vmatprep.subr.mxu0 %v424
        %3403 = vmatpush1.msra.mxu0 %v423
        %3404 = vmatprep.subr.mxu0 %v428
        %3405 = vmatpush1.msra.mxu0 %v427
        %3406 = vmatprep.subr.mxu0 %v432
        %3407 = vmatpush1.msra.mxu0 %v431
        %3408 = vmatprep.subr.mxu0 %v436
        %3409 = vmatpush1.msra.mxu0 %v435
        %3410 = vmatprep.subr.mxu0 %v440
        %3411 = vmatpush1.msra.mxu0 %v439
        %3412 = vmatprep.subr.mxu0 %v444
        %3413 = vmatpush1.msra.mxu0 %v443
        %3414 = vmatprep.subr.mxu0 %v448
        %3415 = vmatpush1.msra.mxu0 %v447
        %3416 = vmatprep.subr.mxu0 %v452
        %3417 = vmatpush1.msra.mxu0 %v451
        %3418 = vmatprep.subr.mxu0 %v456
        %3419 = vmatpush1.msra.mxu0 %v455
        %3420 = vmatprep.subr.mxu0 %v460
        %3421 = vmatpush1.msra.mxu0 %v459
        %3422 = vmatprep.subr.mxu0 %v464
        %3423 = vmatpush1.msra.mxu0 %v463
        %3424 = vmatprep.subr.mxu0 %v468
        %3425 = vmatpush1.msra.mxu0 %v467
        %3426 = vmatprep.subr.mxu0 %v472
        %3427 = vmatpush1.msra.mxu0 %v471
        %3428 = vmatprep.subr.mxu0 %v476
        %3429 = vmatpush1.msra.mxu0 %v475
        %3430 = vmatprep.subr.mxu0 %v480
        %3431 = vmatpush1.msra.mxu0 %v479
        %3432 = vmatprep.subr.mxu0 %v484
        %3433 = vmatpush1.msra.mxu0 %v483
        %3434 = vmatprep.subr.mxu0 %v488
        %3435 = vmatpush1.msra.mxu0 %v487
        %3436 = vmatprep.mubr.f32.mxu0 %v3158
        %3437 = vmatmul.mubr.f32.gmra.mrb[0].mxu0 %v3154
        %v3438 = vpop.f32.mrb[0].mxu0
        %v3439 = vadd.f32 %v3368, %v3438
        %v3440 = vpop.f32.mrb[0].mxu0
        %v3441 = vadd.f32 %v3370, %v3440
        %3442 = vdwg.mxu0
        %v3447 = vcombine.low %v3297, %v3299
        %v3448 = vcombine.low %v3439, %v3441
        %v3450 = vunpack.c.l.s4 1983009808
        %v3451 = vunpack.c.0.s8 %v3450
        %v3452 = vlaneseq
        %v3453 = vshrl.u32 %v3452, 7
        %v3454 = vsub.s32 %v3451, %v3453
        %v3455 = vrot.slane %v3447, %v3454
        %v3457 = vunpack.c.l.s4 1983009808
        %v3458 = vunpack.c.0.s8 %v3457
        %v3459 = vlaneseq
        %v3460 = vshrl.u32 %v3459, 7
        %v3461 = vsub.s32 %v3458, %v3460
        %v3462 = vrot.slane %v3448, %v3461
        %v3463 = vcombine.low %v3455, %v3462
        %s3465 = scalar_lea.vmem %s232, 56
        %3466 = vst [vmem:[%s3465] sm:$0xff] %v3463
        %p3467 = scmp.lt.s32.totalorder %s20, 1
        %s3468 = scalar_select %p3467, %s20, 1
        %p3469 = scmp.lt.s32.totalorder %s21, 0
        %s3470 = scalar_select %p3469, %s21, 0
        %s3471 = smul.addr %s3470, 4
        %s3472 = smul.addr %s3468, 32
        %s3473 = sadd.s32 %s3471, %s3472
        %s3474 = smul.addr %s3473, 2
        %s3475 = scalar_lea.vmem %s3, %s3474
        // Predicated region
        $region41: #{convolution_upscale.1} parent=31 // pred_check
          %p3476 = pneg %p118
        $region42: #{convolution_upscale.1} parent=31 // pred_check_branch
          %3478 = sbr.rel (%p3476) target = $region44
        $region43: #{convolution_upscale.1} parent=31 // pred_region
          _
        $region44: #{convolution_upscale.1} parent=31 // pred_fallthru
          _
      $region32: #{convolution_upscale.1} parent=5 // pred_fallthru
        _
      %p3479 = scmp.le.s32.totalorder 2, %s11
      // Predicated region
      $region45: #{convolution_upscale.1} parent=5 // pred_check
        %p3480 = pneg %p3479
      $region46: #{convolution_upscale.1} parent=5 // pred_check_branch
        %3482 = sbr.rel (%p3480) target = $region48
      $region47: #{convolution_upscale.1} parent=5 // pred_region
        %s3483 = ssub.s32 %s11, 2
        // Predicated region
        $region49: #{convolution_upscale.1} parent=47 // pred_check
          %p3484 = pneg %p124
        $region50: #{convolution_upscale.1} parent=47 // pred_check_branch
          %3486 = sbr.rel (%p3484) target = $region52
        $region51: #{convolution_upscale.1} parent=47 // pred_region
          %p3487 = scmp.lt.s32.totalorder %s22, 1
          %s3488 = scalar_select %p3487, %s22, 1
          %p3489 = scmp.lt.s32.totalorder %s23, 0
          %s3490 = scalar_select %p3489, %s23, 0
          %s3491 = smul.addr %s3490, 4
          %s3492 = smul.addr %s3488, 32
          %s3493 = sadd.s32 %s3491, %s3492
          %s3494 = smul.addr %s3493, 2
          %s3495 = scalar_lea.vmem %s3, %s3494
        $region52: #{convolution_upscale.1} parent=47 // pred_fallthru
          _
      $region48: #{convolution_upscale.1} parent=5 // pred_fallthru
        _
    $region6: #{convolution_upscale.1} parent=1 // loop_footer
      %s15 = sadd.s32 1, %s11
    $region7: #{convolution_upscale.1} parent=1 // loop_footer_branch
      %10 = sbr.rel target = $region3
    $region8: #{convolution_upscale.1} parent=1 // loop_exit
      _
    %3496 = vsyncpa [#allocation3], 1
    %s3497 = scalar_lea.sflag [#allocation3], 1
    %3498 = vsyncpa %s3497, 1
    %3499 = vsyncpa [#allocation4], 1
    %s3500 = scalar_lea.sflag [#allocation4], 1
    %3501 = vsyncpa %s3500, 1

</llo_original>
